<compile_context>
chip_gen: v7x
topology: tpu7x:2x2x1
jax: 0.10.0
libtpu: 0.0.40
codegen_flags: <defaults>
</compile_context>

<pallas_src>
import functools

import jax
import jax.numpy as jnp
from jax import lax
from jax.experimental import pallas as pl
from jax.experimental.pallas import tpu as pltpu


# Conservative scoped-VMEM budget, safe on every generation (v7x has only 64 MiB physical VMEM;
# on v5e/v6e with 128 MiB this could be raised to ~96-100 MiB to allow larger graph blocks).
_VMEM_LIMIT = 48 * 1024 * 1024


# ---------------------------------------------------------------------------
# Row-tiled dense (x @ W + b) kernel — FeatureEncoder and the GNN graph head.
# ---------------------------------------------------------------------------
def _dense_kernel(x_ref, w_ref, b_ref, o_ref, *, compute_dtype):
    o_ref[...] = (
        jnp.dot(x_ref[...].astype(compute_dtype), w_ref[...],
                preferred_element_type=jnp.float32)
        + b_ref[...]
    ).astype(o_ref.dtype)


def dense(x, w, b, *, block_rows=512, compute_dtype=jnp.bfloat16):
    m, k = x.shape
    n = w.shape[1]
    tm = min(block_rows, m)
    return pl.pallas_call(
        functools.partial(_dense_kernel, compute_dtype=compute_dtype),
        grid=(pl.cdiv(m, tm),),
        in_specs=[
            pl.BlockSpec((tm, k), lambda i: (i, 0)),
            pl.BlockSpec((k, n), lambda i: (0, 0)),
            pl.BlockSpec((1, n), lambda i: (0, 0)),
        ],
        out_specs=pl.BlockSpec((tm, n), lambda i: (i, 0)),
        out_shape=jax.ShapeDtypeStruct((m, n), jnp.float32),
        compiler_params=pltpu.CompilerParams(
            dimension_semantics=("parallel",),
            vmem_limit_bytes=_VMEM_LIMIT,
        ),
    )(x, w.astype(compute_dtype), b)


# ---------------------------------------------------------------------------
# Fused SAEdge layer stack.
# Grid = (graph block b, layer l).  The residual stream lives in a VMEM scratch
# that is revisited across the layer axis; only the mean-pooled graph readout is
# written back to HBM (at l == L-1).
# ---------------------------------------------------------------------------
def _layer_norm(v, g, b, eps):
    mu = jnp.mean(v, axis=-1, keepdims=True)
    var = jnp.mean(jnp.square(v - mu), axis=-1, keepdims=True)
    return (v - mu) * lax.rsqrt(var + eps) * g + b


def _sa_edge_stack_kernel(
    x_ref,        # (GB, N, D)  f32   encoded node features (consumed at l == 0)
    et_ref,       # (GB, N, N)  int32 dense per-graph edge-type map
    etab_ref,     # (L*T*H,)    f32   SMEM: per-layer edge-type -> per-head attention bias
    wq_ref, wk_ref, wv_ref,              # (L*H, D, hd) bf16, head-major, VMEM-resident
    wo_ref,                              # (L*H, hd, D) bf16
    ln1g_ref, ln1b_ref,                  # (L, 1, D) f32
    w1_ref, b1_ref,                      # (L, D, F) bf16 / (L, 1, F) f32
    w2_ref, b2_ref,                      # (L, F, D) bf16 / (L, 1, D) f32
    ln2g_ref, ln2b_ref,                  # (L, 1, D) f32
    pooled_ref,   # (GB, 1, D)  f32   mean-pooled node features, written at l == L-1
    res_ref,      # VMEM scratch (GB, N, D) f32: residual stream, resident across layers
    onehot_ref,   # VMEM scratch (T, GB, N, N) f32: cached edge-type one-hot (built at l == 0)
    *,
    graphs_per_block, nodes, num_heads, head_dim, n_edge_types, eps, compute_dtype,
):
    GB, N = graphs_per_block, nodes
    H, hd, T = num_heads, head_dim, n_edge_types
    l = pl.program_id(1)

    # Layer 0: seed the resident residual stream and cache the layer-invariant edge one-hot.
    @pl.when(l == 0)
    def _():
        res_ref[...] = x_ref[...]
        et = et_ref[...]                              # (GB, N, N) int32
        for t in range(T):
            onehot_ref[t] = (et == t).astype(jnp.float32)

    x = res_ref[...]                                  # (GB, N, D) f32
    D = x.shape[-1]
    x2 = x.reshape(GB * N, D)                         # flatten graphs -> fatter MXU M dim
    xc = x2.astype(compute_dtype)

    scale = 1.0 / (hd ** 0.5)
    graph_ctx = [jnp.zeros((N, D), jnp.float32) for _ in range(GB)]

    # TODO(synk): a single over-heads batched dot_general (pltpu.einshape to (H, GB*N, hd)) would
    # raise MXU fill beyond these hd-wide per-head dots once the lane-splitting relayout lowers
    # reliably; head-major weights below already remove all in-kernel lane slicing.
    for h in range(H):
        lh = l * H + h
        qh = (jnp.dot(xc, wq_ref[lh], preferred_element_type=jnp.float32) * scale
              ).astype(compute_dtype)                 # (GB*N, hd), pre-scaled
        kh = jnp.dot(xc, wk_ref[lh], preferred_element_type=jnp.float32).astype(compute_dtype)
        vh = jnp.dot(xc, wv_ref[lh], preferred_element_type=jnp.float32).astype(compute_dtype)
        woh = wo_ref[lh]                              # (hd, D) bf16

        for g in range(GB):
            r0 = g * N
            # q @ k^T without materializing the transpose.
            s = lax.dot_general(qh[r0:r0 + N], kh[r0:r0 + N],
                                (((1,), (1,)), ((), ())),
                                preferred_element_type=jnp.float32)   # (N, N)

            # Per-(layer, head) edge-type bias, built right before use from the cached one-hot.
            bias = onehot_ref[0, g] * etab_ref[(l * T) * H + h]
            for t in range(1, T):
                bias = bias + onehot_ref[t, g] * etab_ref[(l * T + t) * H + h]
            s = s + bias

            # Softmax over keys (stats in f32, divide on the EUP).
            s = s - jnp.max(s, axis=-1, keepdims=True)
            p = jnp.exp(s)
            p = p * pl.reciprocal(jnp.sum(p, axis=-1, keepdims=True), approx=True)

            ctx = jnp.dot(p.astype(compute_dtype), vh[r0:r0 + N],
                          preferred_element_type=jnp.float32)         # (N, hd)
            # attn @ Wo == sum_h ctx_h @ Wo[h*hd:(h+1)*hd, :]: full-width accumulation.
            graph_ctx[g] = graph_ctx[g] + jnp.dot(
                ctx.astype(compute_dtype), woh, preferred_element_type=jnp.float32)

    ctx_proj = graph_ctx[0] if GB == 1 else jnp.concatenate(graph_ctx, axis=0)

    # Residual + LayerNorm 1.
    h1 = _layer_norm(x2 + ctx_proj, ln1g_ref[l], ln1b_ref[l], eps)

    # FFN (ReLU MLP) + residual + LayerNorm 2.
    f = jnp.dot(h1.astype(compute_dtype), w1_ref[l],
                preferred_element_type=jnp.float32) + b1_ref[l]
    f = jnp.maximum(f, 0.0)
    f = jnp.dot(f.astype(compute_dtype), w2_ref[l],
                preferred_element_type=jnp.float32) + b2_ref[l]
    y = _layer_norm(h1 + f, ln2g_ref[l], ln2b_ref[l], eps)

    res_ref[...] = y.reshape(GB, N, D)

    # Fused global mean pool over nodes at the last layer (only HBM writeback of the kernel).
    @pl.when(l == pl.num_programs(1) - 1)
    def _():
        inv_n = 1.0 / N
        for g in range(GB):
            pooled_ref[g] = jnp.sum(y[g * N:(g + 1) * N, :], axis=0, keepdims=True) * inv_n


def sa_edge_stack(x, edge_types, stacked, *, num_heads, graphs_per_block=1,
                  eps=1e-5, compute_dtype=jnp.bfloat16):
    B, N, D = x.shape
    L, T, H = stacked["etab"].shape
    assert H == num_heads and D % num_heads == 0
    assert B % graphs_per_block == 0
    GB = graphs_per_block
    hd = D // num_heads

    # Head-major, layer-flattened weight layouts: a single dynamic leading index selects the
    # (layer, head) slab inside the kernel -> no lane slicing at 32/64/96 offsets.
    def head_major_in(w):    # (L, D, D) -> (L*H, D, hd) with slab h = W[:, h*hd:(h+1)*hd]
        return w.reshape(L, D, H, hd).transpose(0, 2, 1, 3).reshape(L * H, D, hd)

    def head_major_out(w):   # (L, D, D) -> (L*H, hd, D) with slab h = W[h*hd:(h+1)*hd, :]
        return w.reshape(L, H, hd, D).reshape(L * H, hd, D)

    wq = head_major_in(stacked["wq"]).astype(compute_dtype)
    wk = head_major_in(stacked["wk"]).astype(compute_dtype)
    wv = head_major_in(stacked["wv"]).astype(compute_dtype)
    wo = head_major_out(stacked["wo"]).astype(compute_dtype)
    w1 = stacked["w1"].astype(compute_dtype)
    w2 = stacked["w2"].astype(compute_dtype)

    kernel = functools.partial(
        _sa_edge_stack_kernel,
        graphs_per_block=GB, nodes=N, num_heads=H, head_dim=hd,
        n_edge_types=T, eps=eps, compute_dtype=compute_dtype,
    )

    # Full-shape blocks with a constant index_map: each weight is DMA'd once and stays
    # VMEM-resident for the whole (B/GB, L) grid (no per-layer / per-graph re-streaming).
    def resident(arr):
        zeros = (0,) * arr.ndim
        return pl.BlockSpec(tuple(arr.shape), lambda b, l, _z=zeros: _z)

    weight_ops = [wq, wk, wv, wo,
                  stacked["ln1_g"], stacked["ln1_b"],
                  w1, stacked["b1"], w2, stacked["b2"],
                  stacked["ln2_g"], stacked["ln2_b"]]

    in_specs = ([
        pl.BlockSpec((GB, N, D), lambda b, l: (b, 0, 0)),    # encoded node features (l == 0)
        pl.BlockSpec((GB, N, N), lambda b, l: (b, 0, 0)),    # int32 edge-type map (once per b)
        pl.BlockSpec(memory_space=pltpu.MemorySpace.SMEM),   # flat edge-bias table (scalar reads)
    ] + [resident(a) for a in weight_ops])

    operands = [x, edge_types, stacked["etab"].reshape(-1)] + weight_ops

    pooled = pl.pallas_call(
        kernel,
        grid=(B // GB, L),
        in_specs=in_specs,
        out_specs=pl.BlockSpec((GB, 1, D), lambda b, l: (b, 0, 0)),
        out_shape=jax.ShapeDtypeStruct((B, 1, D), jnp.float32),
        scratch_shapes=[
            pltpu.VMEM((GB, N, D), jnp.float32),     # residual stream, resident across layers
            pltpu.VMEM((T, GB, N, N), jnp.float32),  # cached edge-type one-hot
        ],
        compiler_params=pltpu.CompilerParams(
            dimension_semantics=("parallel", "arbitrary"),
            vmem_limit_bytes=_VMEM_LIMIT,
        ),
    )(*operands)
    return pooled.reshape(B, D)


# ---------------------------------------------------------------------------
# Deterministic parameter construction (synthetic init, no checkpoint load).
# Per-layer parameters are stacked along a leading L axis for the fused kernel.
# ---------------------------------------------------------------------------
def _glorot(key, shape):
    fan_in, fan_out = shape[-2], shape[-1]
    lim = (6.0 / (fan_in + fan_out)) ** 0.5
    return jax.random.uniform(key, shape, jnp.float32, -lim, lim)


def init_params(key, *, dim_in, dim_hidden, dim_out, num_heads, n_edge_types, n_layers):
    keys = jax.random.split(key, 9)
    L, dff = n_layers, 2 * dim_hidden
    return {
        "enc_w": _glorot(keys[0], (dim_in, dim_hidden)),
        "enc_b": jnp.zeros((1, dim_hidden), jnp.float32),
        "head_w": _glorot(keys[1], (dim_hidden, dim_out)),
        "head_b": jnp.zeros((1, dim_out), jnp.float32),
        "stack": {
            "wq": _glorot(keys[2], (L, dim_hidden, dim_hidden)),
            "wk": _glorot(keys[3], (L, dim_hidden, dim_hidden)),
            "wv": _glorot(keys[4], (L, dim_hidden, dim_hidden)),
            "wo": _glorot(keys[5], (L, dim_hidden, dim_hidden)),
            "etab": 0.1 * jax.random.normal(keys[6], (L, n_edge_types, num_heads), jnp.float32),
            "ln1_g": jnp.ones((L, 1, dim_hidden), jnp.float32),
            "ln1_b": jnp.zeros((L, 1, dim_hidden), jnp.float32),
            "w1": _glorot(keys[7], (L, dim_hidden, dff)),
            "b1": jnp.zeros((L, 1, dff), jnp.float32),
            "w2": _glorot(keys[8], (L, dff, dim_hidden)),
            "b2": jnp.zeros((L, 1, dim_hidden), jnp.float32),
            "ln2_g": jnp.ones((L, 1, dim_hidden), jnp.float32),
            "ln2_b": jnp.zeros((L, 1, dim_hidden), jnp.float32),
        },
    }


# ---------------------------------------------------------------------------
# Full forward: FeatureEncoder -> fused SAEdge layer stack (with fused global
# mean pool) -> graph head linear.
# ---------------------------------------------------------------------------
def sa_edge_transformer_forward(x_raw, edge_types, params, *, num_heads, graphs_per_block=1):
    B, N, dim_in = x_raw.shape
    dim_hidden = params["enc_w"].shape[1]

    # FeatureEncoder (node encoder as a linear projection), row-tiled Pallas matmul.
    h = dense(x_raw.reshape(B * N, dim_in), params["enc_w"], params["enc_b"])
    h = h.reshape(B, N, dim_hidden)

    # Equivalent of cat([edge_index, negate_edge_index(...)]) with fake_edge_attr = 0:
    # a dense per-graph int32 edge-type map where non-edges carry type 0.  The stack kernel
    # also fuses the global mean pool of the GNN head.
    pooled = sa_edge_stack(h, edge_types, params["stack"], num_heads=num_heads,
                           graphs_per_block=graphs_per_block)

    # GNN graph head linear (Pallas matmul).
    return dense(pooled, params["head_w"], params["head_b"])


if __name__ == "__main__":
    B, N = 2, 16
    dim_in, dim_hidden, dim_out = 32, 128, 4          # lane-dense hidden (multiple of 128)
    num_heads, n_edge_types, n_layers = 4, 5, 3

    key = jax.random.PRNGKey(0)
    k_feat, k_adj, k_type, k_param = jax.random.split(key, 4)

    # Deterministic synthetic graph batch.
    x_raw = jax.random.normal(k_feat, (B, N, dim_in), jnp.float32)
    adj = (jax.random.uniform(k_adj, (B, N, N)) < 0.4).astype(jnp.int32)
    real_types = jax.random.randint(k_type, (B, N, N), 1, n_edge_types)
    edge_types = adj * real_types                     # 0 => fake (non-)edge within the graph

    params = init_params(
        k_param,
        dim_in=dim_in,
        dim_hidden=dim_hidden,
        dim_out=dim_out,
        num_heads=num_heads,
        n_edge_types=n_edge_types,
        n_layers=n_layers,
    )

    # graphs_per_block=1 keeps the "parallel" batch axis at extent 2 (v7x megacore split);
    # raise it for larger batches to fatten the MXU M dimension.
    fwd = jax.jit(functools.partial(sa_edge_transformer_forward,
                                    num_heads=num_heads, graphs_per_block=1))
    out = fwd(x_raw, edge_types, params)
    out = jax.block_until_ready(out)

    assert out.shape == (B, dim_out), out.shape
    assert bool(jnp.all(jnp.isfinite(out)))
    print("KERNEL_OK")
</pallas_src>

<mosaic_0001>
module attributes {stable_mosaic.version = 11 : i64} {
  func.func @_dense_kernel(%arg0: i32, %arg1: memref<32x32xf32, #tpu.memory_space<vmem>>, %arg2: memref<32x128xbf16, #tpu.memory_space<vmem>>, %arg3: memref<1x128xf32, #tpu.memory_space<vmem>>, %arg4: memref<32x128xf32, #tpu.memory_space<vmem>>) attributes {dimension_semantics = [#tpu.dimension_semantics<parallel>], iteration_bounds = array<i64: 1>, scalar_prefetch = 0 : i64, scratch_operands = 0 : i64, tpu.core_type = #tpu.core_type<tc>, window_params = [{transform_indices = @transform_0, window_bounds = array<i64: 32, 32>}, {pipeline_mode = #tpu.pipeline_mode<synchronous>, transform_indices = @transform_1, window_bounds = array<i64: 32, 128>}, {pipeline_mode = #tpu.pipeline_mode<synchronous>, transform_indices = @transform_2, window_bounds = array<i64: 1, 128>}, {transform_indices = @transform_3, window_bounds = array<i64: 32, 128>}]} {
    %c0 = arith.constant 0 : index
    %c0_0 = arith.constant 0 : index
    %0 = vector.load %arg1[%c0, %c0_0] : memref<32x32xf32, #tpu.memory_space<vmem>>, vector<32x32xf32>
    %1 = arith.truncf %0 : vector<32x32xf32> to vector<32x32xbf16>
    %c0_1 = arith.constant 0 : index
    %c0_2 = arith.constant 0 : index
    %2 = vector.load %arg2[%c0_1, %c0_2] : memref<32x128xbf16, #tpu.memory_space<vmem>>, vector<32x128xbf16>
    %cst = arith.constant dense<0.000000e+00> : vector<32x128xf32>
    %3 = tpu.matmul %1, %2, %cst {dimension_numbers = #tpu.dot_dimension_numbers<[1], [0], [0], [1], [0, 0, 1, 1], [], []>} : vector<32x32xbf16>, vector<32x128xbf16>, vector<32x128xf32> -> vector<32x128xf32>
    %c0_3 = arith.constant 0 : index
    %c0_4 = arith.constant 0 : index
    %4 = vector.load %arg3[%c0_3, %c0_4] : memref<1x128xf32, #tpu.memory_space<vmem>>, vector<1x128xf32>
    %5 = vector.broadcast %4 : vector<1x128xf32> to vector<32x128xf32>
    %6 = arith.addf %3, %5 : vector<32x128xf32>
    %c0_5 = arith.constant 0 : index
    %c0_6 = arith.constant 0 : index
    %7 = vector.load %arg4[%c0_5, %c0_6] : memref<32x128xf32, #tpu.memory_space<vmem>>, vector<32x128xf32>
    tpu.vector_store %arg4[%c0_5, %c0_6], %6 {strides = array<i32>} : memref<32x128xf32, #tpu.memory_space<vmem>>, vector<32x128xf32>,
    return
  }
  func.func @transform_0(%arg0: i32) -> (i32, i32) {
    %c0_i32 = arith.constant 0 : i32
    %c0_i32_0 = arith.constant 0 : i32
    return %arg0, %c0_i32 : i32, i32
  }
  func.func @transform_1(%arg0: i32) -> (i32, i32) {
    %c0_i32 = arith.constant 0 : i32
    %c0_i32_0 = arith.constant 0 : i32
    %c0_i32_1 = arith.constant 0 : i32
    return %c0_i32, %c0_i32_0 : i32, i32
  }
  func.func @transform_2(%arg0: i32) -> (i32, i32) {
    %c0_i32 = arith.constant 0 : i32
    %c0_i32_0 = arith.constant 0 : i32
    %c0_i32_1 = arith.constant 0 : i32
    return %c0_i32, %c0_i32_0 : i32, i32
  }
  func.func @transform_3(%arg0: i32) -> (i32, i32) {
    %c0_i32 = arith.constant 0 : i32
    %c0_i32_0 = arith.constant 0 : i32
    return %arg0, %c0_i32 : i32, i32
  }
}

module attributes {stable_mosaic.version = 11 : i64} {
  func.func @_dense_kernel(%arg0: i32, %arg1: memref<2x128xf32, #tpu.memory_space<vmem>>, %arg2: memref<128x4xbf16, #tpu.memory_space<vmem>>, %arg3: memref<1x4xf32, #tpu.memory_space<vmem>>, %arg4: memref<2x4xf32, #tpu.memory_space<vmem>>) attributes {dimension_semantics = [#tpu.dimension_semantics<parallel>], iteration_bounds = array<i64: 1>, scalar_prefetch = 0 : i64, scratch_operands = 0 : i64, tpu.core_type = #tpu.core_type<tc>, window_params = [{transform_indices = @transform_0, window_bounds = array<i64: 2, 128>}, {pipeline_mode = #tpu.pipeline_mode<synchronous>, transform_indices = @transform_1, window_bounds = array<i64: 128, 4>}, {pipeline_mode = #tpu.pipeline_mode<synchronous>, transform_indices = @transform_2, window_bounds = array<i64: 1, 4>}, {transform_indices = @transform_3, window_bounds = array<i64: 2, 4>}]} {
    %c0 = arith.constant 0 : index
    %c0_0 = arith.constant 0 : index
    %0 = vector.load %arg1[%c0, %c0_0] : memref<2x128xf32, #tpu.memory_space<vmem>>, vector<2x128xf32>
    %1 = arith.truncf %0 : vector<2x128xf32> to vector<2x128xbf16>
    %c0_1 = arith.constant 0 : index
    %c0_2 = arith.constant 0 : index
    %2 = vector.load %arg2[%c0_1, %c0_2] : memref<128x4xbf16, #tpu.memory_space<vmem>>, vector<128x4xbf16>
    %cst = arith.constant dense<0.000000e+00> : vector<2x4xf32>
    %3 = tpu.matmul %1, %2, %cst {dimension_numbers = #tpu.dot_dimension_numbers<[1], [0], [0], [1], [0, 0, 1, 1], [], []>} : vector<2x128xbf16>, vector<128x4xbf16>, vector<2x4xf32> -> vector<2x4xf32>
    %c0_3 = arith.constant 0 : index
    %c0_4 = arith.constant 0 : index
    %4 = vector.load %arg3[%c0_3, %c0_4] : memref<1x4xf32, #tpu.memory_space<vmem>>, vector<1x4xf32>
    %5 = vector.broadcast %4 : vector<1x4xf32> to vector<2x4xf32>
    %6 = arith.addf %3, %5 : vector<2x4xf32>
    %c0_5 = arith.constant 0 : index
    %c0_6 = arith.constant 0 : index
    %7 = vector.load %arg4[%c0_5, %c0_6] : memref<2x4xf32, #tpu.memory_space<vmem>>, vector<2x4xf32>
    tpu.vector_store %arg4[%c0_5, %c0_6], %6 {strides = array<i32>} : memref<2x4xf32, #tpu.memory_space<vmem>>, vector<2x4xf32>,
    return
  }
  func.func @transform_0(%arg0: i32) -> (i32, i32) {
    %c0_i32 = arith.constant 0 : i32
    %c0_i32_0 = arith.constant 0 : i32
    return %arg0, %c0_i32 : i32, i32
  }
  func.func @transform_1(%arg0: i32) -> (i32, i32) {
    %c0_i32 = arith.constant 0 : i32
    %c0_i32_0 = arith.constant 0 : i32
    %c0_i32_1 = arith.constant 0 : i32
    return %c0_i32, %c0_i32_0 : i32, i32
  }
  func.func @transform_2(%arg0: i32) -> (i32, i32) {
    %c0_i32 = arith.constant 0 : i32
    %c0_i32_0 = arith.constant 0 : i32
    %c0_i32_1 = arith.constant 0 : i32
    return %c0_i32, %c0_i32_0 : i32, i32
  }
  func.func @transform_3(%arg0: i32) -> (i32, i32) {
    %c0_i32 = arith.constant 0 : i32
    %c0_i32_0 = arith.constant 0 : i32
    return %arg0, %c0_i32 : i32, i32
  }
}

module attributes {stable_mosaic.version = 11 : i64} {
  func.func @_sa_edge_stack_kernel(%arg0: i32, %arg1: i32, %arg2: memref<1x16x128xf32, #tpu.memory_space<vmem>>, %arg3: memref<1x16x16xi32, #tpu.memory_space<vmem>>, %arg4: memref<60xf32, #tpu.memory_space<smem>>, %arg5: memref<12x128x32xbf16, #tpu.memory_space<vmem>>, %arg6: memref<12x128x32xbf16, #tpu.memory_space<vmem>>, %arg7: memref<12x128x32xbf16, #tpu.memory_space<vmem>>, %arg8: memref<12x32x128xbf16, #tpu.memory_space<vmem>>, %arg9: memref<3x1x128xf32, #tpu.memory_space<vmem>>, %arg10: memref<3x1x128xf32, #tpu.memory_space<vmem>>, %arg11: memref<3x128x256xbf16, #tpu.memory_space<vmem>>, %arg12: memref<3x1x256xf32, #tpu.memory_space<vmem>>, %arg13: memref<3x256x128xbf16, #tpu.memory_space<vmem>>, %arg14: memref<3x1x128xf32, #tpu.memory_space<vmem>>, %arg15: memref<3x1x128xf32, #tpu.memory_space<vmem>>, %arg16: memref<3x1x128xf32, #tpu.memory_space<vmem>>, %arg17: memref<1x1x128xf32, #tpu.memory_space<vmem>>, %arg18: memref<1x16x128xf32, #tpu.memory_space<vmem>>, %arg19: memref<5x1x16x16xf32, #tpu.memory_space<vmem>>) attributes {dimension_semantics = [#tpu.dimension_semantics<parallel>, #tpu.dimension_semantics<arbitrary>], iteration_bounds = array<i64: 2, 3>, scalar_prefetch = 0 : i64, scratch_operands = 2 : i64, tpu.core_type = #tpu.core_type<tc>, window_params = [{transform_indices = @transform_0, window_bounds = array<i64: 1, 16, 128>}, {transform_indices = @transform_1, window_bounds = array<i64: 1, 16, 16>}, {transform_indices = @transform_2, window_bounds = array<i64: 60>}, {pipeline_mode = #tpu.pipeline_mode<synchronous>, transform_indices = @transform_3, window_bounds = array<i64: 12, 128, 32>}, {pipeline_mode = #tpu.pipeline_mode<synchronous>, transform_indices = @transform_4, window_bounds = array<i64: 12, 128, 32>}, {pipeline_mode = #tpu.pipeline_mode<synchronous>, transform_indices = @transform_5, window_bounds = array<i64: 12, 128, 32>}, {pipeline_mode = #tpu.pipeline_mode<synchronous>, transform_indices = @transform_6, window_bounds = array<i64: 12, 32, 128>}, {pipeline_mode = #tpu.pipeline_mode<synchronous>, transform_indices = @transform_7, window_bounds = array<i64: 3, 1, 128>}, {pipeline_mode = #tpu.pipeline_mode<synchronous>, transform_indices = @transform_8, window_bounds = array<i64: 3, 1, 128>}, {pipeline_mode = #tpu.pipeline_mode<synchronous>, transform_indices = @transform_9, window_bounds = array<i64: 3, 128, 256>}, {pipeline_mode = #tpu.pipeline_mode<synchronous>, transform_indices = @transform_10, window_bounds = array<i64: 3, 1, 256>}, {pipeline_mode = #tpu.pipeline_mode<synchronous>, transform_indices = @transform_11, window_bounds = array<i64: 3, 256, 128>}, {pipeline_mode = #tpu.pipeline_mode<synchronous>, transform_indices = @transform_12, window_bounds = array<i64: 3, 1, 128>}, {pipeline_mode = #tpu.pipeline_mode<synchronous>, transform_indices = @transform_13, window_bounds = array<i64: 3, 1, 128>}, {pipeline_mode = #tpu.pipeline_mode<synchronous>, transform_indices = @transform_14, window_bounds = array<i64: 3, 1, 128>}, {transform_indices = @transform_15, window_bounds = array<i64: 1, 1, 128>}]} {
    %c0_i32 = arith.constant 0 : i32
    %0 = arith.cmpi eq, %arg1, %c0_i32 : i32
    %1 = arith.extui %0 : i1 to i32
    %c0_i32_0 = arith.constant 0 : i32
    %2 = arith.cmpi ne, %1, %c0_i32_0 : i32
    scf.if %2 {
      %c0_260 = arith.constant 0 : index
      %c0_261 = arith.constant 0 : index
      %c0_262 = arith.constant 0 : index
      %460 = vector.load %arg2[%c0_260, %c0_261, %c0_262] : memref<1x16x128xf32, #tpu.memory_space<vmem>>, vector<1x16x128xf32>
      %c0_263 = arith.constant 0 : index
      %c0_264 = arith.constant 0 : index
      %c0_265 = arith.constant 0 : index
      %461 = vector.load %arg18[%c0_263, %c0_264, %c0_265] : memref<1x16x128xf32, #tpu.memory_space<vmem>>, vector<1x16x128xf32>
      tpu.vector_store %arg18[%c0_263, %c0_264, %c0_265], %460 {strides = array<i32>} : memref<1x16x128xf32, #tpu.memory_space<vmem>>, vector<1x16x128xf32>,
      %c0_266 = arith.constant 0 : index
      %c0_267 = arith.constant 0 : index
      %c0_268 = arith.constant 0 : index
      %462 = vector.load %arg3[%c0_266, %c0_267, %c0_268] : memref<1x16x16xi32, #tpu.memory_space<vmem>>, vector<1x16x16xi32>
      %c0_i32_269 = arith.constant 0 : i32
      %463 = vector.broadcast %c0_i32_269 : i32 to vector<1x16x16xi32>
      %464 = arith.cmpi eq, %462, %463 : vector<1x16x16xi32>
      %465 = arith.extui %464 : vector<1x16x16xi1> to vector<1x16x16xi32>
      %466 = arith.sitofp %465 : vector<1x16x16xi32> to vector<1x16x16xf32>
      %c0_270 = arith.constant 0 : index
      %c0_271 = arith.constant 0 : index
      %c0_272 = arith.constant 0 : index
      %c0_273 = arith.constant 0 : index
      %467 = vector.load %arg19[%c0_270, %c0_271, %c0_272, %c0_273] : memref<5x1x16x16xf32, #tpu.memory_space<vmem>>, vector<1x1x16x16xf32>
      %468 = vector.shape_cast %467 : vector<1x1x16x16xf32> to vector<1x16x16xf32>
      %469 = vector.shape_cast %466 : vector<1x16x16xf32> to vector<1x1x16x16xf32>
      tpu.vector_store %arg19[%c0_270, %c0_271, %c0_272, %c0_273], %469 {strides = array<i32>} : memref<5x1x16x16xf32, #tpu.memory_space<vmem>>, vector<1x1x16x16xf32>,
      %c1_i32_274 = arith.constant 1 : i32
      %470 = vector.broadcast %c1_i32_274 : i32 to vector<1x16x16xi32>
      %471 = arith.cmpi eq, %462, %470 : vector<1x16x16xi32>
      %472 = arith.extui %471 : vector<1x16x16xi1> to vector<1x16x16xi32>
      %473 = arith.sitofp %472 : vector<1x16x16xi32> to vector<1x16x16xf32>
      %c1_275 = arith.constant 1 : index
      %c0_276 = arith.constant 0 : index
      %c0_277 = arith.constant 0 : index
      %c0_278 = arith.constant 0 : index
      %474 = vector.load %arg19[%c1_275, %c0_276, %c0_277, %c0_278] : memref<5x1x16x16xf32, #tpu.memory_space<vmem>>, vector<1x1x16x16xf32>
      %475 = vector.shape_cast %474 : vector<1x1x16x16xf32> to vector<1x16x16xf32>
      %476 = vector.shape_cast %473 : vector<1x16x16xf32> to vector<1x1x16x16xf32>
      tpu.vector_store %arg19[%c1_275, %c0_276, %c0_277, %c0_278], %476 {strides = array<i32>} : memref<5x1x16x16xf32, #tpu.memory_space<vmem>>, vector<1x1x16x16xf32>,
      %c2_i32_279 = arith.constant 2 : i32
      %477 = vector.broadcast %c2_i32_279 : i32 to vector<1x16x16xi32>
      %478 = arith.cmpi eq, %462, %477 : vector<1x16x16xi32>
      %479 = arith.extui %478 : vector<1x16x16xi1> to vector<1x16x16xi32>
      %480 = arith.sitofp %479 : vector<1x16x16xi32> to vector<1x16x16xf32>
      %c2_280 = arith.constant 2 : index
      %c0_281 = arith.constant 0 : index
      %c0_282 = arith.constant 0 : index
      %c0_283 = arith.constant 0 : index
      %481 = vector.load %arg19[%c2_280, %c0_281, %c0_282, %c0_283] : memref<5x1x16x16xf32, #tpu.memory_space<vmem>>, vector<1x1x16x16xf32>
      %482 = vector.shape_cast %481 : vector<1x1x16x16xf32> to vector<1x16x16xf32>
      %483 = vector.shape_cast %480 : vector<1x16x16xf32> to vector<1x1x16x16xf32>
      tpu.vector_store %arg19[%c2_280, %c0_281, %c0_282, %c0_283], %483 {strides = array<i32>} : memref<5x1x16x16xf32, #tpu.memory_space<vmem>>, vector<1x1x16x16xf32>,
      %c3_i32_284 = arith.constant 3 : i32
      %484 = vector.broadcast %c3_i32_284 : i32 to vector<1x16x16xi32>
      %485 = arith.cmpi eq, %462, %484 : vector<1x16x16xi32>
      %486 = arith.extui %485 : vector<1x16x16xi1> to vector<1x16x16xi32>
      %487 = arith.sitofp %486 : vector<1x16x16xi32> to vector<1x16x16xf32>
      %c3_285 = arith.constant 3 : index
      %c0_286 = arith.constant 0 : index
      %c0_287 = arith.constant 0 : index
      %c0_288 = arith.constant 0 : index
      %488 = vector.load %arg19[%c3_285, %c0_286, %c0_287, %c0_288] : memref<5x1x16x16xf32, #tpu.memory_space<vmem>>, vector<1x1x16x16xf32>
      %489 = vector.shape_cast %488 : vector<1x1x16x16xf32> to vector<1x16x16xf32>
      %490 = vector.shape_cast %487 : vector<1x16x16xf32> to vector<1x1x16x16xf32>
      tpu.vector_store %arg19[%c3_285, %c0_286, %c0_287, %c0_288], %490 {strides = array<i32>} : memref<5x1x16x16xf32, #tpu.memory_space<vmem>>, vector<1x1x16x16xf32>,
      %c4_i32_289 = arith.constant 4 : i32
      %491 = vector.broadcast %c4_i32_289 : i32 to vector<1x16x16xi32>
      %492 = arith.cmpi eq, %462, %491 : vector<1x16x16xi32>
      %493 = arith.extui %492 : vector<1x16x16xi1> to vector<1x16x16xi32>
      %494 = arith.sitofp %493 : vector<1x16x16xi32> to vector<1x16x16xf32>
      %c4_290 = arith.constant 4 : index
      %c0_291 = arith.constant 0 : index
      %c0_292 = arith.constant 0 : index
      %c0_293 = arith.constant 0 : index
      %495 = vector.load %arg19[%c4_290, %c0_291, %c0_292, %c0_293] : memref<5x1x16x16xf32, #tpu.memory_space<vmem>>, vector<1x1x16x16xf32>
      %496 = vector.shape_cast %495 : vector<1x1x16x16xf32> to vector<1x16x16xf32>
      %497 = vector.shape_cast %494 : vector<1x16x16xf32> to vector<1x1x16x16xf32>
      tpu.vector_store %arg19[%c4_290, %c0_291, %c0_292, %c0_293], %497 {strides = array<i32>} : memref<5x1x16x16xf32, #tpu.memory_space<vmem>>, vector<1x1x16x16xf32>,
    } else {
    }
    %c0 = arith.constant 0 : index
    %c0_1 = arith.constant 0 : index
    %c0_2 = arith.constant 0 : index
    %3 = vector.load %arg18[%c0, %c0_1, %c0_2] : memref<1x16x128xf32, #tpu.memory_space<vmem>>, vector<1x16x128xf32>
    %4 = vector.shape_cast %3 : vector<1x16x128xf32> to vector<16x128xf32>
    %5 = arith.truncf %4 : vector<16x128xf32> to vector<16x128xbf16>
    %cst = arith.constant 0.000000e+00 : f32
    %6 = vector.broadcast %cst : f32 to vector<16x128xf32>
    %c4_i32 = arith.constant 4 : i32
    %7 = arith.muli %arg1, %c4_i32 : i32
    %c0_i32_3 = arith.constant 0 : i32
    %8 = arith.addi %7, %c0_i32_3 : i32
    %9 = arith.index_cast %8 : i32 to index
    %c0_4 = arith.constant 0 : index
    %c0_5 = arith.constant 0 : index
    %10 = vector.load %arg5[%9, %c0_4, %c0_5] : memref<12x128x32xbf16, #tpu.memory_space<vmem>>, vector<1x128x32xbf16>
    %11 = vector.shape_cast %10 : vector<1x128x32xbf16> to vector<128x32xbf16>
    %cst_6 = arith.constant dense<0.000000e+00> : vector<16x32xf32>
    %12 = tpu.matmul %5, %11, %cst_6 {dimension_numbers = #tpu.dot_dimension_numbers<[1], [0], [0], [1], [0, 0, 1, 1], [], []>} : vector<16x128xbf16>, vector<128x32xbf16>, vector<16x32xf32> -> vector<16x32xf32>
    %cst_7 = arith.constant 0.176776692 : f32
    %13 = vector.broadcast %cst_7 : f32 to vector<16x32xf32>
    %14 = arith.mulf %12, %13 : vector<16x32xf32>
    %15 = arith.truncf %14 : vector<16x32xf32> to vector<16x32xbf16>
    %16 = arith.index_cast %8 : i32 to index
    %c0_8 = arith.constant 0 : index
    %c0_9 = arith.constant 0 : index
    %17 = vector.load %arg6[%16, %c0_8, %c0_9] : memref<12x128x32xbf16, #tpu.memory_space<vmem>>, vector<1x128x32xbf16>
    %18 = vector.shape_cast %17 : vector<1x128x32xbf16> to vector<128x32xbf16>
    %cst_10 = arith.constant dense<0.000000e+00> : vector<16x32xf32>
    %19 = tpu.matmul %5, %18, %cst_10 {dimension_numbers = #tpu.dot_dimension_numbers<[1], [0], [0], [1], [0, 0, 1, 1], [], []>} : vector<16x128xbf16>, vector<128x32xbf16>, vector<16x32xf32> -> vector<16x32xf32>
    %20 = arith.truncf %19 : vector<16x32xf32> to vector<16x32xbf16>
    %21 = arith.index_cast %8 : i32 to index
    %c0_11 = arith.constant 0 : index
    %c0_12 = arith.constant 0 : index
    %22 = vector.load %arg7[%21, %c0_11, %c0_12] : memref<12x128x32xbf16, #tpu.memory_space<vmem>>, vector<1x128x32xbf16>
    %23 = vector.shape_cast %22 : vector<1x128x32xbf16> to vector<128x32xbf16>
    %cst_13 = arith.constant dense<0.000000e+00> : vector<16x32xf32>
    %24 = tpu.matmul %5, %23, %cst_13 {dimension_numbers = #tpu.dot_dimension_numbers<[1], [0], [0], [1], [0, 0, 1, 1], [], []>} : vector<16x128xbf16>, vector<128x32xbf16>, vector<16x32xf32> -> vector<16x32xf32>
    %25 = arith.truncf %24 : vector<16x32xf32> to vector<16x32xbf16>
    %26 = arith.index_cast %8 : i32 to index
    %c0_14 = arith.constant 0 : index
    %c0_15 = arith.constant 0 : index
    %27 = vector.load %arg8[%26, %c0_14, %c0_15] : memref<12x32x128xbf16, #tpu.memory_space<vmem>>, vector<1x32x128xbf16>
    %28 = vector.shape_cast %27 : vector<1x32x128xbf16> to vector<32x128xbf16>
    %cst_16 = arith.constant dense<0.000000e+00> : vector<16x16xf32>
    %29 = tpu.matmul %15, %20, %cst_16 {dimension_numbers = #tpu.dot_dimension_numbers<[1], [1], [0], [0], [0, 0, 1, 0], [], []>} : vector<16x32xbf16>, vector<16x32xbf16>, vector<16x16xf32> -> vector<16x16xf32>
    %c0_17 = arith.constant 0 : index
    %c0_18 = arith.constant 0 : index
    %c0_19 = arith.constant 0 : index
    %c0_20 = arith.constant 0 : index
    %30 = vector.load %arg19[%c0_17, %c0_18, %c0_19, %c0_20] : memref<5x1x16x16xf32, #tpu.memory_space<vmem>>, vector<1x1x16x16xf32>
    %31 = vector.shape_cast %30 : vector<1x1x16x16xf32> to vector<16x16xf32>
    %c5_i32 = arith.constant 5 : i32
    %32 = arith.muli %arg1, %c5_i32 : i32
    %c4_i32_21 = arith.constant 4 : i32
    %33 = arith.muli %32, %c4_i32_21 : i32
    %c0_i32_22 = arith.constant 0 : i32
    %34 = arith.addi %33, %c0_i32_22 : i32
    %35 = arith.index_cast %34 : i32 to index
    %36 = memref.load %arg4[%35] : memref<60xf32, #tpu.memory_space<smem>>
    %37 = vector.broadcast %36 : f32 to vector<16x16xf32>
    %38 = arith.mulf %31, %37 : vector<16x16xf32>
    %c1 = arith.constant 1 : index
    %c0_23 = arith.constant 0 : index
    %c0_24 = arith.constant 0 : index
    %c0_25 = arith.constant 0 : index
    %39 = vector.load %arg19[%c1, %c0_23, %c0_24, %c0_25] : memref<5x1x16x16xf32, #tpu.memory_space<vmem>>, vector<1x1x16x16xf32>
    %40 = vector.shape_cast %39 : vector<1x1x16x16xf32> to vector<16x16xf32>
    %c5_i32_26 = arith.constant 5 : i32
    %41 = arith.muli %arg1, %c5_i32_26 : i32
    %c1_i32 = arith.constant 1 : i32
    %42 = arith.addi %41, %c1_i32 : i32
    %c4_i32_27 = arith.constant 4 : i32
    %43 = arith.muli %42, %c4_i32_27 : i32
    %c0_i32_28 = arith.constant 0 : i32
    %44 = arith.addi %43, %c0_i32_28 : i32
    %45 = arith.index_cast %44 : i32 to index
    %46 = memref.load %arg4[%45] : memref<60xf32, #tpu.memory_space<smem>>
    %47 = vector.broadcast %46 : f32 to vector<16x16xf32>
    %48 = arith.mulf %40, %47 : vector<16x16xf32>
    %49 = arith.addf %38, %48 : vector<16x16xf32>
    %c2 = arith.constant 2 : index
    %c0_29 = arith.constant 0 : index
    %c0_30 = arith.constant 0 : index
    %c0_31 = arith.constant 0 : index
    %50 = vector.load %arg19[%c2, %c0_29, %c0_30, %c0_31] : memref<5x1x16x16xf32, #tpu.memory_space<vmem>>, vector<1x1x16x16xf32>
    %51 = vector.shape_cast %50 : vector<1x1x16x16xf32> to vector<16x16xf32>
    %c5_i32_32 = arith.constant 5 : i32
    %52 = arith.muli %arg1, %c5_i32_32 : i32
    %c2_i32 = arith.constant 2 : i32
    %53 = arith.addi %52, %c2_i32 : i32
    %c4_i32_33 = arith.constant 4 : i32
    %54 = arith.muli %53, %c4_i32_33 : i32
    %c0_i32_34 = arith.constant 0 : i32
    %55 = arith.addi %54, %c0_i32_34 : i32
    %56 = arith.index_cast %55 : i32 to index
    %57 = memref.load %arg4[%56] : memref<60xf32, #tpu.memory_space<smem>>
    %58 = vector.broadcast %57 : f32 to vector<16x16xf32>
    %59 = arith.mulf %51, %58 : vector<16x16xf32>
    %60 = arith.addf %49, %59 : vector<16x16xf32>
    %c3 = arith.constant 3 : index
    %c0_35 = arith.constant 0 : index
    %c0_36 = arith.constant 0 : index
    %c0_37 = arith.constant 0 : index
    %61 = vector.load %arg19[%c3, %c0_35, %c0_36, %c0_37] : memref<5x1x16x16xf32, #tpu.memory_space<vmem>>, vector<1x1x16x16xf32>
    %62 = vector.shape_cast %61 : vector<1x1x16x16xf32> to vector<16x16xf32>
    %c5_i32_38 = arith.constant 5 : i32
    %63 = arith.muli %arg1, %c5_i32_38 : i32
    %c3_i32 = arith.constant 3 : i32
    %64 = arith.addi %63, %c3_i32 : i32
    %c4_i32_39 = arith.constant 4 : i32
    %65 = arith.muli %64, %c4_i32_39 : i32
    %c0_i32_40 = arith.constant 0 : i32
    %66 = arith.addi %65, %c0_i32_40 : i32
    %67 = arith.index_cast %66 : i32 to index
    %68 = memref.load %arg4[%67] : memref<60xf32, #tpu.memory_space<smem>>
    %69 = vector.broadcast %68 : f32 to vector<16x16xf32>
    %70 = arith.mulf %62, %69 : vector<16x16xf32>
    %71 = arith.addf %60, %70 : vector<16x16xf32>
    %c4 = arith.constant 4 : index
    %c0_41 = arith.constant 0 : index
    %c0_42 = arith.constant 0 : index
    %c0_43 = arith.constant 0 : index
    %72 = vector.load %arg19[%c4, %c0_41, %c0_42, %c0_43] : memref<5x1x16x16xf32, #tpu.memory_space<vmem>>, vector<1x1x16x16xf32>
    %73 = vector.shape_cast %72 : vector<1x1x16x16xf32> to vector<16x16xf32>
    %c5_i32_44 = arith.constant 5 : i32
    %74 = arith.muli %arg1, %c5_i32_44 : i32
    %c4_i32_45 = arith.constant 4 : i32
    %75 = arith.addi %74, %c4_i32_45 : i32
    %c4_i32_46 = arith.constant 4 : i32
    %76 = arith.muli %75, %c4_i32_46 : i32
    %c0_i32_47 = arith.constant 0 : i32
    %77 = arith.addi %76, %c0_i32_47 : i32
    %78 = arith.index_cast %77 : i32 to index
    %79 = memref.load %arg4[%78] : memref<60xf32, #tpu.memory_space<smem>>
    %80 = vector.broadcast %79 : f32 to vector<16x16xf32>
    %81 = arith.mulf %73, %80 : vector<16x16xf32>
    %82 = arith.addf %71, %81 : vector<16x16xf32>
    %83 = arith.addf %29, %82 : vector<16x16xf32>
    %cst_48 = arith.constant dense<0xFF800000> : vector<16xf32>
    %84 = vector.multi_reduction <maximumf>, %83, %cst_48 [1] : vector<16x16xf32> to vector<16xf32>
    %85 = vector.shape_cast %84 : vector<16xf32> to vector<16x1xf32>
    %86 = vector.broadcast %85 : vector<16x1xf32> to vector<16x16xf32>
    %87 = arith.subf %83, %86 : vector<16x16xf32>
    %88 = math.exp %87 : vector<16x16xf32>
    %cst_49 = arith.constant dense<0.000000e+00> : vector<16xf32>
    %89 = vector.multi_reduction <add>, %88, %cst_49 [1] : vector<16x16xf32> to vector<16xf32>
    %90 = vector.shape_cast %89 : vector<16xf32> to vector<16x1xf32>
    %91 = tpu.reciprocal %90 {approx = true} : vector<16x1xf32> -> vector<16x1xf32>
    %92 = vector.broadcast %91 : vector<16x1xf32> to vector<16x16xf32>
    %93 = arith.mulf %88, %92 : vector<16x16xf32>
    %94 = arith.truncf %93 : vector<16x16xf32> to vector<16x16xbf16>
    %cst_50 = arith.constant dense<0.000000e+00> : vector<16x32xf32>
    %95 = tpu.matmul %94, %25, %cst_50 {dimension_numbers = #tpu.dot_dimension_numbers<[1], [0], [0], [1], [0, 0, 1, 1], [], []>} : vector<16x16xbf16>, vector<16x32xbf16>, vector<16x32xf32> -> vector<16x32xf32>
    %96 = arith.truncf %95 : vector<16x32xf32> to vector<16x32xbf16>
    %cst_51 = arith.constant dense<0.000000e+00> : vector<16x128xf32>
    %97 = tpu.matmul %96, %28, %cst_51 {dimension_numbers = #tpu.dot_dimension_numbers<[1], [0], [0], [1], [0, 0, 1, 1], [], []>} : vector<16x32xbf16>, vector<32x128xbf16>, vector<16x128xf32> -> vector<16x128xf32>
    %98 = arith.addf %6, %97 : vector<16x128xf32>
    %c4_i32_52 = arith.constant 4 : i32
    %99 = arith.muli %arg1, %c4_i32_52 : i32
    %c1_i32_53 = arith.constant 1 : i32
    %100 = arith.addi %99, %c1_i32_53 : i32
    %101 = arith.index_cast %100 : i32 to index
    %c0_54 = arith.constant 0 : index
    %c0_55 = arith.constant 0 : index
    %102 = vector.load %arg5[%101, %c0_54, %c0_55] : memref<12x128x32xbf16, #tpu.memory_space<vmem>>, vector<1x128x32xbf16>
    %103 = vector.shape_cast %102 : vector<1x128x32xbf16> to vector<128x32xbf16>
    %cst_56 = arith.constant dense<0.000000e+00> : vector<16x32xf32>
    %104 = tpu.matmul %5, %103, %cst_56 {dimension_numbers = #tpu.dot_dimension_numbers<[1], [0], [0], [1], [0, 0, 1, 1], [], []>} : vector<16x128xbf16>, vector<128x32xbf16>, vector<16x32xf32> -> vector<16x32xf32>
    %cst_57 = arith.constant 0.176776692 : f32
    %105 = vector.broadcast %cst_57 : f32 to vector<16x32xf32>
    %106 = arith.mulf %104, %105 : vector<16x32xf32>
    %107 = arith.truncf %106 : vector<16x32xf32> to vector<16x32xbf16>
    %108 = arith.index_cast %100 : i32 to index
    %c0_58 = arith.constant 0 : index
    %c0_59 = arith.constant 0 : index
    %109 = vector.load %arg6[%108, %c0_58, %c0_59] : memref<12x128x32xbf16, #tpu.memory_space<vmem>>, vector<1x128x32xbf16>
    %110 = vector.shape_cast %109 : vector<1x128x32xbf16> to vector<128x32xbf16>
    %cst_60 = arith.constant dense<0.000000e+00> : vector<16x32xf32>
    %111 = tpu.matmul %5, %110, %cst_60 {dimension_numbers = #tpu.dot_dimension_numbers<[1], [0], [0], [1], [0, 0, 1, 1], [], []>} : vector<16x128xbf16>, vector<128x32xbf16>, vector<16x32xf32> -> vector<16x32xf32>
    %112 = arith.truncf %111 : vector<16x32xf32> to vector<16x32xbf16>
    %113 = arith.index_cast %100 : i32 to index
    %c0_61 = arith.constant 0 : index
    %c0_62 = arith.constant 0 : index
    %114 = vector.load %arg7[%113, %c0_61, %c0_62] : memref<12x128x32xbf16, #tpu.memory_space<vmem>>, vector<1x128x32xbf16>
    %115 = vector.shape_cast %114 : vector<1x128x32xbf16> to vector<128x32xbf16>
    %cst_63 = arith.constant dense<0.000000e+00> : vector<16x32xf32>
    %116 = tpu.matmul %5, %115, %cst_63 {dimension_numbers = #tpu.dot_dimension_numbers<[1], [0], [0], [1], [0, 0, 1, 1], [], []>} : vector<16x128xbf16>, vector<128x32xbf16>, vector<16x32xf32> -> vector<16x32xf32>
    %117 = arith.truncf %116 : vector<16x32xf32> to vector<16x32xbf16>
    %118 = arith.index_cast %100 : i32 to index
    %c0_64 = arith.constant 0 : index
    %c0_65 = arith.constant 0 : index
    %119 = vector.load %arg8[%118, %c0_64, %c0_65] : memref<12x32x128xbf16, #tpu.memory_space<vmem>>, vector<1x32x128xbf16>
    %120 = vector.shape_cast %119 : vector<1x32x128xbf16> to vector<32x128xbf16>
    %cst_66 = arith.constant dense<0.000000e+00> : vector<16x16xf32>
    %121 = tpu.matmul %107, %112, %cst_66 {dimension_numbers = #tpu.dot_dimension_numbers<[1], [1], [0], [0], [0, 0, 1, 0], [], []>} : vector<16x32xbf16>, vector<16x32xbf16>, vector<16x16xf32> -> vector<16x16xf32>
    %c0_67 = arith.constant 0 : index
    %c0_68 = arith.constant 0 : index
    %c0_69 = arith.constant 0 : index
    %c0_70 = arith.constant 0 : index
    %122 = vector.load %arg19[%c0_67, %c0_68, %c0_69, %c0_70] : memref<5x1x16x16xf32, #tpu.memory_space<vmem>>, vector<1x1x16x16xf32>
    %123 = vector.shape_cast %122 : vector<1x1x16x16xf32> to vector<16x16xf32>
    %c5_i32_71 = arith.constant 5 : i32
    %124 = arith.muli %arg1, %c5_i32_71 : i32
    %c4_i32_72 = arith.constant 4 : i32
    %125 = arith.muli %124, %c4_i32_72 : i32
    %c1_i32_73 = arith.constant 1 : i32
    %126 = arith.addi %125, %c1_i32_73 : i32
    %127 = arith.index_cast %126 : i32 to index
    %128 = memref.load %arg4[%127] : memref<60xf32, #tpu.memory_space<smem>>
    %129 = vector.broadcast %128 : f32 to vector<16x16xf32>
    %130 = arith.mulf %123, %129 : vector<16x16xf32>
    %c1_74 = arith.constant 1 : index
    %c0_75 = arith.constant 0 : index
    %c0_76 = arith.constant 0 : index
    %c0_77 = arith.constant 0 : index
    %131 = vector.load %arg19[%c1_74, %c0_75, %c0_76, %c0_77] : memref<5x1x16x16xf32, #tpu.memory_space<vmem>>, vector<1x1x16x16xf32>
    %132 = vector.shape_cast %131 : vector<1x1x16x16xf32> to vector<16x16xf32>
    %c5_i32_78 = arith.constant 5 : i32
    %133 = arith.muli %arg1, %c5_i32_78 : i32
    %c1_i32_79 = arith.constant 1 : i32
    %134 = arith.addi %133, %c1_i32_79 : i32
    %c4_i32_80 = arith.constant 4 : i32
    %135 = arith.muli %134, %c4_i32_80 : i32
    %c1_i32_81 = arith.constant 1 : i32
    %136 = arith.addi %135, %c1_i32_81 : i32
    %137 = arith.index_cast %136 : i32 to index
    %138 = memref.load %arg4[%137] : memref<60xf32, #tpu.memory_space<smem>>
    %139 = vector.broadcast %138 : f32 to vector<16x16xf32>
    %140 = arith.mulf %132, %139 : vector<16x16xf32>
    %141 = arith.addf %130, %140 : vector<16x16xf32>
    %c2_82 = arith.constant 2 : index
    %c0_83 = arith.constant 0 : index
    %c0_84 = arith.constant 0 : index
    %c0_85 = arith.constant 0 : index
    %142 = vector.load %arg19[%c2_82, %c0_83, %c0_84, %c0_85] : memref<5x1x16x16xf32, #tpu.memory_space<vmem>>, vector<1x1x16x16xf32>
    %143 = vector.shape_cast %142 : vector<1x1x16x16xf32> to vector<16x16xf32>
    %c5_i32_86 = arith.constant 5 : i32
    %144 = arith.muli %arg1, %c5_i32_86 : i32
    %c2_i32_87 = arith.constant 2 : i32
    %145 = arith.addi %144, %c2_i32_87 : i32
    %c4_i32_88 = arith.constant 4 : i32
    %146 = arith.muli %145, %c4_i32_88 : i32
    %c1_i32_89 = arith.constant 1 : i32
    %147 = arith.addi %146, %c1_i32_89 : i32
    %148 = arith.index_cast %147 : i32 to index
    %149 = memref.load %arg4[%148] : memref<60xf32, #tpu.memory_space<smem>>
    %150 = vector.broadcast %149 : f32 to vector<16x16xf32>
    %151 = arith.mulf %143, %150 : vector<16x16xf32>
    %152 = arith.addf %141, %151 : vector<16x16xf32>
    %c3_90 = arith.constant 3 : index
    %c0_91 = arith.constant 0 : index
    %c0_92 = arith.constant 0 : index
    %c0_93 = arith.constant 0 : index
    %153 = vector.load %arg19[%c3_90, %c0_91, %c0_92, %c0_93] : memref<5x1x16x16xf32, #tpu.memory_space<vmem>>, vector<1x1x16x16xf32>
    %154 = vector.shape_cast %153 : vector<1x1x16x16xf32> to vector<16x16xf32>
    %c5_i32_94 = arith.constant 5 : i32
    %155 = arith.muli %arg1, %c5_i32_94 : i32
    %c3_i32_95 = arith.constant 3 : i32
    %156 = arith.addi %155, %c3_i32_95 : i32
    %c4_i32_96 = arith.constant 4 : i32
    %157 = arith.muli %156, %c4_i32_96 : i32
    %c1_i32_97 = arith.constant 1 : i32
    %158 = arith.addi %157, %c1_i32_97 : i32
    %159 = arith.index_cast %158 : i32 to index
    %160 = memref.load %arg4[%159] : memref<60xf32, #tpu.memory_space<smem>>
    %161 = vector.broadcast %160 : f32 to vector<16x16xf32>
    %162 = arith.mulf %154, %161 : vector<16x16xf32>
    %163 = arith.addf %152, %162 : vector<16x16xf32>
    %c4_98 = arith.constant 4 : index
    %c0_99 = arith.constant 0 : index
    %c0_100 = arith.constant 0 : index
    %c0_101 = arith.constant 0 : index
    %164 = vector.load %arg19[%c4_98, %c0_99, %c0_100, %c0_101] : memref<5x1x16x16xf32, #tpu.memory_space<vmem>>, vector<1x1x16x16xf32>
    %165 = vector.shape_cast %164 : vector<1x1x16x16xf32> to vector<16x16xf32>
    %c5_i32_102 = arith.constant 5 : i32
    %166 = arith.muli %arg1, %c5_i32_102 : i32
    %c4_i32_103 = arith.constant 4 : i32
    %167 = arith.addi %166, %c4_i32_103 : i32
    %c4_i32_104 = arith.constant 4 : i32
    %168 = arith.muli %167, %c4_i32_104 : i32
    %c1_i32_105 = arith.constant 1 : i32
    %169 = arith.addi %168, %c1_i32_105 : i32
    %170 = arith.index_cast %169 : i32 to index
    %171 = memref.load %arg4[%170] : memref<60xf32, #tpu.memory_space<smem>>
    %172 = vector.broadcast %171 : f32 to vector<16x16xf32>
    %173 = arith.mulf %165, %172 : vector<16x16xf32>
    %174 = arith.addf %163, %173 : vector<16x16xf32>
    %175 = arith.addf %121, %174 : vector<16x16xf32>
    %cst_106 = arith.constant dense<0xFF800000> : vector<16xf32>
    %176 = vector.multi_reduction <maximumf>, %175, %cst_106 [1] : vector<16x16xf32> to vector<16xf32>
    %177 = vector.shape_cast %176 : vector<16xf32> to vector<16x1xf32>
    %178 = vector.broadcast %177 : vector<16x1xf32> to vector<16x16xf32>
    %179 = arith.subf %175, %178 : vector<16x16xf32>
    %180 = math.exp %179 : vector<16x16xf32>
    %cst_107 = arith.constant dense<0.000000e+00> : vector<16xf32>
    %181 = vector.multi_reduction <add>, %180, %cst_107 [1] : vector<16x16xf32> to vector<16xf32>
    %182 = vector.shape_cast %181 : vector<16xf32> to vector<16x1xf32>
    %183 = tpu.reciprocal %182 {approx = true} : vector<16x1xf32> -> vector<16x1xf32>
    %184 = vector.broadcast %183 : vector<16x1xf32> to vector<16x16xf32>
    %185 = arith.mulf %180, %184 : vector<16x16xf32>
    %186 = arith.truncf %185 : vector<16x16xf32> to vector<16x16xbf16>
    %cst_108 = arith.constant dense<0.000000e+00> : vector<16x32xf32>
    %187 = tpu.matmul %186, %117, %cst_108 {dimension_numbers = #tpu.dot_dimension_numbers<[1], [0], [0], [1], [0, 0, 1, 1], [], []>} : vector<16x16xbf16>, vector<16x32xbf16>, vector<16x32xf32> -> vector<16x32xf32>
    %188 = arith.truncf %187 : vector<16x32xf32> to vector<16x32xbf16>
    %cst_109 = arith.constant dense<0.000000e+00> : vector<16x128xf32>
    %189 = tpu.matmul %188, %120, %cst_109 {dimension_numbers = #tpu.dot_dimension_numbers<[1], [0], [0], [1], [0, 0, 1, 1], [], []>} : vector<16x32xbf16>, vector<32x128xbf16>, vector<16x128xf32> -> vector<16x128xf32>
    %190 = arith.addf %98, %189 : vector<16x128xf32>
    %c4_i32_110 = arith.constant 4 : i32
    %191 = arith.muli %arg1, %c4_i32_110 : i32
    %c2_i32_111 = arith.constant 2 : i32
    %192 = arith.addi %191, %c2_i32_111 : i32
    %193 = arith.index_cast %192 : i32 to index
    %c0_112 = arith.constant 0 : index
    %c0_113 = arith.constant 0 : index
    %194 = vector.load %arg5[%193, %c0_112, %c0_113] : memref<12x128x32xbf16, #tpu.memory_space<vmem>>, vector<1x128x32xbf16>
    %195 = vector.shape_cast %194 : vector<1x128x32xbf16> to vector<128x32xbf16>
    %cst_114 = arith.constant dense<0.000000e+00> : vector<16x32xf32>
    %196 = tpu.matmul %5, %195, %cst_114 {dimension_numbers = #tpu.dot_dimension_numbers<[1], [0], [0], [1], [0, 0, 1, 1], [], []>} : vector<16x128xbf16>, vector<128x32xbf16>, vector<16x32xf32> -> vector<16x32xf32>
    %cst_115 = arith.constant 0.176776692 : f32
    %197 = vector.broadcast %cst_115 : f32 to vector<16x32xf32>
    %198 = arith.mulf %196, %197 : vector<16x32xf32>
    %199 = arith.truncf %198 : vector<16x32xf32> to vector<16x32xbf16>
    %200 = arith.index_cast %192 : i32 to index
    %c0_116 = arith.constant 0 : index
    %c0_117 = arith.constant 0 : index
    %201 = vector.load %arg6[%200, %c0_116, %c0_117] : memref<12x128x32xbf16, #tpu.memory_space<vmem>>, vector<1x128x32xbf16>
    %202 = vector.shape_cast %201 : vector<1x128x32xbf16> to vector<128x32xbf16>
    %cst_118 = arith.constant dense<0.000000e+00> : vector<16x32xf32>
    %203 = tpu.matmul %5, %202, %cst_118 {dimension_numbers = #tpu.dot_dimension_numbers<[1], [0], [0], [1], [0, 0, 1, 1], [], []>} : vector<16x128xbf16>, vector<128x32xbf16>, vector<16x32xf32> -> vector<16x32xf32>
    %204 = arith.truncf %203 : vector<16x32xf32> to vector<16x32xbf16>
    %205 = arith.index_cast %192 : i32 to index
    %c0_119 = arith.constant 0 : index
    %c0_120 = arith.constant 0 : index
    %206 = vector.load %arg7[%205, %c0_119, %c0_120] : memref<12x128x32xbf16, #tpu.memory_space<vmem>>, vector<1x128x32xbf16>
    %207 = vector.shape_cast %206 : vector<1x128x32xbf16> to vector<128x32xbf16>
    %cst_121 = arith.constant dense<0.000000e+00> : vector<16x32xf32>
    %208 = tpu.matmul %5, %207, %cst_121 {dimension_numbers = #tpu.dot_dimension_numbers<[1], [0], [0], [1], [0, 0, 1, 1], [], []>} : vector<16x128xbf16>, vector<128x32xbf16>, vector<16x32xf32> -> vector<16x32xf32>
    %209 = arith.truncf %208 : vector<16x32xf32> to vector<16x32xbf16>
    %210 = arith.index_cast %192 : i32 to index
    %c0_122 = arith.constant 0 : index
    %c0_123 = arith.constant 0 : index
    %211 = vector.load %arg8[%210, %c0_122, %c0_123] : memref<12x32x128xbf16, #tpu.memory_space<vmem>>, vector<1x32x128xbf16>
    %212 = vector.shape_cast %211 : vector<1x32x128xbf16> to vector<32x128xbf16>
    %cst_124 = arith.constant dense<0.000000e+00> : vector<16x16xf32>
    %213 = tpu.matmul %199, %204, %cst_124 {dimension_numbers = #tpu.dot_dimension_numbers<[1], [1], [0], [0], [0, 0, 1, 0], [], []>} : vector<16x32xbf16>, vector<16x32xbf16>, vector<16x16xf32> -> vector<16x16xf32>
    %c0_125 = arith.constant 0 : index
    %c0_126 = arith.constant 0 : index
    %c0_127 = arith.constant 0 : index
    %c0_128 = arith.constant 0 : index
    %214 = vector.load %arg19[%c0_125, %c0_126, %c0_127, %c0_128] : memref<5x1x16x16xf32, #tpu.memory_space<vmem>>, vector<1x1x16x16xf32>
    %215 = vector.shape_cast %214 : vector<1x1x16x16xf32> to vector<16x16xf32>
    %c5_i32_129 = arith.constant 5 : i32
    %216 = arith.muli %arg1, %c5_i32_129 : i32
    %c4_i32_130 = arith.constant 4 : i32
    %217 = arith.muli %216, %c4_i32_130 : i32
    %c2_i32_131 = arith.constant 2 : i32
    %218 = arith.addi %217, %c2_i32_131 : i32
    %219 = arith.index_cast %218 : i32 to index
    %220 = memref.load %arg4[%219] : memref<60xf32, #tpu.memory_space<smem>>
    %221 = vector.broadcast %220 : f32 to vector<16x16xf32>
    %222 = arith.mulf %215, %221 : vector<16x16xf32>
    %c1_132 = arith.constant 1 : index
    %c0_133 = arith.constant 0 : index
    %c0_134 = arith.constant 0 : index
    %c0_135 = arith.constant 0 : index
    %223 = vector.load %arg19[%c1_132, %c0_133, %c0_134, %c0_135] : memref<5x1x16x16xf32, #tpu.memory_space<vmem>>, vector<1x1x16x16xf32>
    %224 = vector.shape_cast %223 : vector<1x1x16x16xf32> to vector<16x16xf32>
    %c5_i32_136 = arith.constant 5 : i32
    %225 = arith.muli %arg1, %c5_i32_136 : i32
    %c1_i32_137 = arith.constant 1 : i32
    %226 = arith.addi %225, %c1_i32_137 : i32
    %c4_i32_138 = arith.constant 4 : i32
    %227 = arith.muli %226, %c4_i32_138 : i32
    %c2_i32_139 = arith.constant 2 : i32
    %228 = arith.addi %227, %c2_i32_139 : i32
    %229 = arith.index_cast %228 : i32 to index
    %230 = memref.load %arg4[%229] : memref<60xf32, #tpu.memory_space<smem>>
    %231 = vector.broadcast %230 : f32 to vector<16x16xf32>
    %232 = arith.mulf %224, %231 : vector<16x16xf32>
    %233 = arith.addf %222, %232 : vector<16x16xf32>
    %c2_140 = arith.constant 2 : index
    %c0_141 = arith.constant 0 : index
    %c0_142 = arith.constant 0 : index
    %c0_143 = arith.constant 0 : index
    %234 = vector.load %arg19[%c2_140, %c0_141, %c0_142, %c0_143] : memref<5x1x16x16xf32, #tpu.memory_space<vmem>>, vector<1x1x16x16xf32>
    %235 = vector.shape_cast %234 : vector<1x1x16x16xf32> to vector<16x16xf32>
    %c5_i32_144 = arith.constant 5 : i32
    %236 = arith.muli %arg1, %c5_i32_144 : i32
    %c2_i32_145 = arith.constant 2 : i32
    %237 = arith.addi %236, %c2_i32_145 : i32
    %c4_i32_146 = arith.constant 4 : i32
    %238 = arith.muli %237, %c4_i32_146 : i32
    %c2_i32_147 = arith.constant 2 : i32
    %239 = arith.addi %238, %c2_i32_147 : i32
    %240 = arith.index_cast %239 : i32 to index
    %241 = memref.load %arg4[%240] : memref<60xf32, #tpu.memory_space<smem>>
    %242 = vector.broadcast %241 : f32 to vector<16x16xf32>
    %243 = arith.mulf %235, %242 : vector<16x16xf32>
    %244 = arith.addf %233, %243 : vector<16x16xf32>
    %c3_148 = arith.constant 3 : index
    %c0_149 = arith.constant 0 : index
    %c0_150 = arith.constant 0 : index
    %c0_151 = arith.constant 0 : index
    %245 = vector.load %arg19[%c3_148, %c0_149, %c0_150, %c0_151] : memref<5x1x16x16xf32, #tpu.memory_space<vmem>>, vector<1x1x16x16xf32>
    %246 = vector.shape_cast %245 : vector<1x1x16x16xf32> to vector<16x16xf32>
    %c5_i32_152 = arith.constant 5 : i32
    %247 = arith.muli %arg1, %c5_i32_152 : i32
    %c3_i32_153 = arith.constant 3 : i32
    %248 = arith.addi %247, %c3_i32_153 : i32
    %c4_i32_154 = arith.constant 4 : i32
    %249 = arith.muli %248, %c4_i32_154 : i32
    %c2_i32_155 = arith.constant 2 : i32
    %250 = arith.addi %249, %c2_i32_155 : i32
    %251 = arith.index_cast %250 : i32 to index
    %252 = memref.load %arg4[%251] : memref<60xf32, #tpu.memory_space<smem>>
    %253 = vector.broadcast %252 : f32 to vector<16x16xf32>
    %254 = arith.mulf %246, %253 : vector<16x16xf32>
    %255 = arith.addf %244, %254 : vector<16x16xf32>
    %c4_156 = arith.constant 4 : index
    %c0_157 = arith.constant 0 : index
    %c0_158 = arith.constant 0 : index
    %c0_159 = arith.constant 0 : index
    %256 = vector.load %arg19[%c4_156, %c0_157, %c0_158, %c0_159] : memref<5x1x16x16xf32, #tpu.memory_space<vmem>>, vector<1x1x16x16xf32>
    %257 = vector.shape_cast %256 : vector<1x1x16x16xf32> to vector<16x16xf32>
    %c5_i32_160 = arith.constant 5 : i32
    %258 = arith.muli %arg1, %c5_i32_160 : i32
    %c4_i32_161 = arith.constant 4 : i32
    %259 = arith.addi %258, %c4_i32_161 : i32
    %c4_i32_162 = arith.constant 4 : i32
    %260 = arith.muli %259, %c4_i32_162 : i32
    %c2_i32_163 = arith.constant 2 : i32
    %261 = arith.addi %260, %c2_i32_163 : i32
    %262 = arith.index_cast %261 : i32 to index
    %263 = memref.load %arg4[%262] : memref<60xf32, #tpu.memory_space<smem>>
    %264 = vector.broadcast %263 : f32 to vector<16x16xf32>
    %265 = arith.mulf %257, %264 : vector<16x16xf32>
    %266 = arith.addf %255, %265 : vector<16x16xf32>
    %267 = arith.addf %213, %266 : vector<16x16xf32>
    %cst_164 = arith.constant dense<0xFF800000> : vector<16xf32>
    %268 = vector.multi_reduction <maximumf>, %267, %cst_164 [1] : vector<16x16xf32> to vector<16xf32>
    %269 = vector.shape_cast %268 : vector<16xf32> to vector<16x1xf32>
    %270 = vector.broadcast %269 : vector<16x1xf32> to vector<16x16xf32>
    %271 = arith.subf %267, %270 : vector<16x16xf32>
    %272 = math.exp %271 : vector<16x16xf32>
    %cst_165 = arith.constant dense<0.000000e+00> : vector<16xf32>
    %273 = vector.multi_reduction <add>, %272, %cst_165 [1] : vector<16x16xf32> to vector<16xf32>
    %274 = vector.shape_cast %273 : vector<16xf32> to vector<16x1xf32>
    %275 = tpu.reciprocal %274 {approx = true} : vector<16x1xf32> -> vector<16x1xf32>
    %276 = vector.broadcast %275 : vector<16x1xf32> to vector<16x16xf32>
    %277 = arith.mulf %272, %276 : vector<16x16xf32>
    %278 = arith.truncf %277 : vector<16x16xf32> to vector<16x16xbf16>
    %cst_166 = arith.constant dense<0.000000e+00> : vector<16x32xf32>
    %279 = tpu.matmul %278, %209, %cst_166 {dimension_numbers = #tpu.dot_dimension_numbers<[1], [0], [0], [1], [0, 0, 1, 1], [], []>} : vector<16x16xbf16>, vector<16x32xbf16>, vector<16x32xf32> -> vector<16x32xf32>
    %280 = arith.truncf %279 : vector<16x32xf32> to vector<16x32xbf16>
    %cst_167 = arith.constant dense<0.000000e+00> : vector<16x128xf32>
    %281 = tpu.matmul %280, %212, %cst_167 {dimension_numbers = #tpu.dot_dimension_numbers<[1], [0], [0], [1], [0, 0, 1, 1], [], []>} : vector<16x32xbf16>, vector<32x128xbf16>, vector<16x128xf32> -> vector<16x128xf32>
    %282 = arith.addf %190, %281 : vector<16x128xf32>
    %c4_i32_168 = arith.constant 4 : i32
    %283 = arith.muli %arg1, %c4_i32_168 : i32
    %c3_i32_169 = arith.constant 3 : i32
    %284 = arith.addi %283, %c3_i32_169 : i32
    %285 = arith.index_cast %284 : i32 to index
    %c0_170 = arith.constant 0 : index
    %c0_171 = arith.constant 0 : index
    %286 = vector.load %arg5[%285, %c0_170, %c0_171] : memref<12x128x32xbf16, #tpu.memory_space<vmem>>, vector<1x128x32xbf16>
    %287 = vector.shape_cast %286 : vector<1x128x32xbf16> to vector<128x32xbf16>
    %cst_172 = arith.constant dense<0.000000e+00> : vector<16x32xf32>
    %288 = tpu.matmul %5, %287, %cst_172 {dimension_numbers = #tpu.dot_dimension_numbers<[1], [0], [0], [1], [0, 0, 1, 1], [], []>} : vector<16x128xbf16>, vector<128x32xbf16>, vector<16x32xf32> -> vector<16x32xf32>
    %cst_173 = arith.constant 0.176776692 : f32
    %289 = vector.broadcast %cst_173 : f32 to vector<16x32xf32>
    %290 = arith.mulf %288, %289 : vector<16x32xf32>
    %291 = arith.truncf %290 : vector<16x32xf32> to vector<16x32xbf16>
    %292 = arith.index_cast %284 : i32 to index
    %c0_174 = arith.constant 0 : index
    %c0_175 = arith.constant 0 : index
    %293 = vector.load %arg6[%292, %c0_174, %c0_175] : memref<12x128x32xbf16, #tpu.memory_space<vmem>>, vector<1x128x32xbf16>
    %294 = vector.shape_cast %293 : vector<1x128x32xbf16> to vector<128x32xbf16>
    %cst_176 = arith.constant dense<0.000000e+00> : vector<16x32xf32>
    %295 = tpu.matmul %5, %294, %cst_176 {dimension_numbers = #tpu.dot_dimension_numbers<[1], [0], [0], [1], [0, 0, 1, 1], [], []>} : vector<16x128xbf16>, vector<128x32xbf16>, vector<16x32xf32> -> vector<16x32xf32>
    %296 = arith.truncf %295 : vector<16x32xf32> to vector<16x32xbf16>
    %297 = arith.index_cast %284 : i32 to index
    %c0_177 = arith.constant 0 : index
    %c0_178 = arith.constant 0 : index
    %298 = vector.load %arg7[%297, %c0_177, %c0_178] : memref<12x128x32xbf16, #tpu.memory_space<vmem>>, vector<1x128x32xbf16>
    %299 = vector.shape_cast %298 : vector<1x128x32xbf16> to vector<128x32xbf16>
    %cst_179 = arith.constant dense<0.000000e+00> : vector<16x32xf32>
    %300 = tpu.matmul %5, %299, %cst_179 {dimension_numbers = #tpu.dot_dimension_numbers<[1], [0], [0], [1], [0, 0, 1, 1], [], []>} : vector<16x128xbf16>, vector<128x32xbf16>, vector<16x32xf32> -> vector<16x32xf32>
    %301 = arith.truncf %300 : vector<16x32xf32> to vector<16x32xbf16>
    %302 = arith.index_cast %284 : i32 to index
    %c0_180 = arith.constant 0 : index
    %c0_181 = arith.constant 0 : index
    %303 = vector.load %arg8[%302, %c0_180, %c0_181] : memref<12x32x128xbf16, #tpu.memory_space<vmem>>, vector<1x32x128xbf16>
    %304 = vector.shape_cast %303 : vector<1x32x128xbf16> to vector<32x128xbf16>
    %cst_182 = arith.constant dense<0.000000e+00> : vector<16x16xf32>
    %305 = tpu.matmul %291, %296, %cst_182 {dimension_numbers = #tpu.dot_dimension_numbers<[1], [1], [0], [0], [0, 0, 1, 0], [], []>} : vector<16x32xbf16>, vector<16x32xbf16>, vector<16x16xf32> -> vector<16x16xf32>
    %c0_183 = arith.constant 0 : index
    %c0_184 = arith.constant 0 : index
    %c0_185 = arith.constant 0 : index
    %c0_186 = arith.constant 0 : index
    %306 = vector.load %arg19[%c0_183, %c0_184, %c0_185, %c0_186] : memref<5x1x16x16xf32, #tpu.memory_space<vmem>>, vector<1x1x16x16xf32>
    %307 = vector.shape_cast %306 : vector<1x1x16x16xf32> to vector<16x16xf32>
    %c5_i32_187 = arith.constant 5 : i32
    %308 = arith.muli %arg1, %c5_i32_187 : i32
    %c4_i32_188 = arith.constant 4 : i32
    %309 = arith.muli %308, %c4_i32_188 : i32
    %c3_i32_189 = arith.constant 3 : i32
    %310 = arith.addi %309, %c3_i32_189 : i32
    %311 = arith.index_cast %310 : i32 to index
    %312 = memref.load %arg4[%311] : memref<60xf32, #tpu.memory_space<smem>>
    %313 = vector.broadcast %312 : f32 to vector<16x16xf32>
    %314 = arith.mulf %307, %313 : vector<16x16xf32>
    %c1_190 = arith.constant 1 : index
    %c0_191 = arith.constant 0 : index
    %c0_192 = arith.constant 0 : index
    %c0_193 = arith.constant 0 : index
    %315 = vector.load %arg19[%c1_190, %c0_191, %c0_192, %c0_193] : memref<5x1x16x16xf32, #tpu.memory_space<vmem>>, vector<1x1x16x16xf32>
    %316 = vector.shape_cast %315 : vector<1x1x16x16xf32> to vector<16x16xf32>
    %c5_i32_194 = arith.constant 5 : i32
    %317 = arith.muli %arg1, %c5_i32_194 : i32
    %c1_i32_195 = arith.constant 1 : i32
    %318 = arith.addi %317, %c1_i32_195 : i32
    %c4_i32_196 = arith.constant 4 : i32
    %319 = arith.muli %318, %c4_i32_196 : i32
    %c3_i32_197 = arith.constant 3 : i32
    %320 = arith.addi %319, %c3_i32_197 : i32
    %321 = arith.index_cast %320 : i32 to index
    %322 = memref.load %arg4[%321] : memref<60xf32, #tpu.memory_space<smem>>
    %323 = vector.broadcast %322 : f32 to vector<16x16xf32>
    %324 = arith.mulf %316, %323 : vector<16x16xf32>
    %325 = arith.addf %314, %324 : vector<16x16xf32>
    %c2_198 = arith.constant 2 : index
    %c0_199 = arith.constant 0 : index
    %c0_200 = arith.constant 0 : index
    %c0_201 = arith.constant 0 : index
    %326 = vector.load %arg19[%c2_198, %c0_199, %c0_200, %c0_201] : memref<5x1x16x16xf32, #tpu.memory_space<vmem>>, vector<1x1x16x16xf32>
    %327 = vector.shape_cast %326 : vector<1x1x16x16xf32> to vector<16x16xf32>
    %c5_i32_202 = arith.constant 5 : i32
    %328 = arith.muli %arg1, %c5_i32_202 : i32
    %c2_i32_203 = arith.constant 2 : i32
    %329 = arith.addi %328, %c2_i32_203 : i32
    %c4_i32_204 = arith.constant 4 : i32
    %330 = arith.muli %329, %c4_i32_204 : i32
    %c3_i32_205 = arith.constant 3 : i32
    %331 = arith.addi %330, %c3_i32_205 : i32
    %332 = arith.index_cast %331 : i32 to index
    %333 = memref.load %arg4[%332] : memref<60xf32, #tpu.memory_space<smem>>
    %334 = vector.broadcast %333 : f32 to vector<16x16xf32>
    %335 = arith.mulf %327, %334 : vector<16x16xf32>
    %336 = arith.addf %325, %335 : vector<16x16xf32>
    %c3_206 = arith.constant 3 : index
    %c0_207 = arith.constant 0 : index
    %c0_208 = arith.constant 0 : index
    %c0_209 = arith.constant 0 : index
    %337 = vector.load %arg19[%c3_206, %c0_207, %c0_208, %c0_209] : memref<5x1x16x16xf32, #tpu.memory_space<vmem>>, vector<1x1x16x16xf32>
    %338 = vector.shape_cast %337 : vector<1x1x16x16xf32> to vector<16x16xf32>
    %c5_i32_210 = arith.constant 5 : i32
    %339 = arith.muli %arg1, %c5_i32_210 : i32
    %c3_i32_211 = arith.constant 3 : i32
    %340 = arith.addi %339, %c3_i32_211 : i32
    %c4_i32_212 = arith.constant 4 : i32
    %341 = arith.muli %340, %c4_i32_212 : i32
    %c3_i32_213 = arith.constant 3 : i32
    %342 = arith.addi %341, %c3_i32_213 : i32
    %343 = arith.index_cast %342 : i32 to index
    %344 = memref.load %arg4[%343] : memref<60xf32, #tpu.memory_space<smem>>
    %345 = vector.broadcast %344 : f32 to vector<16x16xf32>
    %346 = arith.mulf %338, %345 : vector<16x16xf32>
    %347 = arith.addf %336, %346 : vector<16x16xf32>
    %c4_214 = arith.constant 4 : index
    %c0_215 = arith.constant 0 : index
    %c0_216 = arith.constant 0 : index
    %c0_217 = arith.constant 0 : index
    %348 = vector.load %arg19[%c4_214, %c0_215, %c0_216, %c0_217] : memref<5x1x16x16xf32, #tpu.memory_space<vmem>>, vector<1x1x16x16xf32>
    %349 = vector.shape_cast %348 : vector<1x1x16x16xf32> to vector<16x16xf32>
    %c5_i32_218 = arith.constant 5 : i32
    %350 = arith.muli %arg1, %c5_i32_218 : i32
    %c4_i32_219 = arith.constant 4 : i32
    %351 = arith.addi %350, %c4_i32_219 : i32
    %c4_i32_220 = arith.constant 4 : i32
    %352 = arith.muli %351, %c4_i32_220 : i32
    %c3_i32_221 = arith.constant 3 : i32
    %353 = arith.addi %352, %c3_i32_221 : i32
    %354 = arith.index_cast %353 : i32 to index
    %355 = memref.load %arg4[%354] : memref<60xf32, #tpu.memory_space<smem>>
    %356 = vector.broadcast %355 : f32 to vector<16x16xf32>
    %357 = arith.mulf %349, %356 : vector<16x16xf32>
    %358 = arith.addf %347, %357 : vector<16x16xf32>
    %359 = arith.addf %305, %358 : vector<16x16xf32>
    %cst_222 = arith.constant dense<0xFF800000> : vector<16xf32>
    %360 = vector.multi_reduction <maximumf>, %359, %cst_222 [1] : vector<16x16xf32> to vector<16xf32>
    %361 = vector.shape_cast %360 : vector<16xf32> to vector<16x1xf32>
    %362 = vector.broadcast %361 : vector<16x1xf32> to vector<16x16xf32>
    %363 = arith.subf %359, %362 : vector<16x16xf32>
    %364 = math.exp %363 : vector<16x16xf32>
    %cst_223 = arith.constant dense<0.000000e+00> : vector<16xf32>
    %365 = vector.multi_reduction <add>, %364, %cst_223 [1] : vector<16x16xf32> to vector<16xf32>
    %366 = vector.shape_cast %365 : vector<16xf32> to vector<16x1xf32>
    %367 = tpu.reciprocal %366 {approx = true} : vector<16x1xf32> -> vector<16x1xf32>
    %368 = vector.broadcast %367 : vector<16x1xf32> to vector<16x16xf32>
    %369 = arith.mulf %364, %368 : vector<16x16xf32>
    %370 = arith.truncf %369 : vector<16x16xf32> to vector<16x16xbf16>
    %cst_224 = arith.constant dense<0.000000e+00> : vector<16x32xf32>
    %371 = tpu.matmul %370, %301, %cst_224 {dimension_numbers = #tpu.dot_dimension_numbers<[1], [0], [0], [1], [0, 0, 1, 1], [], []>} : vector<16x16xbf16>, vector<16x32xbf16>, vector<16x32xf32> -> vector<16x32xf32>
    %372 = arith.truncf %371 : vector<16x32xf32> to vector<16x32xbf16>
    %cst_225 = arith.constant dense<0.000000e+00> : vector<16x128xf32>
    %373 = tpu.matmul %372, %304, %cst_225 {dimension_numbers = #tpu.dot_dimension_numbers<[1], [0], [0], [1], [0, 0, 1, 1], [], []>} : vector<16x32xbf16>, vector<32x128xbf16>, vector<16x128xf32> -> vector<16x128xf32>
    %374 = arith.addf %282, %373 : vector<16x128xf32>
    %375 = arith.addf %4, %374 : vector<16x128xf32>
    %376 = arith.index_cast %arg1 : i32 to index
    %c0_226 = arith.constant 0 : index
    %c0_227 = arith.constant 0 : index
    %377 = vector.load %arg9[%376, %c0_226, %c0_227] : memref<3x1x128xf32, #tpu.memory_space<vmem>>, vector<1x1x128xf32>
    %378 = vector.shape_cast %377 : vector<1x1x128xf32> to vector<1x128xf32>
    %379 = arith.index_cast %arg1 : i32 to index
    %c0_228 = arith.constant 0 : index
    %c0_229 = arith.constant 0 : index
    %380 = vector.load %arg10[%379, %c0_228, %c0_229] : memref<3x1x128xf32, #tpu.memory_space<vmem>>, vector<1x1x128xf32>
    %381 = vector.shape_cast %380 : vector<1x1x128xf32> to vector<1x128xf32>
    %cst_230 = arith.constant dense<0.000000e+00> : vector<16xf32>
    %382 = vector.multi_reduction <add>, %375, %cst_230 [1] : vector<16x128xf32> to vector<16xf32>
    %383 = vector.shape_cast %382 : vector<16xf32> to vector<16x1xf32>
    %cst_231 = arith.constant 1.280000e+02 : f32
    %384 = vector.broadcast %cst_231 : f32 to vector<16x1xf32>
    %385 = arith.divf %383, %384 : vector<16x1xf32>
    %386 = vector.broadcast %385 : vector<16x1xf32> to vector<16x128xf32>
    %387 = arith.subf %375, %386 : vector<16x128xf32>
    %388 = arith.mulf %387, %387 : vector<16x128xf32>
    %cst_232 = arith.constant dense<0.000000e+00> : vector<16xf32>
    %389 = vector.multi_reduction <add>, %388, %cst_232 [1] : vector<16x128xf32> to vector<16xf32>
    %390 = vector.shape_cast %389 : vector<16xf32> to vector<16x1xf32>
    %cst_233 = arith.constant 1.280000e+02 : f32
    %391 = vector.broadcast %cst_233 : f32 to vector<16x1xf32>
    %392 = arith.divf %390, %391 : vector<16x1xf32>
    %393 = vector.broadcast %385 : vector<16x1xf32> to vector<16x128xf32>
    %394 = arith.subf %375, %393 : vector<16x128xf32>
    %cst_234 = arith.constant 9.99999974E-6 : f32
    %395 = vector.broadcast %cst_234 : f32 to vector<16x1xf32>
    %396 = arith.addf %392, %395 : vector<16x1xf32>
    %397 = math.rsqrt %396 : vector<16x1xf32>
    %398 = vector.broadcast %397 : vector<16x1xf32> to vector<16x128xf32>
    %399 = arith.mulf %394, %398 : vector<16x128xf32>
    %400 = vector.broadcast %378 : vector<1x128xf32> to vector<16x128xf32>
    %401 = arith.mulf %399, %400 : vector<16x128xf32>
    %402 = vector.broadcast %381 : vector<1x128xf32> to vector<16x128xf32>
    %403 = arith.addf %401, %402 : vector<16x128xf32>
    %404 = arith.truncf %403 : vector<16x128xf32> to vector<16x128xbf16>
    %405 = arith.index_cast %arg1 : i32 to index
    %c0_235 = arith.constant 0 : index
    %c0_236 = arith.constant 0 : index
    %406 = vector.load %arg11[%405, %c0_235, %c0_236] : memref<3x128x256xbf16, #tpu.memory_space<vmem>>, vector<1x128x256xbf16>
    %407 = vector.shape_cast %406 : vector<1x128x256xbf16> to vector<128x256xbf16>
    %cst_237 = arith.constant dense<0.000000e+00> : vector<16x256xf32>
    %408 = tpu.matmul %404, %407, %cst_237 {dimension_numbers = #tpu.dot_dimension_numbers<[1], [0], [0], [1], [0, 0, 1, 1], [], []>} : vector<16x128xbf16>, vector<128x256xbf16>, vector<16x256xf32> -> vector<16x256xf32>
    %409 = arith.index_cast %arg1 : i32 to index
    %c0_238 = arith.constant 0 : index
    %c0_239 = arith.constant 0 : index
    %410 = vector.load %arg12[%409, %c0_238, %c0_239] : memref<3x1x256xf32, #tpu.memory_space<vmem>>, vector<1x1x256xf32>
    %411 = vector.shape_cast %410 : vector<1x1x256xf32> to vector<1x256xf32>
    %412 = vector.broadcast %411 : vector<1x256xf32> to vector<16x256xf32>
    %413 = arith.addf %408, %412 : vector<16x256xf32>
    %cst_240 = arith.constant 0.000000e+00 : f32
    %414 = vector.broadcast %cst_240 : f32 to vector<16x256xf32>
    %415 = arith.maximumf %413, %414 : vector<16x256xf32>
    %416 = arith.truncf %415 : vector<16x256xf32> to vector<16x256xbf16>
    %417 = arith.index_cast %arg1 : i32 to index
    %c0_241 = arith.constant 0 : index
    %c0_242 = arith.constant 0 : index
    %418 = vector.load %arg13[%417, %c0_241, %c0_242] : memref<3x256x128xbf16, #tpu.memory_space<vmem>>, vector<1x256x128xbf16>
    %419 = vector.shape_cast %418 : vector<1x256x128xbf16> to vector<256x128xbf16>
    %cst_243 = arith.constant dense<0.000000e+00> : vector<16x128xf32>
    %420 = tpu.matmul %416, %419, %cst_243 {dimension_numbers = #tpu.dot_dimension_numbers<[1], [0], [0], [1], [0, 0, 1, 1], [], []>} : vector<16x256xbf16>, vector<256x128xbf16>, vector<16x128xf32> -> vector<16x128xf32>
    %421 = arith.index_cast %arg1 : i32 to index
    %c0_244 = arith.constant 0 : index
    %c0_245 = arith.constant 0 : index
    %422 = vector.load %arg14[%421, %c0_244, %c0_245] : memref<3x1x128xf32, #tpu.memory_space<vmem>>, vector<1x1x128xf32>
    %423 = vector.shape_cast %422 : vector<1x1x128xf32> to vector<1x128xf32>
    %424 = vector.broadcast %423 : vector<1x128xf32> to vector<16x128xf32>
    %425 = arith.addf %420, %424 : vector<16x128xf32>
    %426 = arith.addf %403, %425 : vector<16x128xf32>
    %427 = arith.index_cast %arg1 : i32 to index
    %c0_246 = arith.constant 0 : index
    %c0_247 = arith.constant 0 : index
    %428 = vector.load %arg15[%427, %c0_246, %c0_247] : memref<3x1x128xf32, #tpu.memory_space<vmem>>, vector<1x1x128xf32>
    %429 = vector.shape_cast %428 : vector<1x1x128xf32> to vector<1x128xf32>
    %430 = arith.index_cast %arg1 : i32 to index
    %c0_248 = arith.constant 0 : index
    %c0_249 = arith.constant 0 : index
    %431 = vector.load %arg16[%430, %c0_248, %c0_249] : memref<3x1x128xf32, #tpu.memory_space<vmem>>, vector<1x1x128xf32>
    %432 = vector.shape_cast %431 : vector<1x1x128xf32> to vector<1x128xf32>
    %cst_250 = arith.constant dense<0.000000e+00> : vector<16xf32>
    %433 = vector.multi_reduction <add>, %426, %cst_250 [1] : vector<16x128xf32> to vector<16xf32>
    %434 = vector.shape_cast %433 : vector<16xf32> to vector<16x1xf32>
    %cst_251 = arith.constant 1.280000e+02 : f32
    %435 = vector.broadcast %cst_251 : f32 to vector<16x1xf32>
    %436 = arith.divf %434, %435 : vector<16x1xf32>
    %437 = vector.broadcast %436 : vector<16x1xf32> to vector<16x128xf32>
    %438 = arith.subf %426, %437 : vector<16x128xf32>
    %439 = arith.mulf %438, %438 : vector<16x128xf32>
    %cst_252 = arith.constant dense<0.000000e+00> : vector<16xf32>
    %440 = vector.multi_reduction <add>, %439, %cst_252 [1] : vector<16x128xf32> to vector<16xf32>
    %441 = vector.shape_cast %440 : vector<16xf32> to vector<16x1xf32>
    %cst_253 = arith.constant 1.280000e+02 : f32
    %442 = vector.broadcast %cst_253 : f32 to vector<16x1xf32>
    %443 = arith.divf %441, %442 : vector<16x1xf32>
    %444 = vector.broadcast %436 : vector<16x1xf32> to vector<16x128xf32>
    %445 = arith.subf %426, %444 : vector<16x128xf32>
    %cst_254 = arith.constant 9.99999974E-6 : f32
    %446 = vector.broadcast %cst_254 : f32 to vector<16x1xf32>
    %447 = arith.addf %443, %446 : vector<16x1xf32>
    %448 = math.rsqrt %447 : vector<16x1xf32>
    %449 = vector.broadcast %448 : vector<16x1xf32> to vector<16x128xf32>
    %450 = arith.mulf %445, %449 : vector<16x128xf32>
    %451 = vector.broadcast %429 : vector<1x128xf32> to vector<16x128xf32>
    %452 = arith.mulf %450, %451 : vector<16x128xf32>
    %453 = vector.broadcast %432 : vector<1x128xf32> to vector<16x128xf32>
    %454 = arith.addf %452, %453 : vector<16x128xf32>
    %455 = vector.shape_cast %454 : vector<16x128xf32> to vector<1x16x128xf32>
    %c0_255 = arith.constant 0 : index
    %c0_256 = arith.constant 0 : index
    %c0_257 = arith.constant 0 : index
    %456 = vector.load %arg18[%c0_255, %c0_256, %c0_257] : memref<1x16x128xf32, #tpu.memory_space<vmem>>, vector<1x16x128xf32>
    tpu.vector_store %arg18[%c0_255, %c0_256, %c0_257], %455 {strides = array<i32>} : memref<1x16x128xf32, #tpu.memory_space<vmem>>, vector<1x16x128xf32>,
    %c2_i32_258 = arith.constant 2 : i32
    %457 = arith.cmpi eq, %arg1, %c2_i32_258 : i32
    %458 = arith.extui %457 : i1 to i32
    %c0_i32_259 = arith.constant 0 : i32
    %459 = arith.cmpi ne, %458, %c0_i32_259 : i32
    scf.if %459 {
      %cst_260 = arith.constant dense<0.000000e+00> : vector<128xf32>
      %460 = vector.multi_reduction <add>, %454, %cst_260 [0] : vector<16x128xf32> to vector<128xf32>
      %461 = vector.shape_cast %460 : vector<128xf32> to vector<1x128xf32>
      %cst_261 = arith.constant 6.250000e-02 : f32
      %462 = vector.broadcast %cst_261 : f32 to vector<1x128xf32>
      %463 = arith.mulf %461, %462 : vector<1x128xf32>
      %c0_262 = arith.constant 0 : index
      %c0_263 = arith.constant 0 : index
      %c0_264 = arith.constant 0 : index
      %464 = vector.load %arg17[%c0_262, %c0_263, %c0_264] : memref<1x1x128xf32, #tpu.memory_space<vmem>>, vector<1x1x128xf32>
      %465 = vector.shape_cast %464 : vector<1x1x128xf32> to vector<1x128xf32>
      %466 = vector.shape_cast %463 : vector<1x128xf32> to vector<1x1x128xf32>
      tpu.vector_store %arg17[%c0_262, %c0_263, %c0_264], %466 {strides = array<i32>} : memref<1x1x128xf32, #tpu.memory_space<vmem>>, vector<1x1x128xf32>,
    } else {
    }
    return
  }
  func.func @transform_0(%arg0: i32, %arg1: i32) -> (i32, i32, i32) {
    %c0_i32 = arith.constant 0 : i32
    %c0_i32_0 = arith.constant 0 : i32
    %c0_i32_1 = arith.constant 0 : i32
    return %arg0, %c0_i32, %c0_i32_0 : i32, i32, i32
  }
  func.func @transform_1(%arg0: i32, %arg1: i32) -> (i32, i32, i32) {
    %c0_i32 = arith.constant 0 : i32
    %c0_i32_0 = arith.constant 0 : i32
    %c0_i32_1 = arith.constant 0 : i32
    return %arg0, %c0_i32, %c0_i32_0 : i32, i32, i32
  }
  func.func @transform_2(%arg0: i32, %arg1: i32) -> i32 {
    %c0_i32 = arith.constant 0 : i32
    %c0_i32_0 = arith.constant 0 : i32
    return %c0_i32 : i32
  }
  func.func @transform_3(%arg0: i32, %arg1: i32) -> (i32, i32, i32) {
    %c0_i32 = arith.constant 0 : i32
    %c0_i32_0 = arith.constant 0 : i32
    %c0_i32_1 = arith.constant 0 : i32
    %c0_i32_2 = arith.constant 0 : i32
    return %c0_i32, %c0_i32_0, %c0_i32_1 : i32, i32, i32
  }
  func.func @transform_4(%arg0: i32, %arg1: i32) -> (i32, i32, i32) {
    %c0_i32 = arith.constant 0 : i32
    %c0_i32_0 = arith.constant 0 : i32
    %c0_i32_1 = arith.constant 0 : i32
    %c0_i32_2 = arith.constant 0 : i32
    return %c0_i32, %c0_i32_0, %c0_i32_1 : i32, i32, i32
  }
  func.func @transform_5(%arg0: i32, %arg1: i32) -> (i32, i32, i32) {
    %c0_i32 = arith.constant 0 : i32
    %c0_i32_0 = arith.constant 0 : i32
    %c0_i32_1 = arith.constant 0 : i32
    %c0_i32_2 = arith.constant 0 : i32
    return %c0_i32, %c0_i32_0, %c0_i32_1 : i32, i32, i32
  }
  func.func @transform_6(%arg0: i32, %arg1: i32) -> (i32, i32, i32) {
    %c0_i32 = arith.constant 0 : i32
    %c0_i32_0 = arith.constant 0 : i32
    %c0_i32_1 = arith.constant 0 : i32
    %c0_i32_2 = arith.constant 0 : i32
    return %c0_i32, %c0_i32_0, %c0_i32_1 : i32, i32, i32
  }
  func.func @transform_7(%arg0: i32, %arg1: i32) -> (i32, i32, i32) {
    %c0_i32 = arith.constant 0 : i32
    %c0_i32_0 = arith.constant 0 : i32
    %c0_i32_1 = arith.constant 0 : i32
    %c0_i32_2 = arith.constant 0 : i32
    return %c0_i32, %c0_i32_0, %c0_i32_1 : i32, i32, i32
  }
  func.func @transform_8(%arg0: i32, %arg1: i32) -> (i32, i32, i32) {
    %c0_i32 = arith.constant 0 : i32
    %c0_i32_0 = arith.constant 0 : i32
    %c0_i32_1 = arith.constant 0 : i32
    %c0_i32_2 = arith.constant 0 : i32
    return %c0_i32, %c0_i32_0, %c0_i32_1 : i32, i32, i32
  }
  func.func @transform_9(%arg0: i32, %arg1: i32) -> (i32, i32, i32) {
    %c0_i32 = arith.constant 0 : i32
    %c0_i32_0 = arith.constant 0 : i32
    %c0_i32_1 = arith.constant 0 : i32
    %c0_i32_2 = arith.constant 0 : i32
    return %c0_i32, %c0_i32_0, %c0_i32_1 : i32, i32, i32
  }
  func.func @transform_10(%arg0: i32, %arg1: i32) -> (i32, i32, i32) {
    %c0_i32 = arith.constant 0 : i32
    %c0_i32_0 = arith.constant 0 : i32
    %c0_i32_1 = arith.constant 0 : i32
    %c0_i32_2 = arith.constant 0 : i32
    return %c0_i32, %c0_i32_0, %c0_i32_1 : i32, i32, i32
  }
  func.func @transform_11(%arg0: i32, %arg1: i32) -> (i32, i32, i32) {
    %c0_i32 = arith.constant 0 : i32
    %c0_i32_0 = arith.constant 0 : i32
    %c0_i32_1 = arith.constant 0 : i32
    %c0_i32_2 = arith.constant 0 : i32
    return %c0_i32, %c0_i32_0, %c0_i32_1 : i32, i32, i32
  }
  func.func @transform_12(%arg0: i32, %arg1: i32) -> (i32, i32, i32) {
    %c0_i32 = arith.constant 0 : i32
    %c0_i32_0 = arith.constant 0 : i32
    %c0_i32_1 = arith.constant 0 : i32
    %c0_i32_2 = arith.constant 0 : i32
    return %c0_i32, %c0_i32_0, %c0_i32_1 : i32, i32, i32
  }
  func.func @transform_13(%arg0: i32, %arg1: i32) -> (i32, i32, i32) {
    %c0_i32 = arith.constant 0 : i32
    %c0_i32_0 = arith.constant 0 : i32
    %c0_i32_1 = arith.constant 0 : i32
    %c0_i32_2 = arith.constant 0 : i32
    return %c0_i32, %c0_i32_0, %c0_i32_1 : i32, i32, i32
  }
  func.func @transform_14(%arg0: i32, %arg1: i32) -> (i32, i32, i32) {
    %c0_i32 = arith.constant 0 : i32
    %c0_i32_0 = arith.constant 0 : i32
    %c0_i32_1 = arith.constant 0 : i32
    %c0_i32_2 = arith.constant 0 : i32
    return %c0_i32, %c0_i32_0, %c0_i32_1 : i32, i32, i32
  }
  func.func @transform_15(%arg0: i32, %arg1: i32) -> (i32, i32, i32) {
    %c0_i32 = arith.constant 0 : i32
    %c0_i32_0 = arith.constant 0 : i32
    %c0_i32_1 = arith.constant 0 : i32
    return %arg0, %c0_i32, %c0_i32_0 : i32, i32, i32
  }
}

</mosaic_0001>

<llo_original>
// kernel: sa_edge_transformer_forward.3
$region0: #{sa_edge_transformer_forward.3}
  #allocation0 [shape = 'u32[]', space=smem, size = 0x4, offset = 0x4, fixed_abs, tag = 'smem constant byte address 0x4 - core index']
  #allocation1 [shape = 'u32[144,128]{1,0:T(1,128)}', space=vmem, size = 0x12000, scoped, tag = 'internal scratch']
  %s0 = inlined_call_operand.vmem [shape: f32[32,32], index: 0, kind: input, shape index: {}]
  %s1 = inlined_call_operand.vmem [shape: bf16[32,128], index: 1, kind: input, shape index: {}]
  %s2 = inlined_call_operand.vmem [shape: f32[1,128], index: 2, kind: input, shape index: {}]
  %s3 = inlined_call_operand.vmem [shape: f32[32,128], index: 3, kind: output, shape index: {}]
  %s4 = sld [smem:[#allocation0]]
  $region22: #{sa_edge_transformer_forward.3} parent=0
    _
  %s6 = ssub.s32 1, %s4
  %s7 = scalar_select 0, %s6, %s4
  // Predicated region
  $region2: #{sa_edge_transformer_forward.3} parent=0 // pred_check
    _
  $region3: #{sa_edge_transformer_forward.3} parent=0 // pred_check_branch
    %9 = sbr.rel (0) target = $region5
  $region4: #{sa_edge_transformer_forward.3} parent=0 // pred_region
    _
  $region5: #{sa_edge_transformer_forward.3} parent=0 // pred_fallthru
    _
  // Predicated region
  $region6: #{sa_edge_transformer_forward.3} parent=0 // pred_check
    _
  $region7: #{sa_edge_transformer_forward.3} parent=0 // pred_check_branch
    %11 = sbr.rel (0) target = $region9
  $region8: #{sa_edge_transformer_forward.3} parent=0 // pred_region
    _
  $region9: #{sa_edge_transformer_forward.3} parent=0 // pred_fallthru
    _
  // Predicated region
  $region10: #{sa_edge_transformer_forward.3} parent=0 // pred_check
    _
  $region11: #{sa_edge_transformer_forward.3} parent=0 // pred_check_branch
    %13 = sbr.rel (0) target = $region13
  $region12: #{sa_edge_transformer_forward.3} parent=0 // pred_region
    _
  $region13: #{sa_edge_transformer_forward.3} parent=0 // pred_fallthru
    _
  %v15 = vld [vmem:[%s0] sm:$0xff]
  %v16 = vld [vmem:[%s0 + $0x8] sm:$0xff]
  %v17 = vld [vmem:[%s0 + $0x10] sm:$0xff]
  %v18 = vld [vmem:[%s0 + $0x18] sm:$0xff]
  %v19 = vpack.c.bf16 %v16, %v15
  %v20 = vpack.c.bf16 %v18, %v17
  %v21 = vld [vmem:[%s1] sm:$0xf]
  %v22 = vld [vmem:[%s1 + $0x4] sm:$0xf]
  %v23 = vld [vmem:[%s1 + $0x8] sm:$0xf]
  %v24 = vld [vmem:[%s1 + $0xc] sm:$0xf]
  %v25 = vld [vmem:[%s2] sm:$0x1]
  %v27 = vlaneseq
  %v28 = vshrl.u32 %v27, 7
  %v29 = vsub.s32 0, %v28
  %v30 = vrot.slane %v25, %v29
  %v36 = vunpack.c.l.b16 %v21
  %v37 = vunpack.c.l.b16 %v22
  %v38 = vunpack.c.l.b16 %v23
  %v39 = vunpack.c.l.b16 %v24
  %v40 = vpack.c.b16 %v37, %v36
  %v41 = vpack.c.b16 %v39, %v38
  %vm44 = vcmask 261120
  %v46 = vsel %vm44, %v19, 0
  %v49 = vsel %vm44, %v20, 0
  %51 = vmatprep.subr.bf16.mxu0 0
  %52 = vmatpush1.bf16.msra.mxu0 %v40
  %53 = vmatprep.subr.bf16.mxu0 0
  %54 = vmatpush1.bf16.msra.mxu0 %v41
  %55 = vmatprep.subr.bf16.mxu0 0
  %56 = vmatpush1.bf16.msra.mxu0 0
  %57 = vmatprep.subr.bf16.mxu0 0
  %58 = vmatpush1.bf16.msra.mxu0 0
  %59 = vmatprep.subr.bf16.mxu0 0
  %60 = vmatpush1.bf16.msra.mxu0 0
  %61 = vmatprep.subr.bf16.mxu0 0
  %62 = vmatpush1.bf16.msra.mxu0 0
  %63 = vmatprep.subr.bf16.mxu0 0
  %64 = vmatpush1.bf16.msra.mxu0 0
  %65 = vmatprep.subr.bf16.mxu0 0
  %66 = vmatpush1.bf16.msra.mxu0 0
  %67 = vmatprep.subr.bf16.mxu0 0
  %68 = vmatpush1.bf16.msra.mxu0 0
  %69 = vmatprep.subr.bf16.mxu0 0
  %70 = vmatpush1.bf16.msra.mxu0 0
  %71 = vmatprep.subr.bf16.mxu0 0
  %72 = vmatpush1.bf16.msra.mxu0 0
  %73 = vmatprep.subr.bf16.mxu0 0
  %74 = vmatpush1.bf16.msra.mxu0 0
  %75 = vmatprep.subr.bf16.mxu0 0
  %76 = vmatpush1.bf16.msra.mxu0 0
  %77 = vmatprep.subr.bf16.mxu0 0
  %78 = vmatpush1.bf16.msra.mxu0 0
  %79 = vmatprep.subr.bf16.mxu0 0
  %80 = vmatpush1.bf16.msra.mxu0 0
  %81 = vmatprep.subr.bf16.mxu0 0
  %82 = vmatpush1.bf16.msra.mxu0 0
  %83 = vmatprep.mubr.bf16.mxu0 0
  %84 = vmatmul.mubr.bf16.gmra.mrb[0].mxu0 %v46
  %v85 = vpop.f32.mrb[0].mxu0
  %v86 = vadd.f32 %v30, %v85
  %v87 = vpop.f32.mrb[0].mxu0
  %v88 = vpop.f32.mrb[0].mxu0
  %v89 = vadd.f32 %v30, %v88
  %v90 = vpop.f32.mrb[0].mxu0
  %91 = vmatprep.mubr.bf16.mxu0 0
  %92 = vmatmul.mubr.bf16.gmra.mrb[0].mxu0 %v49
  %v93 = vpop.f32.mrb[0].mxu0
  %v94 = vadd.f32 %v30, %v93
  %v95 = vpop.f32.mrb[0].mxu0
  %v96 = vpop.f32.mrb[0].mxu0
  %v97 = vadd.f32 %v30, %v96
  %v98 = vpop.f32.mrb[0].mxu0
  %99 = vdwg.mxu0
  %100 = vst [vmem:[%s3] sm:$0xff] %v86
  %101 = vst [vmem:[%s3 + $0x8] sm:$0xff] %v89
  %102 = vst [vmem:[%s3 + $0x10] sm:$0xff] %v94
  %103 = vst [vmem:[%s3 + $0x18] sm:$0xff] %v97
  // Predicated region
  $region14: #{sa_edge_transformer_forward.3} parent=0 // pred_check
    _
  $region15: #{sa_edge_transformer_forward.3} parent=0 // pred_check_branch
    %105 = sbr.rel (0) target = $region17
  $region16: #{sa_edge_transformer_forward.3} parent=0 // pred_region
    _
  $region17: #{sa_edge_transformer_forward.3} parent=0 // pred_fallthru
    _
  // Predicated region
  $region18: #{sa_edge_transformer_forward.3} parent=0 // pred_check
    _
  $region19: #{sa_edge_transformer_forward.3} parent=0 // pred_check_branch
    %107 = sbr.rel (0) target = $region21
  $region20: #{sa_edge_transformer_forward.3} parent=0 // pred_region
    _
  $region21: #{sa_edge_transformer_forward.3} parent=0 // pred_fallthru
    _

// kernel: sa_edge_transformer_forward.5
$region0: #{sa_edge_transformer_forward.5}
  #allocation0 [shape = 'u32[]', space=smem, size = 0x4, offset = 0x4, fixed_abs, tag = 'smem constant byte address 0x4 - core index']
  #allocation1 [shape = 'u32[144,128]{1,0:T(1,128)}', space=vmem, size = 0x12000, scoped, tag = 'internal scratch']
  %s0 = inlined_call_operand.vmem [shape: f32[2,128], index: 0, kind: input, shape index: {}]
  %s1 = inlined_call_operand.vmem [shape: bf16[128,4], index: 1, kind: input, shape index: {}]
  %s2 = inlined_call_operand.vmem [shape: f32[1,4], index: 2, kind: input, shape index: {}]
  %s3 = inlined_call_operand.hbm [shape: f32[2,4], index: 3, kind: output, shape index: {}]
  %s4 = sld [smem:[#allocation0]]
  $region22: #{sa_edge_transformer_forward.5} parent=0
    _
  %s6 = ssub.s32 1, %s4
  %s7 = scalar_select 0, %s6, %s4
  $region1: #{sa_edge_transformer_forward.5} parent=0
    #allocation2 [shape = 'u8[1024]{0}', space=vmem, size = 0x400, scoped, tag = 'output window, operand 0, single buffered']
    #allocation3 [shape = 's32[1]{0}', space=sflag, size = 0x4, scoped, tag = 'scoped memory for sa_edge_transformer_forward.5']
    %8 = vsyncpa [#allocation3], 0
    // Predicated region
    $region2: #{sa_edge_transformer_forward.5} parent=1 // pred_check
      _
    $region3: #{sa_edge_transformer_forward.5} parent=1 // pred_check_branch
      %10 = sbr.rel (0) target = $region5
    $region4: #{sa_edge_transformer_forward.5} parent=1 // pred_region
      _
    $region5: #{sa_edge_transformer_forward.5} parent=1 // pred_fallthru
      _
    // Predicated region
    $region6: #{sa_edge_transformer_forward.5} parent=1 // pred_check
      _
    $region7: #{sa_edge_transformer_forward.5} parent=1 // pred_check_branch
      %12 = sbr.rel (0) target = $region9
    $region8: #{sa_edge_transformer_forward.5} parent=1 // pred_region
      _
    $region9: #{sa_edge_transformer_forward.5} parent=1 // pred_fallthru
      _
    // Predicated region
    $region10: #{sa_edge_transformer_forward.5} parent=1 // pred_check
      _
    $region11: #{sa_edge_transformer_forward.5} parent=1 // pred_check_branch
      %14 = sbr.rel (0) target = $region13
    $region12: #{sa_edge_transformer_forward.5} parent=1 // pred_region
      _
    $region13: #{sa_edge_transformer_forward.5} parent=1 // pred_fallthru
      _
    %v16 = vld [vmem:[%s0] sm:$0x3]
    %v17 = vpack.c.bf16 %v16, %v16
    %v18 = vld [vmem:[%s1] sm:$0xf]
    %v19 = vld [vmem:[%s1 + $0x4] sm:$0xf]
    %v20 = vld [vmem:[%s1 + $0x8] sm:$0xf]
    %v21 = vld [vmem:[%s1 + $0xc] sm:$0xf]
    %v22 = vld [vmem:[%s1 + $0x10] sm:$0xf]
    %v23 = vld [vmem:[%s1 + $0x14] sm:$0xf]
    %v24 = vld [vmem:[%s1 + $0x18] sm:$0xf]
    %v25 = vld [vmem:[%s1 + $0x1c] sm:$0xf]
    %v26 = vld [vmem:[%s1 + $0x20] sm:$0xf]
    %v27 = vld [vmem:[%s1 + $0x24] sm:$0xf]
    %v28 = vld [vmem:[%s1 + $0x28] sm:$0xf]
    %v29 = vld [vmem:[%s1 + $0x2c] sm:$0xf]
    %v30 = vld [vmem:[%s1 + $0x30] sm:$0xf]
    %v31 = vld [vmem:[%s1 + $0x34] sm:$0xf]
    %v32 = vld [vmem:[%s1 + $0x38] sm:$0xf]
    %v33 = vld [vmem:[%s1 + $0x3c] sm:$0xf]
    %v34 = vld [vmem:[%s2] sm:$0x1]
    %v36 = vlaneseq
    %v37 = vshrl.u32 %v36, 7
    %v38 = vsub.s32 0, %v37
    %v39 = vrot.slane %v34, %v38
    %v57 = vunpack.c.l.b16 %v18
    %v58 = vunpack.c.l.b16 %v19
    %v59 = vunpack.c.l.b16 %v20
    %v60 = vunpack.c.l.b16 %v21
    %v61 = vunpack.c.l.b16 %v22
    %v62 = vunpack.c.l.b16 %v23
    %v63 = vunpack.c.l.b16 %v24
    %v64 = vunpack.c.l.b16 %v25
    %v65 = vunpack.c.l.b16 %v26
    %v66 = vunpack.c.l.b16 %v27
    %v67 = vunpack.c.l.b16 %v28
    %v68 = vunpack.c.l.b16 %v29
    %v69 = vunpack.c.l.b16 %v30
    %v70 = vunpack.c.l.b16 %v31
    %v71 = vunpack.c.l.b16 %v32
    %v72 = vunpack.c.l.b16 %v33
    %v73 = vpack.c.b16 %v58, %v57
    %v74 = vpack.c.b16 %v60, %v59
    %v75 = vpack.c.b16 %v62, %v61
    %v76 = vpack.c.b16 %v64, %v63
    %v77 = vpack.c.b16 %v66, %v65
    %v78 = vpack.c.b16 %v68, %v67
    %v79 = vpack.c.b16 %v70, %v69
    %v80 = vpack.c.b16 %v72, %v71
    %89 = vmatprep.subr.bf16.mxu0 0
    %90 = vmatpush1.bf16.msra.mxu0 %v73
    %91 = vmatprep.subr.bf16.mxu0 0
    %92 = vmatpush1.bf16.msra.mxu0 %v74
    %93 = vmatprep.subr.bf16.mxu0 0
    %94 = vmatpush1.bf16.msra.mxu0 %v75
    %95 = vmatprep.subr.bf16.mxu0 0
    %96 = vmatpush1.bf16.msra.mxu0 %v76
    %97 = vmatprep.subr.bf16.mxu0 0
    %98 = vmatpush1.bf16.msra.mxu0 %v77
    %99 = vmatprep.subr.bf16.mxu0 0
    %100 = vmatpush1.bf16.msra.mxu0 %v78
    %101 = vmatprep.subr.bf16.mxu0 0
    %102 = vmatpush1.bf16.msra.mxu0 %v79
    %103 = vmatprep.subr.bf16.mxu0 0
    %104 = vmatpush1.bf16.msra.mxu0 %v80
    %105 = vmatprep.subr.bf16.mxu0 0
    %106 = vmatpush1.bf16.msra.mxu0 0
    %107 = vmatprep.subr.bf16.mxu0 0
    %108 = vmatpush1.bf16.msra.mxu0 0
    %109 = vmatprep.subr.bf16.mxu0 0
    %110 = vmatpush1.bf16.msra.mxu0 0
    %111 = vmatprep.subr.bf16.mxu0 0
    %112 = vmatpush1.bf16.msra.mxu0 0
    %113 = vmatprep.subr.bf16.mxu0 0
    %114 = vmatpush1.bf16.msra.mxu0 0
    %115 = vmatprep.subr.bf16.mxu0 0
    %116 = vmatpush1.bf16.msra.mxu0 0
    %117 = vmatprep.subr.bf16.mxu0 0
    %118 = vmatpush1.bf16.msra.mxu0 0
    %119 = vmatprep.subr.bf16.mxu0 0
    %120 = vmatpush1.bf16.msra.mxu0 0
    %121 = vmatprep.mubr.bf16.mxu0 0
    %122 = vmatmul.mubr.bf16.gmra.mrb[0].mxu0 %v17
    %v123 = vpop.f32.mrb[0].mxu0
    %v124 = vadd.f32 %v39, %v123
    %v125 = vpop.f32.mrb[0].mxu0
    %v126 = vpop.f32.mrb[0].mxu0
    %v127 = vpop.f32.mrb[0].mxu0
    %128 = vdwg.mxu0
    %vm129 = vcmask 25600
    %130 = vst.msk [vmem:[#allocation2] sm:$0x3] %vm129, %v124
    // Predicated region
    $region14: #{sa_edge_transformer_forward.5} parent=1 // pred_check
      _
    $region15: #{sa_edge_transformer_forward.5} parent=1 // pred_check_branch
      %132 = sbr.rel (0) target = $region17
    $region16: #{sa_edge_transformer_forward.5} parent=1 // pred_region
      %s134 = ssub.s32 32, 32
      %135 = vsyncadd [#allocation3], %s134
      %s137 = sshll.u32 [#allocation2], 4
      %s138 = int_to_ptr.vmem [resolvable:$true] %s137
      %140 = dma.vmem_to_hbm [thread:$0]  %s138, 32, %s3, [#allocation3]
    $region17: #{sa_edge_transformer_forward.5} parent=1 // pred_fallthru
      _
    // Predicated region
    $region18: #{sa_edge_transformer_forward.5} parent=1 // pred_check
      _
    $region19: #{sa_edge_transformer_forward.5} parent=1 // pred_check_branch
      %142 = sbr.rel (0) target = $region21
    $region20: #{sa_edge_transformer_forward.5} parent=1 // pred_region
      %143 = dma.done [#allocation3], 32
    $region21: #{sa_edge_transformer_forward.5} parent=1 // pred_fallthru
      _
    %144 = vsyncpa [#allocation3], 1

// kernel: sa_edge_transformer_forward.4
$region0: #{sa_edge_transformer_forward.4}
  #allocation0 [shape = 'u32[]', space=smem, size = 0x4, offset = 0x4, fixed_abs, tag = 'smem constant byte address 0x4 - core index']
  #allocation1 [shape = 'u32[144,128]{1,0:T(1,128)}', space=vmem, size = 0x12000, scoped, tag = 'internal scratch']
  #allocation2 [shape = 'f32[1,16,128]{2,1,0:T(8,128)}', space=vmem, size = 0x2000, scoped, tag = 'scratch operand']
  #allocation3 [shape = 'f32[5,1,16,16]{3,2,1,0:T(8,128)}', space=vmem, size = 0xa000, scoped, tag = 'scratch operand']
  %s0 = inlined_call_operand.vmem [shape: f32[2,16,128], index: 0, kind: input, shape index: {}]
  %s1 = inlined_call_operand.vmem [shape: s32[2,16,16], index: 1, kind: input, shape index: {}]
  %s2 = inlined_call_operand.vmem [shape: f32[60], index: 2, kind: input, shape index: {}]
  %s3 = inlined_call_operand.vmem [shape: bf16[12,128,32], index: 3, kind: input, shape index: {}]
  %s4 = inlined_call_operand.vmem [shape: bf16[12,128,32], index: 4, kind: input, shape index: {}]
  %s5 = inlined_call_operand.vmem [shape: bf16[12,128,32], index: 5, kind: input, shape index: {}]
  %s6 = inlined_call_operand.vmem [shape: bf16[12,32,128], index: 6, kind: input, shape index: {}]
  %s7 = inlined_call_operand.vmem [shape: f32[3,1,128], index: 7, kind: input, shape index: {}]
  %s8 = inlined_call_operand.vmem [shape: f32[3,1,128], index: 8, kind: input, shape index: {}]
  %s9 = inlined_call_operand.vmem [shape: bf16[3,128,256], index: 9, kind: input, shape index: {}]
  %s10 = inlined_call_operand.vmem [shape: f32[3,1,256], index: 10, kind: input, shape index: {}]
  %s11 = inlined_call_operand.vmem [shape: bf16[3,256,128], index: 11, kind: input, shape index: {}]
  %s12 = inlined_call_operand.vmem [shape: f32[3,1,128], index: 12, kind: input, shape index: {}]
  %s13 = inlined_call_operand.vmem [shape: f32[3,1,128], index: 13, kind: input, shape index: {}]
  %s14 = inlined_call_operand.vmem [shape: f32[3,1,128], index: 14, kind: input, shape index: {}]
  %s15 = inlined_call_operand.vmem [shape: f32[2,1,128], index: 15, kind: output, shape index: {}]
  %s16 = sld [smem:[#allocation0]]
  $region105: #{sa_edge_transformer_forward.4} parent=0
    _
  %s18 = ssub.s32 1, %s16
  %s19 = scalar_select 0, %s18, %s16
  $region1: #{sa_edge_transformer_forward.4} parent=0
    #allocation4 [shape = 'u8[512]{0}', space=smem, size = 0x200, scoped, tag = 'input window, operand 2, single buffered']
    #allocation5 [shape = 's32[2]{0}', space=sflag, size = 0x8, scoped, tag = 'scoped memory for sa_edge_transformer_forward.4']
    %20 = vsyncpa [#allocation5], 0
    loop: start=0, step=1, limit=8
    $region2: #{sa_edge_transformer_forward.4} parent=1 // loop_pre_header
      _
    $region3: #{sa_edge_transformer_forward.4} parent=1 // loop_header
      %s22 = sphi 0, %s26
      %p23 = scmp.ge.s32.totalorder %s22, 8
      %s29 = sphi 0, %s41
      %s30 = sphi 0, %s37
      %s31 = sphi 0, %s29
      %s32 = sphi 0, %s30
      %s33 = sphi 0, %s31
      %s34 = sphi 0, %s32
      %s44 = sphi 0, %s46
      %s47 = sphi 0, %s44
      %s48 = sphi 0, %s47
      %s64 = sphi 0, %s48
      %s70 = sphi 0, %s72
      %s73 = sphi 0, %s70
      %s74 = sphi 0, %s73
      %s90 = sphi 0, %s74
      %s94 = sphi 0, %s94
      %s96 = sphi 0, %s94
      %s97 = sphi 0, %s96
      %s111 = sphi 0, %s97
      %s115 = sphi 0, %s115
      %s117 = sphi 0, %s115
      %s118 = sphi 0, %s117
      %s132 = sphi 0, %s118
      %s136 = sphi 0, %s136
      %s138 = sphi 0, %s136
      %s139 = sphi 0, %s138
      %s153 = sphi 0, %s139
      %s157 = sphi 0, %s157
      %s159 = sphi 0, %s157
      %s160 = sphi 0, %s159
      %s174 = sphi 0, %s160
      %s178 = sphi 0, %s178
      %s180 = sphi 0, %s178
      %s181 = sphi 0, %s180
      %s195 = sphi 0, %s181
      %s199 = sphi 0, %s199
      %s201 = sphi 0, %s199
      %s202 = sphi 0, %s201
      %s216 = sphi 0, %s202
      %s220 = sphi 0, %s220
      %s222 = sphi 0, %s220
      %s223 = sphi 0, %s222
      %s237 = sphi 0, %s223
      %s241 = sphi 0, %s241
      %s243 = sphi 0, %s241
      %s244 = sphi 0, %s243
      %s258 = sphi 0, %s244
      %s262 = sphi 0, %s262
      %s264 = sphi 0, %s262
      %s265 = sphi 0, %s264
      %s279 = sphi 0, %s265
      %s283 = sphi 0, %s283
      %s285 = sphi 0, %s283
      %s286 = sphi 0, %s285
      %s300 = sphi 0, %s286
      %s304 = sphi 0, %s304
      %s306 = sphi 0, %s304
      %s307 = sphi 0, %s306
      %s321 = sphi 0, %s307
      %s325 = sphi 0, %s325
      %s327 = sphi 0, %s325
      %s328 = sphi 0, %s327
      %s342 = sphi 0, %s328
      %s346 = sphi 0, %s346
      %s348 = sphi 0, %s346
      %s349 = sphi 0, %s348
      %s363 = sphi 0, %s349
      %s369 = sphi 0, %s371
      %s372 = sphi 0, %s369
      %s373 = sphi 0, %s372
      %s389 = sphi 0, %s373
    $region4: #{sa_edge_transformer_forward.4} parent=1 // loop_header_branch
      %25 = sbr.rel (%p23) target = $region8
    $region5: #{sa_edge_transformer_forward.4} parent=1 // loop_body
      %s27 = ssub.s32 %s22, 1
      %s28 = ssub.s32 %s22, 2
      %s35 = sadd.s32 1, %s30
      %p36 = scmp.ge.s32.totalorder %s35, 3
      %s37 = scalar_select %p36, 0, %s35
      %s38 = sadd.s32 1, %s29
      %s39 = scalar_select %p36, %s38, %s29
      %p40 = scmp.ge.s32.totalorder %s39, 2
      %s41 = scalar_select %p40, 0, %s39
      %s42 = ssub.s32 %s29, %s41
      %p43 = scmp.eq.s32.totalorder %s42, 0
      %s45 = sadd.s32 %s44, 1
      %s46 = scalar_select %p43, %s44, %s45
      %p49 = pneg %p43
      %p50 = scmp.eq.s32.totalorder %s22, 5
      %p51 = por %p49, %p50
      %p52 = scmp.ne.s32.totalorder %s44, %s47
      %p53 = scmp.eq.s32.totalorder %s22, 0
      %p54 = por %p52, %p53
      %p55 = scmp.ne.s32.totalorder %s44, %s47
      %p56 = scmp.eq.s32.totalorder %s27, 5
      %p57 = por %p55, %p56
      %p58 = scmp.ne.s32.totalorder %s47, %s48
      %p59 = scmp.eq.s32.totalorder %s27, 0
      %p60 = por %p58, %p59
      %p61 = scmp.ne.s32.totalorder %s47, %s48
      %p62 = scmp.eq.s32.totalorder %s28, 5
      %p63 = por %p61, %p62
      %p65 = scmp.ne.s32.totalorder %s48, %s64
      %p66 = scmp.eq.s32.totalorder %s28, 0
      %p67 = por %p65, %p66
      %s68 = ssub.s32 %s29, %s41
      %p69 = scmp.eq.s32.totalorder %s68, 0
      %s71 = sadd.s32 %s70, 1
      %s72 = scalar_select %p69, %s70, %s71
      %p75 = pneg %p69
      %p76 = scmp.eq.s32.totalorder %s22, 5
      %p77 = por %p75, %p76
      %p78 = scmp.ne.s32.totalorder %s70, %s73
      %p79 = scmp.eq.s32.totalorder %s22, 0
      %p80 = por %p78, %p79
      %p81 = scmp.ne.s32.totalorder %s70, %s73
      %p82 = scmp.eq.s32.totalorder %s27, 5
      %p83 = por %p81, %p82
      %p84 = scmp.ne.s32.totalorder %s73, %s74
      %p85 = scmp.eq.s32.totalorder %s27, 0
      %p86 = por %p84, %p85
      %p87 = scmp.ne.s32.totalorder %s73, %s74
      %p88 = scmp.eq.s32.totalorder %s28, 5
      %p89 = por %p87, %p88
      %p91 = scmp.ne.s32.totalorder %s74, %s90
      %p92 = scmp.eq.s32.totalorder %s28, 0
      %p93 = por %p91, %p92
      %s95 = sadd.s32 %s94, 1
      %p98 = scmp.eq.s32.totalorder %s22, 5
      %p99 = scmp.ne.s32.totalorder %s94, %s96
      %p100 = scmp.eq.s32.totalorder %s22, 0
      %p101 = por %p99, %p100
      %p102 = scmp.ne.s32.totalorder %s94, %s96
      %p103 = scmp.eq.s32.totalorder %s27, 5
      %p104 = por %p102, %p103
      %p105 = scmp.ne.s32.totalorder %s96, %s97
      %p106 = scmp.eq.s32.totalorder %s27, 0
      %p107 = por %p105, %p106
      %p108 = scmp.ne.s32.totalorder %s96, %s97
      %p109 = scmp.eq.s32.totalorder %s28, 5
      %p110 = por %p108, %p109
      %p112 = scmp.ne.s32.totalorder %s97, %s111
      %p113 = scmp.eq.s32.totalorder %s28, 0
      %p114 = por %p112, %p113
      %s116 = sadd.s32 %s115, 1
      %p119 = scmp.eq.s32.totalorder %s22, 5
      %p120 = scmp.ne.s32.totalorder %s115, %s117
      %p121 = scmp.eq.s32.totalorder %s22, 0
      %p122 = por %p120, %p121
      %p123 = scmp.ne.s32.totalorder %s115, %s117
      %p124 = scmp.eq.s32.totalorder %s27, 5
      %p125 = por %p123, %p124
      %p126 = scmp.ne.s32.totalorder %s117, %s118
      %p127 = scmp.eq.s32.totalorder %s27, 0
      %p128 = por %p126, %p127
      %p129 = scmp.ne.s32.totalorder %s117, %s118
      %p130 = scmp.eq.s32.totalorder %s28, 5
      %p131 = por %p129, %p130
      %p133 = scmp.ne.s32.totalorder %s118, %s132
      %p134 = scmp.eq.s32.totalorder %s28, 0
      %p135 = por %p133, %p134
      %s137 = sadd.s32 %s136, 1
      %p140 = scmp.eq.s32.totalorder %s22, 5
      %p141 = scmp.ne.s32.totalorder %s136, %s138
      %p142 = scmp.eq.s32.totalorder %s22, 0
      %p143 = por %p141, %p142
      %p144 = scmp.ne.s32.totalorder %s136, %s138
      %p145 = scmp.eq.s32.totalorder %s27, 5
      %p146 = por %p144, %p145
      %p147 = scmp.ne.s32.totalorder %s138, %s139
      %p148 = scmp.eq.s32.totalorder %s27, 0
      %p149 = por %p147, %p148
      %p150 = scmp.ne.s32.totalorder %s138, %s139
      %p151 = scmp.eq.s32.totalorder %s28, 5
      %p152 = por %p150, %p151
      %p154 = scmp.ne.s32.totalorder %s139, %s153
      %p155 = scmp.eq.s32.totalorder %s28, 0
      %p156 = por %p154, %p155
      %s158 = sadd.s32 %s157, 1
      %p161 = scmp.eq.s32.totalorder %s22, 5
      %p162 = scmp.ne.s32.totalorder %s157, %s159
      %p163 = scmp.eq.s32.totalorder %s22, 0
      %p164 = por %p162, %p163
      %p165 = scmp.ne.s32.totalorder %s157, %s159
      %p166 = scmp.eq.s32.totalorder %s27, 5
      %p167 = por %p165, %p166
      %p168 = scmp.ne.s32.totalorder %s159, %s160
      %p169 = scmp.eq.s32.totalorder %s27, 0
      %p170 = por %p168, %p169
      %p171 = scmp.ne.s32.totalorder %s159, %s160
      %p172 = scmp.eq.s32.totalorder %s28, 5
      %p173 = por %p171, %p172
      %p175 = scmp.ne.s32.totalorder %s160, %s174
      %p176 = scmp.eq.s32.totalorder %s28, 0
      %p177 = por %p175, %p176
      %s179 = sadd.s32 %s178, 1
      %p182 = scmp.eq.s32.totalorder %s22, 5
      %p183 = scmp.ne.s32.totalorder %s178, %s180
      %p184 = scmp.eq.s32.totalorder %s22, 0
      %p185 = por %p183, %p184
      %p186 = scmp.ne.s32.totalorder %s178, %s180
      %p187 = scmp.eq.s32.totalorder %s27, 5
      %p188 = por %p186, %p187
      %p189 = scmp.ne.s32.totalorder %s180, %s181
      %p190 = scmp.eq.s32.totalorder %s27, 0
      %p191 = por %p189, %p190
      %p192 = scmp.ne.s32.totalorder %s180, %s181
      %p193 = scmp.eq.s32.totalorder %s28, 5
      %p194 = por %p192, %p193
      %p196 = scmp.ne.s32.totalorder %s181, %s195
      %p197 = scmp.eq.s32.totalorder %s28, 0
      %p198 = por %p196, %p197
      %s200 = sadd.s32 %s199, 1
      %p203 = scmp.eq.s32.totalorder %s22, 5
      %p204 = scmp.ne.s32.totalorder %s199, %s201
      %p205 = scmp.eq.s32.totalorder %s22, 0
      %p206 = por %p204, %p205
      %p207 = scmp.ne.s32.totalorder %s199, %s201
      %p208 = scmp.eq.s32.totalorder %s27, 5
      %p209 = por %p207, %p208
      %p210 = scmp.ne.s32.totalorder %s201, %s202
      %p211 = scmp.eq.s32.totalorder %s27, 0
      %p212 = por %p210, %p211
      %p213 = scmp.ne.s32.totalorder %s201, %s202
      %p214 = scmp.eq.s32.totalorder %s28, 5
      %p215 = por %p213, %p214
      %p217 = scmp.ne.s32.totalorder %s202, %s216
      %p218 = scmp.eq.s32.totalorder %s28, 0
      %p219 = por %p217, %p218
      %s221 = sadd.s32 %s220, 1
      %p224 = scmp.eq.s32.totalorder %s22, 5
      %p225 = scmp.ne.s32.totalorder %s220, %s222
      %p226 = scmp.eq.s32.totalorder %s22, 0
      %p227 = por %p225, %p226
      %p228 = scmp.ne.s32.totalorder %s220, %s222
      %p229 = scmp.eq.s32.totalorder %s27, 5
      %p230 = por %p228, %p229
      %p231 = scmp.ne.s32.totalorder %s222, %s223
      %p232 = scmp.eq.s32.totalorder %s27, 0
      %p233 = por %p231, %p232
      %p234 = scmp.ne.s32.totalorder %s222, %s223
      %p235 = scmp.eq.s32.totalorder %s28, 5
      %p236 = por %p234, %p235
      %p238 = scmp.ne.s32.totalorder %s223, %s237
      %p239 = scmp.eq.s32.totalorder %s28, 0
      %p240 = por %p238, %p239
      %s242 = sadd.s32 %s241, 1
      %p245 = scmp.eq.s32.totalorder %s22, 5
      %p246 = scmp.ne.s32.totalorder %s241, %s243
      %p247 = scmp.eq.s32.totalorder %s22, 0
      %p248 = por %p246, %p247
      %p249 = scmp.ne.s32.totalorder %s241, %s243
      %p250 = scmp.eq.s32.totalorder %s27, 5
      %p251 = por %p249, %p250
      %p252 = scmp.ne.s32.totalorder %s243, %s244
      %p253 = scmp.eq.s32.totalorder %s27, 0
      %p254 = por %p252, %p253
      %p255 = scmp.ne.s32.totalorder %s243, %s244
      %p256 = scmp.eq.s32.totalorder %s28, 5
      %p257 = por %p255, %p256
      %p259 = scmp.ne.s32.totalorder %s244, %s258
      %p260 = scmp.eq.s32.totalorder %s28, 0
      %p261 = por %p259, %p260
      %s263 = sadd.s32 %s262, 1
      %p266 = scmp.eq.s32.totalorder %s22, 5
      %p267 = scmp.ne.s32.totalorder %s262, %s264
      %p268 = scmp.eq.s32.totalorder %s22, 0
      %p269 = por %p267, %p268
      %p270 = scmp.ne.s32.totalorder %s262, %s264
      %p271 = scmp.eq.s32.totalorder %s27, 5
      %p272 = por %p270, %p271
      %p273 = scmp.ne.s32.totalorder %s264, %s265
      %p274 = scmp.eq.s32.totalorder %s27, 0
      %p275 = por %p273, %p274
      %p276 = scmp.ne.s32.totalorder %s264, %s265
      %p277 = scmp.eq.s32.totalorder %s28, 5
      %p278 = por %p276, %p277
      %p280 = scmp.ne.s32.totalorder %s265, %s279
      %p281 = scmp.eq.s32.totalorder %s28, 0
      %p282 = por %p280, %p281
      %s284 = sadd.s32 %s283, 1
      %p287 = scmp.eq.s32.totalorder %s22, 5
      %p288 = scmp.ne.s32.totalorder %s283, %s285
      %p289 = scmp.eq.s32.totalorder %s22, 0
      %p290 = por %p288, %p289
      %p291 = scmp.ne.s32.totalorder %s283, %s285
      %p292 = scmp.eq.s32.totalorder %s27, 5
      %p293 = por %p291, %p292
      %p294 = scmp.ne.s32.totalorder %s285, %s286
      %p295 = scmp.eq.s32.totalorder %s27, 0
      %p296 = por %p294, %p295
      %p297 = scmp.ne.s32.totalorder %s285, %s286
      %p298 = scmp.eq.s32.totalorder %s28, 5
      %p299 = por %p297, %p298
      %p301 = scmp.ne.s32.totalorder %s286, %s300
      %p302 = scmp.eq.s32.totalorder %s28, 0
      %p303 = por %p301, %p302
      %s305 = sadd.s32 %s304, 1
      %p308 = scmp.eq.s32.totalorder %s22, 5
      %p309 = scmp.ne.s32.totalorder %s304, %s306
      %p310 = scmp.eq.s32.totalorder %s22, 0
      %p311 = por %p309, %p310
      %p312 = scmp.ne.s32.totalorder %s304, %s306
      %p313 = scmp.eq.s32.totalorder %s27, 5
      %p314 = por %p312, %p313
      %p315 = scmp.ne.s32.totalorder %s306, %s307
      %p316 = scmp.eq.s32.totalorder %s27, 0
      %p317 = por %p315, %p316
      %p318 = scmp.ne.s32.totalorder %s306, %s307
      %p319 = scmp.eq.s32.totalorder %s28, 5
      %p320 = por %p318, %p319
      %p322 = scmp.ne.s32.totalorder %s307, %s321
      %p323 = scmp.eq.s32.totalorder %s28, 0
      %p324 = por %p322, %p323
      %s326 = sadd.s32 %s325, 1
      %p329 = scmp.eq.s32.totalorder %s22, 5
      %p330 = scmp.ne.s32.totalorder %s325, %s327
      %p331 = scmp.eq.s32.totalorder %s22, 0
      %p332 = por %p330, %p331
      %p333 = scmp.ne.s32.totalorder %s325, %s327
      %p334 = scmp.eq.s32.totalorder %s27, 5
      %p335 = por %p333, %p334
      %p336 = scmp.ne.s32.totalorder %s327, %s328
      %p337 = scmp.eq.s32.totalorder %s27, 0
      %p338 = por %p336, %p337
      %p339 = scmp.ne.s32.totalorder %s327, %s328
      %p340 = scmp.eq.s32.totalorder %s28, 5
      %p341 = por %p339, %p340
      %p343 = scmp.ne.s32.totalorder %s328, %s342
      %p344 = scmp.eq.s32.totalorder %s28, 0
      %p345 = por %p343, %p344
      %s347 = sadd.s32 %s346, 1
      %p350 = scmp.eq.s32.totalorder %s22, 5
      %p351 = scmp.ne.s32.totalorder %s346, %s348
      %p352 = scmp.eq.s32.totalorder %s22, 0
      %p353 = por %p351, %p352
      %p354 = scmp.ne.s32.totalorder %s346, %s348
      %p355 = scmp.eq.s32.totalorder %s27, 5
      %p356 = por %p354, %p355
      %p357 = scmp.ne.s32.totalorder %s348, %s349
      %p358 = scmp.eq.s32.totalorder %s27, 0
      %p359 = por %p357, %p358
      %p360 = scmp.ne.s32.totalorder %s348, %s349
      %p361 = scmp.eq.s32.totalorder %s28, 5
      %p362 = por %p360, %p361
      %p364 = scmp.ne.s32.totalorder %s349, %s363
      %p365 = scmp.eq.s32.totalorder %s28, 0
      %p366 = por %p364, %p365
      %s367 = ssub.s32 %s29, %s41
      %p368 = scmp.eq.s32.totalorder %s367, 0
      %s370 = sadd.s32 %s369, 1
      %s371 = scalar_select %p368, %s369, %s370
      %p374 = pneg %p368
      %p375 = scmp.eq.s32.totalorder %s22, 5
      %p376 = por %p374, %p375
      %p377 = scmp.ne.s32.totalorder %s369, %s372
      %p378 = scmp.eq.s32.totalorder %s22, 0
      %p379 = por %p377, %p378
      %p380 = scmp.ne.s32.totalorder %s369, %s372
      %p381 = scmp.eq.s32.totalorder %s27, 5
      %p382 = por %p380, %p381
      %p383 = scmp.ne.s32.totalorder %s372, %s373
      %p384 = scmp.eq.s32.totalorder %s27, 0
      %p385 = por %p383, %p384
      %p386 = scmp.ne.s32.totalorder %s372, %s373
      %p387 = scmp.eq.s32.totalorder %s28, 5
      %p388 = por %p386, %p387
      %p390 = scmp.ne.s32.totalorder %s373, %s389
      %p391 = scmp.eq.s32.totalorder %s28, 0
      %p392 = por %p390, %p391
      %p393 = scmp.le.s32.totalorder 1, %s22
      %p394 = scmp.lt.s32.totalorder %s22, 7
      %p395 = pnand %p393, %p394
      %p396 = pneg %p395
      // Predicated region
      $region9: #{sa_edge_transformer_forward.4} parent=5 // pred_check
        _
      $region10: #{sa_edge_transformer_forward.4} parent=5 // pred_check_branch
        %398 = sbr.rel (%p395) target = $region12
      $region11: #{sa_edge_transformer_forward.4} parent=5 // pred_region
        %s399 = ssub.s32 %s22, 1
        // Predicated region
        $region13: #{sa_edge_transformer_forward.4} parent=11 // pred_check
          %p400 = pneg %p107
        $region14: #{sa_edge_transformer_forward.4} parent=11 // pred_check_branch
          %402 = sbr.rel (%p400) target = $region16
        $region15: #{sa_edge_transformer_forward.4} parent=11 // pred_region
          %s404 = ssub.s32 16, 16
          %405 = vsyncadd [#allocation5], %s404
          %s407 = sshll.u32 %s2, 4
          %s408 = int_to_ptr.vmem [resolvable:$true] %s407
          %410 = dma.vmem_to_smem %s408, 16, [#allocation4], [#allocation5]
        $region16: #{sa_edge_transformer_forward.4} parent=11 // pred_fallthru
          _
        // Predicated region
        $region17: #{sa_edge_transformer_forward.4} parent=11 // pred_check
          %p411 = pneg %p128
        $region18: #{sa_edge_transformer_forward.4} parent=11 // pred_check_branch
          %413 = sbr.rel (%p411) target = $region20
        $region19: #{sa_edge_transformer_forward.4} parent=11 // pred_region
          _
        $region20: #{sa_edge_transformer_forward.4} parent=11 // pred_fallthru
          _
        // Predicated region
        $region21: #{sa_edge_transformer_forward.4} parent=11 // pred_check
          %p414 = pneg %p149
        $region22: #{sa_edge_transformer_forward.4} parent=11 // pred_check_branch
          %416 = sbr.rel (%p414) target = $region24
        $region23: #{sa_edge_transformer_forward.4} parent=11 // pred_region
          _
        $region24: #{sa_edge_transformer_forward.4} parent=11 // pred_fallthru
          _
        // Predicated region
        $region25: #{sa_edge_transformer_forward.4} parent=11 // pred_check
          %p417 = pneg %p170
        $region26: #{sa_edge_transformer_forward.4} parent=11 // pred_check_branch
          %419 = sbr.rel (%p417) target = $region28
        $region27: #{sa_edge_transformer_forward.4} parent=11 // pred_region
          _
        $region28: #{sa_edge_transformer_forward.4} parent=11 // pred_fallthru
          _
        // Predicated region
        $region29: #{sa_edge_transformer_forward.4} parent=11 // pred_check
          %p420 = pneg %p191
        $region30: #{sa_edge_transformer_forward.4} parent=11 // pred_check_branch
          %422 = sbr.rel (%p420) target = $region32
        $region31: #{sa_edge_transformer_forward.4} parent=11 // pred_region
          _
        $region32: #{sa_edge_transformer_forward.4} parent=11 // pred_fallthru
          _
        // Predicated region
        $region33: #{sa_edge_transformer_forward.4} parent=11 // pred_check
          %p423 = pneg %p212
        $region34: #{sa_edge_transformer_forward.4} parent=11 // pred_check_branch
          %425 = sbr.rel (%p423) target = $region36
        $region35: #{sa_edge_transformer_forward.4} parent=11 // pred_region
          _
        $region36: #{sa_edge_transformer_forward.4} parent=11 // pred_fallthru
          _
        // Predicated region
        $region37: #{sa_edge_transformer_forward.4} parent=11 // pred_check
          %p426 = pneg %p233
        $region38: #{sa_edge_transformer_forward.4} parent=11 // pred_check_branch
          %428 = sbr.rel (%p426) target = $region40
        $region39: #{sa_edge_transformer_forward.4} parent=11 // pred_region
          _
        $region40: #{sa_edge_transformer_forward.4} parent=11 // pred_fallthru
          _
        // Predicated region
        $region41: #{sa_edge_transformer_forward.4} parent=11 // pred_check
          %p429 = pneg %p254
        $region42: #{sa_edge_transformer_forward.4} parent=11 // pred_check_branch
          %431 = sbr.rel (%p429) target = $region44
        $region43: #{sa_edge_transformer_forward.4} parent=11 // pred_region
          _
        $region44: #{sa_edge_transformer_forward.4} parent=11 // pred_fallthru
          _
        // Predicated region
        $region45: #{sa_edge_transformer_forward.4} parent=11 // pred_check
          %p432 = pneg %p275
        $region46: #{sa_edge_transformer_forward.4} parent=11 // pred_check_branch
          %434 = sbr.rel (%p432) target = $region48
        $region47: #{sa_edge_transformer_forward.4} parent=11 // pred_region
          _
        $region48: #{sa_edge_transformer_forward.4} parent=11 // pred_fallthru
          _
        // Predicated region
        $region49: #{sa_edge_transformer_forward.4} parent=11 // pred_check
          %p435 = pneg %p296
        $region50: #{sa_edge_transformer_forward.4} parent=11 // pred_check_branch
          %437 = sbr.rel (%p435) target = $region52
        $region51: #{sa_edge_transformer_forward.4} parent=11 // pred_region
          _
        $region52: #{sa_edge_transformer_forward.4} parent=11 // pred_fallthru
          _
        // Predicated region
        $region53: #{sa_edge_transformer_forward.4} parent=11 // pred_check
          %p438 = pneg %p317
        $region54: #{sa_edge_transformer_forward.4} parent=11 // pred_check_branch
          %440 = sbr.rel (%p438) target = $region56
        $region55: #{sa_edge_transformer_forward.4} parent=11 // pred_region
          _
        $region56: #{sa_edge_transformer_forward.4} parent=11 // pred_fallthru
          _
        // Predicated region
        $region57: #{sa_edge_transformer_forward.4} parent=11 // pred_check
          %p441 = pneg %p338
        $region58: #{sa_edge_transformer_forward.4} parent=11 // pred_check_branch
          %443 = sbr.rel (%p441) target = $region60
        $region59: #{sa_edge_transformer_forward.4} parent=11 // pred_region
          _
        $region60: #{sa_edge_transformer_forward.4} parent=11 // pred_fallthru
          _
        // Predicated region
        $region61: #{sa_edge_transformer_forward.4} parent=11 // pred_check
          %p444 = pneg %p359
        $region62: #{sa_edge_transformer_forward.4} parent=11 // pred_check_branch
          %446 = sbr.rel (%p444) target = $region64
        $region63: #{sa_edge_transformer_forward.4} parent=11 // pred_region
          _
        $region64: #{sa_edge_transformer_forward.4} parent=11 // pred_fallthru
          _
      $region12: #{sa_edge_transformer_forward.4} parent=5 // pred_fallthru
        _
      %p447 = scmp.lt.s32.totalorder %s22, 6
      // Predicated region
      $region65: #{sa_edge_transformer_forward.4} parent=5 // pred_check
        %p448 = pneg %p447
      $region66: #{sa_edge_transformer_forward.4} parent=5 // pred_check_branch
        %450 = sbr.rel (%p448) target = $region68
      $region67: #{sa_edge_transformer_forward.4} parent=5 // pred_region
        // Predicated region
        $region69: #{sa_edge_transformer_forward.4} parent=67 // pred_check
          %p451 = pneg %p54
        $region70: #{sa_edge_transformer_forward.4} parent=67 // pred_check_branch
          %453 = sbr.rel (%p451) target = $region72
        $region71: #{sa_edge_transformer_forward.4} parent=67 // pred_region
          %p454 = scmp.lt.s32.totalorder %s29, 1
          %s455 = scalar_select %p454, %s29, 1
          %s456 = smul.addr %s455, 2
          %s457 = smul.addr %s456, 8
          %s458 = scalar_lea.vmem %s0, %s457
        $region72: #{sa_edge_transformer_forward.4} parent=67 // pred_fallthru
          _
        // Predicated region
        $region73: #{sa_edge_transformer_forward.4} parent=67 // pred_check
          %p459 = pneg %p80
        $region74: #{sa_edge_transformer_forward.4} parent=67 // pred_check_branch
          %461 = sbr.rel (%p459) target = $region76
        $region75: #{sa_edge_transformer_forward.4} parent=67 // pred_region
          %p462 = scmp.lt.s32.totalorder %s29, 1
          %s463 = scalar_select %p462, %s29, 1
          %s464 = smul.addr %s463, 2
          %s465 = smul.addr %s464, 8
          %s466 = scalar_lea.vmem %s1, %s465
        $region76: #{sa_edge_transformer_forward.4} parent=67 // pred_fallthru
          _
      $region68: #{sa_edge_transformer_forward.4} parent=5 // pred_fallthru
        _
      %p467 = scmp.le.s32.totalorder 1, %s22
      %p468 = scmp.lt.s32.totalorder %s22, 7
      %p469 = pnand %p467, %p468
      %p470 = pneg %p469
      // Predicated region
      $region77: #{sa_edge_transformer_forward.4} parent=5 // pred_check
        _
      $region78: #{sa_edge_transformer_forward.4} parent=5 // pred_check_branch
        %472 = sbr.rel (%p469) target = $region80
      $region79: #{sa_edge_transformer_forward.4} parent=5 // pred_region
        %s473 = ssub.s32 %s22, 1
        // Predicated region
        $region81: #{sa_edge_transformer_forward.4} parent=79 // pred_check
          %p474 = pneg %p107
        $region82: #{sa_edge_transformer_forward.4} parent=79 // pred_check_branch
          %476 = sbr.rel (%p474) target = $region84
        $region83: #{sa_edge_transformer_forward.4} parent=79 // pred_region
          %477 = dma.done [#allocation5], 16
        $region84: #{sa_edge_transformer_forward.4} parent=79 // pred_fallthru
          _
        %478 = sfence
        %p479 = scmp.lt.s32.totalorder %s31, 1
        %s480 = scalar_select %p479, %s31, 1
        %s481 = smul.addr %s480, 2
        %s482 = smul.addr %s481, 8
        %s483 = scalar_lea.vmem %s0, %s482
        %p484 = pneg %p60
        %p485 = pneg %p57
        %p486 = scmp.lt.s32.totalorder %s31, 1
        %s487 = scalar_select %p486, %s31, 1
        %s488 = smul.addr %s487, 2
        %s489 = smul.addr %s488, 8
        %s490 = scalar_lea.vmem %s1, %s489
        %p491 = pneg %p86
        %p492 = pneg %p83
        %p493 = pneg %p107
        %p494 = pneg %p104
        %p495 = pneg %p128
        %p496 = pneg %p125
        %p497 = pneg %p149
        %p498 = pneg %p146
        %p499 = pneg %p170
        %p500 = pneg %p167
        %p501 = pneg %p191
        %p502 = pneg %p188
        %p503 = pneg %p212
        %p504 = pneg %p209
        %p505 = pneg %p233
        %p506 = pneg %p230
        %p507 = pneg %p254
        %p508 = pneg %p251
        %p509 = pneg %p275
        %p510 = pneg %p272
        %p511 = pneg %p296
        %p512 = pneg %p293
        %p513 = pneg %p317
        %p514 = pneg %p314
        %p515 = pneg %p338
        %p516 = pneg %p335
        %p517 = pneg %p359
        %p518 = pneg %p356
        %p519 = pneg %p385
        %p520 = pneg %p382
        %p521 = scmp.lt.s32.totalorder %s31, 1
        %s522 = scalar_select %p521, %s31, 1
        %s523 = scalar_lea.vmem %s15, %s522
        %p524 = scmp.lt.s32.totalorder %s31, 1
        %s525 = scalar_select %p524, %s31, 1
        %s526 = smul.addr %s525, 2
        %s527 = smul.addr %s526, 8
        %s528 = scalar_lea.vmem %s0, %s527
        %p529 = scmp.lt.s32.totalorder %s31, 1
        %s530 = scalar_select %p529, %s31, 1
        %s531 = smul.addr %s530, 2
        %s532 = smul.addr %s531, 8
        %s533 = scalar_lea.vmem %s1, %s532
        %p534 = scmp.lt.s32.totalorder %s31, 1
        %s535 = scalar_select %p534, %s31, 1
        %s536 = scalar_lea.vmem %s15, %s535
        %p538 = scmp.eq.s32.totalorder %s32, 0
        // Predicated region
        $region85: #{sa_edge_transformer_forward.4} parent=79 // pred_check
          %p539 = pneg %p538
        $region86: #{sa_edge_transformer_forward.4} parent=79 // pred_check_branch
          %541 = sbr.rel (%p539) target = $region88
        $region87: #{sa_edge_transformer_forward.4} parent=79 // pred_region
          %v542 = vld [vmem:[%s528] sm:$0xff]
          %v543 = vld [vmem:[%s528 + $0x8] sm:$0xff]
          %544 = vst [vmem:[#allocation2] sm:$0xff] %v542
          %545 = vst [vmem:[#allocation2 + $0x8] sm:$0xff] %v543
          %v546 = vld [vmem:[%s533] sm:$0xff]
          %v547 = vld [vmem:[%s533 + $0x8] sm:$0xff]
          %vm548 = vcmp.eq.s32.totalorder %v546, 0
          %vm549 = vcmp.eq.s32.totalorder %v547, 0
          %v550 = vsel %vm548, 1, 0
          %v551 = vsel %vm549, 1, 0
          %v552 = vcvt.s32.f32 %v550
          %v553 = vcvt.s32.f32 %v551
          %vm554 = vcmask 130048
          %555 = vst.msk [vmem:[#allocation3] sm:$0xff] %vm554, %v552
          %556 = vst.msk [vmem:[#allocation3 + $0x8] sm:$0xff] %vm554, %v553
          %vm557 = vcmp.eq.s32.totalorder %v546, 1
          %vm558 = vcmp.eq.s32.totalorder %v547, 1
          %v559 = vsel %vm557, 1, 0
          %v560 = vsel %vm558, 1, 0
          %v561 = vcvt.s32.f32 %v559
          %v562 = vcvt.s32.f32 %v560
          %s563 = scalar_lea.vmem [#allocation3], 16
          %564 = vst.msk [vmem:[%s563] sm:$0xff] %vm554, %v561
          %565 = vst.msk [vmem:[%s563 + $0x8] sm:$0xff] %vm554, %v562
          %vm566 = vcmp.eq.s32.totalorder %v546, 2
          %vm567 = vcmp.eq.s32.totalorder %v547, 2
          %v568 = vsel %vm566, 1, 0
          %v569 = vsel %vm567, 1, 0
          %v570 = vcvt.s32.f32 %v568
          %v571 = vcvt.s32.f32 %v569
          %s572 = scalar_lea.vmem [#allocation3], 32
          %573 = vst.msk [vmem:[%s572] sm:$0xff] %vm554, %v570
          %574 = vst.msk [vmem:[%s572 + $0x8] sm:$0xff] %vm554, %v571
          %vm575 = vcmp.eq.s32.totalorder %v546, 3
          %vm576 = vcmp.eq.s32.totalorder %v547, 3
          %v577 = vsel %vm575, 1, 0
          %v578 = vsel %vm576, 1, 0
          %v579 = vcvt.s32.f32 %v577
          %v580 = vcvt.s32.f32 %v578
          %s581 = scalar_lea.vmem [#allocation3], 48
          %582 = vst.msk [vmem:[%s581] sm:$0xff] %vm554, %v579
          %583 = vst.msk [vmem:[%s581 + $0x8] sm:$0xff] %vm554, %v580
          %vm584 = vcmp.eq.s32.totalorder %v546, 4
          %vm585 = vcmp.eq.s32.totalorder %v547, 4
          %v586 = vsel %vm584, 1, 0
          %v587 = vsel %vm585, 1, 0
          %v588 = vcvt.s32.f32 %v586
          %v589 = vcvt.s32.f32 %v587
          %s590 = scalar_lea.vmem [#allocation3], 64
          %591 = vst.msk [vmem:[%s590] sm:$0xff] %vm554, %v588
          %592 = vst.msk [vmem:[%s590 + $0x8] sm:$0xff] %vm554, %v589
        $region88: #{sa_edge_transformer_forward.4} parent=79 // pred_fallthru
          _
        %v593 = vld [vmem:[#allocation2] sm:$0xff]
        %v594 = vld [vmem:[#allocation2 + $0x8] sm:$0xff]
        %v595 = vpack.c.bf16 %v594, %v593
        %s596 = smul.u32 %s32, 4
        %s597 = smul.u32 %s596, 16
        %s598 = smul.addr %s597, 4
        %s599 = scalar_lea.vmem %s3, %s598
        %v600 = vld [vmem:[%s599] sm:$0xf]
        %v601 = vld [vmem:[%s599 + $0x4] sm:$0xf]
        %v602 = vld [vmem:[%s599 + $0x8] sm:$0xf]
        %v603 = vld [vmem:[%s599 + $0xc] sm:$0xf]
        %v604 = vld [vmem:[%s599 + $0x10] sm:$0xf]
        %v605 = vld [vmem:[%s599 + $0x14] sm:$0xf]
        %v606 = vld [vmem:[%s599 + $0x18] sm:$0xf]
        %v607 = vld [vmem:[%s599 + $0x1c] sm:$0xf]
        %v608 = vld [vmem:[%s599 + $0x20] sm:$0xf]
        %v609 = vld [vmem:[%s599 + $0x24] sm:$0xf]
        %v610 = vld [vmem:[%s599 + $0x28] sm:$0xf]
        %v611 = vld [vmem:[%s599 + $0x2c] sm:$0xf]
        %v612 = vld [vmem:[%s599 + $0x30] sm:$0xf]
        %v613 = vld [vmem:[%s599 + $0x34] sm:$0xf]
        %v614 = vld [vmem:[%s599 + $0x38] sm:$0xf]
        %v615 = vld [vmem:[%s599 + $0x3c] sm:$0xf]
        %v632 = vunpack.c.l.b16 %v600
        %v633 = vunpack.c.l.b16 %v601
        %v634 = vunpack.c.l.b16 %v602
        %v635 = vunpack.c.l.b16 %v603
        %v636 = vunpack.c.l.b16 %v604
        %v637 = vunpack.c.l.b16 %v605
        %v638 = vunpack.c.l.b16 %v606
        %v639 = vunpack.c.l.b16 %v607
        %v640 = vunpack.c.l.b16 %v608
        %v641 = vunpack.c.l.b16 %v609
        %v642 = vunpack.c.l.b16 %v610
        %v643 = vunpack.c.l.b16 %v611
        %v644 = vunpack.c.l.b16 %v612
        %v645 = vunpack.c.l.b16 %v613
        %v646 = vunpack.c.l.b16 %v614
        %v647 = vunpack.c.l.b16 %v615
        %v648 = vpack.c.b16 %v633, %v632
        %v649 = vpack.c.b16 %v635, %v634
        %v650 = vpack.c.b16 %v637, %v636
        %v651 = vpack.c.b16 %v639, %v638
        %v652 = vpack.c.b16 %v641, %v640
        %v653 = vpack.c.b16 %v643, %v642
        %v654 = vpack.c.b16 %v645, %v644
        %v655 = vpack.c.b16 %v647, %v646
        %664 = vmatprep.subr.bf16.mxu0 0
        %665 = vmatpush1.bf16.msra.mxu0 %v648
        %666 = vmatprep.subr.bf16.mxu0 0
        %667 = vmatpush1.bf16.msra.mxu0 %v649
        %668 = vmatprep.subr.bf16.mxu0 0
        %669 = vmatpush1.bf16.msra.mxu0 %v650
        %670 = vmatprep.subr.bf16.mxu0 0
        %671 = vmatpush1.bf16.msra.mxu0 %v651
        %672 = vmatprep.subr.bf16.mxu0 0
        %673 = vmatpush1.bf16.msra.mxu0 %v652
        %674 = vmatprep.subr.bf16.mxu0 0
        %675 = vmatpush1.bf16.msra.mxu0 %v653
        %676 = vmatprep.subr.bf16.mxu0 0
        %677 = vmatpush1.bf16.msra.mxu0 %v654
        %678 = vmatprep.subr.bf16.mxu0 0
        %679 = vmatpush1.bf16.msra.mxu0 %v655
        %680 = vmatprep.subr.bf16.mxu0 0
        %681 = vmatpush1.bf16.msra.mxu0 0
        %682 = vmatprep.subr.bf16.mxu0 0
        %683 = vmatpush1.bf16.msra.mxu0 0
        %684 = vmatprep.subr.bf16.mxu0 0
        %685 = vmatpush1.bf16.msra.mxu0 0
        %686 = vmatprep.subr.bf16.mxu0 0
        %687 = vmatpush1.bf16.msra.mxu0 0
        %688 = vmatprep.subr.bf16.mxu0 0
        %689 = vmatpush1.bf16.msra.mxu0 0
        %690 = vmatprep.subr.bf16.mxu0 0
        %691 = vmatpush1.bf16.msra.mxu0 0
        %692 = vmatprep.subr.bf16.mxu0 0
        %693 = vmatpush1.bf16.msra.mxu0 0
        %694 = vmatprep.subr.bf16.mxu0 0
        %695 = vmatpush1.bf16.msra.mxu0 0
        %696 = vmatprep.mubr.bf16.mxu0 0
        %697 = vmatmul.mubr.bf16.gmra.mrb[0].mxu0 %v595
        %v698 = vpop.f32.mrb[0].mxu0
        %v699 = vadd.f32 0.0, %v698
        %v700 = vpop.f32.mrb[0].mxu0
        %v701 = vpop.f32.mrb[0].mxu0
        %v702 = vadd.f32 0.0, %v701
        %v703 = vpop.f32.mrb[0].mxu0
        %704 = vdwg.mxu0
        %v705 = vmul.f32 %v699, 0.17677669
        %v706 = vmul.f32 %v702, 0.17677669
        %v707 = vpack.c.bf16 %v706, %v705
        %s708 = smul.addr %s597, 4
        %s709 = scalar_lea.vmem %s4, %s708
        %v710 = vld [vmem:[%s709] sm:$0xf]
        %v711 = vld [vmem:[%s709 + $0x4] sm:$0xf]
        %v712 = vld [vmem:[%s709 + $0x8] sm:$0xf]
        %v713 = vld [vmem:[%s709 + $0xc] sm:$0xf]
        %v714 = vld [vmem:[%s709 + $0x10] sm:$0xf]
        %v715 = vld [vmem:[%s709 + $0x14] sm:$0xf]
        %v716 = vld [vmem:[%s709 + $0x18] sm:$0xf]
        %v717 = vld [vmem:[%s709 + $0x1c] sm:$0xf]
        %v718 = vld [vmem:[%s709 + $0x20] sm:$0xf]
        %v719 = vld [vmem:[%s709 + $0x24] sm:$0xf]
        %v720 = vld [vmem:[%s709 + $0x28] sm:$0xf]
        %v721 = vld [vmem:[%s709 + $0x2c] sm:$0xf]
        %v722 = vld [vmem:[%s709 + $0x30] sm:$0xf]
        %v723 = vld [vmem:[%s709 + $0x34] sm:$0xf]
        %v724 = vld [vmem:[%s709 + $0x38] sm:$0xf]
        %v725 = vld [vmem:[%s709 + $0x3c] sm:$0xf]
        %v742 = vunpack.c.l.b16 %v710
        %v743 = vunpack.c.l.b16 %v711
        %v744 = vunpack.c.l.b16 %v712
        %v745 = vunpack.c.l.b16 %v713
        %v746 = vunpack.c.l.b16 %v714
        %v747 = vunpack.c.l.b16 %v715
        %v748 = vunpack.c.l.b16 %v716
        %v749 = vunpack.c.l.b16 %v717
        %v750 = vunpack.c.l.b16 %v718
        %v751 = vunpack.c.l.b16 %v719
        %v752 = vunpack.c.l.b16 %v720
        %v753 = vunpack.c.l.b16 %v721
        %v754 = vunpack.c.l.b16 %v722
        %v755 = vunpack.c.l.b16 %v723
        %v756 = vunpack.c.l.b16 %v724
        %v757 = vunpack.c.l.b16 %v725
        %v758 = vpack.c.b16 %v743, %v742
        %v759 = vpack.c.b16 %v745, %v744
        %v760 = vpack.c.b16 %v747, %v746
        %v761 = vpack.c.b16 %v749, %v748
        %v762 = vpack.c.b16 %v751, %v750
        %v763 = vpack.c.b16 %v753, %v752
        %v764 = vpack.c.b16 %v755, %v754
        %v765 = vpack.c.b16 %v757, %v756
        %774 = vmatprep.subr.bf16.mxu0 0
        %775 = vmatpush1.bf16.msra.mxu0 %v758
        %776 = vmatprep.subr.bf16.mxu0 0
        %777 = vmatpush1.bf16.msra.mxu0 %v759
        %778 = vmatprep.subr.bf16.mxu0 0
        %779 = vmatpush1.bf16.msra.mxu0 %v760
        %780 = vmatprep.subr.bf16.mxu0 0
        %781 = vmatpush1.bf16.msra.mxu0 %v761
        %782 = vmatprep.subr.bf16.mxu0 0
        %783 = vmatpush1.bf16.msra.mxu0 %v762
        %784 = vmatprep.subr.bf16.mxu0 0
        %785 = vmatpush1.bf16.msra.mxu0 %v763
        %786 = vmatprep.subr.bf16.mxu0 0
        %787 = vmatpush1.bf16.msra.mxu0 %v764
        %788 = vmatprep.subr.bf16.mxu0 0
        %789 = vmatpush1.bf16.msra.mxu0 %v765
        %790 = vmatprep.subr.bf16.mxu0 0
        %791 = vmatpush1.bf16.msra.mxu0 0
        %792 = vmatprep.subr.bf16.mxu0 0
        %793 = vmatpush1.bf16.msra.mxu0 0
        %794 = vmatprep.subr.bf16.mxu0 0
        %795 = vmatpush1.bf16.msra.mxu0 0
        %796 = vmatprep.subr.bf16.mxu0 0
        %797 = vmatpush1.bf16.msra.mxu0 0
        %798 = vmatprep.subr.bf16.mxu0 0
        %799 = vmatpush1.bf16.msra.mxu0 0
        %800 = vmatprep.subr.bf16.mxu0 0
        %801 = vmatpush1.bf16.msra.mxu0 0
        %802 = vmatprep.subr.bf16.mxu0 0
        %803 = vmatpush1.bf16.msra.mxu0 0
        %804 = vmatprep.subr.bf16.mxu0 0
        %805 = vmatpush1.bf16.msra.mxu0 0
        %806 = vmatprep.mubr.bf16.mxu0 0
        %807 = vmatmul.mubr.bf16.gmra.mrb[0].mxu0 %v595
        %v808 = vpop.f32.mrb[0].mxu0
        %v809 = vadd.f32 0.0, %v808
        %v810 = vpop.f32.mrb[0].mxu0
        %v811 = vpop.f32.mrb[0].mxu0
        %v812 = vadd.f32 0.0, %v811
        %v813 = vpop.f32.mrb[0].mxu0
        %814 = vdwg.mxu0
        %v815 = vpack.c.bf16 %v812, %v809
        %s816 = smul.addr %s597, 4
        %s817 = scalar_lea.vmem %s5, %s816
        %v818 = vld [vmem:[%s817] sm:$0xf]
        %v819 = vld [vmem:[%s817 + $0x4] sm:$0xf]
        %v820 = vld [vmem:[%s817 + $0x8] sm:$0xf]
        %v821 = vld [vmem:[%s817 + $0xc] sm:$0xf]
        %v822 = vld [vmem:[%s817 + $0x10] sm:$0xf]
        %v823 = vld [vmem:[%s817 + $0x14] sm:$0xf]
        %v824 = vld [vmem:[%s817 + $0x18] sm:$0xf]
        %v825 = vld [vmem:[%s817 + $0x1c] sm:$0xf]
        %v826 = vld [vmem:[%s817 + $0x20] sm:$0xf]
        %v827 = vld [vmem:[%s817 + $0x24] sm:$0xf]
        %v828 = vld [vmem:[%s817 + $0x28] sm:$0xf]
        %v829 = vld [vmem:[%s817 + $0x2c] sm:$0xf]
        %v830 = vld [vmem:[%s817 + $0x30] sm:$0xf]
        %v831 = vld [vmem:[%s817 + $0x34] sm:$0xf]
        %v832 = vld [vmem:[%s817 + $0x38] sm:$0xf]
        %v833 = vld [vmem:[%s817 + $0x3c] sm:$0xf]
        %v850 = vunpack.c.l.b16 %v818
        %v851 = vunpack.c.l.b16 %v819
        %v852 = vunpack.c.l.b16 %v820
        %v853 = vunpack.c.l.b16 %v821
        %v854 = vunpack.c.l.b16 %v822
        %v855 = vunpack.c.l.b16 %v823
        %v856 = vunpack.c.l.b16 %v824
        %v857 = vunpack.c.l.b16 %v825
        %v858 = vunpack.c.l.b16 %v826
        %v859 = vunpack.c.l.b16 %v827
        %v860 = vunpack.c.l.b16 %v828
        %v861 = vunpack.c.l.b16 %v829
        %v862 = vunpack.c.l.b16 %v830
        %v863 = vunpack.c.l.b16 %v831
        %v864 = vunpack.c.l.b16 %v832
        %v865 = vunpack.c.l.b16 %v833
        %v866 = vpack.c.b16 %v851, %v850
        %v867 = vpack.c.b16 %v853, %v852
        %v868 = vpack.c.b16 %v855, %v854
        %v869 = vpack.c.b16 %v857, %v856
        %v870 = vpack.c.b16 %v859, %v858
        %v871 = vpack.c.b16 %v861, %v860
        %v872 = vpack.c.b16 %v863, %v862
        %v873 = vpack.c.b16 %v865, %v864
        %882 = vmatprep.subr.bf16.mxu0 0
        %883 = vmatpush1.bf16.msra.mxu0 %v866
        %884 = vmatprep.subr.bf16.mxu0 0
        %885 = vmatpush1.bf16.msra.mxu0 %v867
        %886 = vmatprep.subr.bf16.mxu0 0
        %887 = vmatpush1.bf16.msra.mxu0 %v868
        %888 = vmatprep.subr.bf16.mxu0 0
        %889 = vmatpush1.bf16.msra.mxu0 %v869
        %890 = vmatprep.subr.bf16.mxu0 0
        %891 = vmatpush1.bf16.msra.mxu0 %v870
        %892 = vmatprep.subr.bf16.mxu0 0
        %893 = vmatpush1.bf16.msra.mxu0 %v871
        %894 = vmatprep.subr.bf16.mxu0 0
        %895 = vmatpush1.bf16.msra.mxu0 %v872
        %896 = vmatprep.subr.bf16.mxu0 0
        %897 = vmatpush1.bf16.msra.mxu0 %v873
        %898 = vmatprep.subr.bf16.mxu0 0
        %899 = vmatpush1.bf16.msra.mxu0 0
        %900 = vmatprep.subr.bf16.mxu0 0
        %901 = vmatpush1.bf16.msra.mxu0 0
        %902 = vmatprep.subr.bf16.mxu0 0
        %903 = vmatpush1.bf16.msra.mxu0 0
        %904 = vmatprep.subr.bf16.mxu0 0
        %905 = vmatpush1.bf16.msra.mxu0 0
        %906 = vmatprep.subr.bf16.mxu0 0
        %907 = vmatpush1.bf16.msra.mxu0 0
        %908 = vmatprep.subr.bf16.mxu0 0
        %909 = vmatpush1.bf16.msra.mxu0 0
        %910 = vmatprep.subr.bf16.mxu0 0
        %911 = vmatpush1.bf16.msra.mxu0 0
        %912 = vmatprep.subr.bf16.mxu0 0
        %913 = vmatpush1.bf16.msra.mxu0 0
        %914 = vmatprep.mubr.bf16.mxu0 0
        %915 = vmatmul.mubr.bf16.gmra.mrb[0].mxu0 %v595
        %v916 = vpop.f32.mrb[0].mxu0
        %v917 = vadd.f32 0.0, %v916
        %v918 = vpop.f32.mrb[0].mxu0
        %v919 = vpop.f32.mrb[0].mxu0
        %v920 = vadd.f32 0.0, %v919
        %v921 = vpop.f32.mrb[0].mxu0
        %922 = vdwg.mxu0
        %v923 = vpack.c.bf16 %v920, %v917
        %s924 = smul.u32 %s596, 4
        %s925 = smul.addr %s924, 4
        %s926 = scalar_lea.vmem %s6, %s925
        %v927 = vld [vmem:[%s926] sm:$0xf]
        %v928 = vld [vmem:[%s926 + $0x4] sm:$0xf]
        %v929 = vld [vmem:[%s926 + $0x8] sm:$0xf]
        %v930 = vld [vmem:[%s926 + $0xc] sm:$0xf]
        %v931 = vld [vmem:[#allocation3] sm:$0xff]
        %v932 = vld [vmem:[#allocation3 + $0x8] sm:$0xff]
        %s933 = smul.u32 %s32, 20
        %s934 = sld [smem:[#allocation4 + %s933]]
        %v935 = vstv %s934
        %v936 = vmul.f32 %v931, %v935
        %v937 = vmul.f32 %v932, %v935
        %s938 = scalar_lea.vmem [#allocation3], 16
        %v939 = vld [vmem:[%s938] sm:$0xff]
        %v940 = vld [vmem:[%s938 + $0x8] sm:$0xff]
        %s941 = smul.u32 %s32, 5
        %s942 = sadd.s32 %s941, 1
        %s943 = smul.u32 %s942, 4
        %s944 = sld [smem:[#allocation4 + %s943]]
        %v945 = vstv %s944
        %v946 = vmul.f32 %v939, %v945
        %v947 = vmul.f32 %v940, %v945
        %v948 = vadd.f32 %v936, %v946
        %v949 = vadd.f32 %v937, %v947
        %s950 = scalar_lea.vmem [#allocation3], 32
        %v951 = vld [vmem:[%s950] sm:$0xff]
        %v952 = vld [vmem:[%s950 + $0x8] sm:$0xff]
        %s953 = sadd.s32 %s941, 2
        %s954 = smul.u32 %s953, 4
        %s955 = sld [smem:[#allocation4 + %s954]]
        %v956 = vstv %s955
        %v957 = vmul.f32 %v951, %v956
        %v958 = vmul.f32 %v952, %v956
        %v959 = vadd.f32 %v948, %v957
        %v960 = vadd.f32 %v949, %v958
        %s961 = scalar_lea.vmem [#allocation3], 48
        %v962 = vld [vmem:[%s961] sm:$0xff]
        %v963 = vld [vmem:[%s961 + $0x8] sm:$0xff]
        %s964 = sadd.s32 %s941, 3
        %s965 = smul.u32 %s964, 4
        %s966 = sld [smem:[#allocation4 + %s965]]
        %v967 = vstv %s966
        %v968 = vmul.f32 %v962, %v967
        %v969 = vmul.f32 %v963, %v967
        %v970 = vadd.f32 %v959, %v968
        %v971 = vadd.f32 %v960, %v969
        %s972 = scalar_lea.vmem [#allocation3], 64
        %v973 = vld [vmem:[%s972] sm:$0xff]
        %v974 = vld [vmem:[%s972 + $0x8] sm:$0xff]
        %s975 = sadd.s32 %s941, 4
        %s976 = smul.u32 %s975, 4
        %s977 = sld [smem:[#allocation4 + %s976]]
        %v978 = vstv %s977
        %v979 = vmul.f32 %v973, %v978
        %v980 = vmul.f32 %v974, %v978
        %v981 = vadd.f32 %v970, %v979
        %v982 = vadd.f32 %v971, %v980
        %vm983 = vcmask 261120
        %v985 = vsel %vm983, %v707, 0
        %v988 = vsel %vm983, %v815, 0
        %990 = vmatprep.subr.bf16.mxu0 0
        %991 = vmatpush1.bf16.xpose.msra.mxu0 %v988
        %992 = vmatprep.subr.bf16.mxu0 0
        %993 = vmatpush1.bf16.xpose.msra.mxu0 0
        %994 = vmatprep.subr.bf16.mxu0 0
        %995 = vmatpush1.bf16.xpose.msra.mxu0 0
        %996 = vmatprep.subr.bf16.mxu0 0
        %997 = vmatpush1.bf16.xpose.msra.mxu0 0
        %998 = vmatprep.subr.bf16.mxu0 0
        %999 = vmatpush1.bf16.xpose.msra.mxu0 0
        %1000 = vmatprep.subr.bf16.mxu0 0
        %1001 = vmatpush1.bf16.xpose.msra.mxu0 0
        %1002 = vmatprep.subr.bf16.mxu0 0
        %1003 = vmatpush1.bf16.xpose.msra.mxu0 0
        %1004 = vmatprep.subr.bf16.mxu0 0
        %1005 = vmatpush1.bf16.xpose.msra.mxu0 0
        %1006 = vmatprep.subr.bf16.mxu0 0
        %1007 = vmatpush1.bf16.xpose.msra.mxu0 0
        %1008 = vmatprep.subr.bf16.mxu0 0
        %1009 = vmatpush1.bf16.xpose.msra.mxu0 0
        %1010 = vmatprep.subr.bf16.mxu0 0
        %1011 = vmatpush1.bf16.xpose.msra.mxu0 0
        %1012 = vmatprep.subr.bf16.mxu0 0
        %1013 = vmatpush1.bf16.xpose.msra.mxu0 0
        %1014 = vmatprep.subr.bf16.mxu0 0
        %1015 = vmatpush1.bf16.xpose.msra.mxu0 0
        %1016 = vmatprep.subr.bf16.mxu0 0
        %1017 = vmatpush1.bf16.xpose.msra.mxu0 0
        %1018 = vmatprep.subr.bf16.mxu0 0
        %1019 = vmatpush1.bf16.xpose.msra.mxu0 0
        %1020 = vmatprep.subr.bf16.mxu0 0
        %1021 = vmatpush1.bf16.xpose.msra.mxu0 0
        %1022 = vmatprep.mubr.bf16.mxu0 0
        %1023 = vmatmul.mubr.bf16.gmra.mrb[0].mxu0 %v985
        %v1024 = vpop.f32.mrb[0].mxu0
        %v1025 = vadd.f32 %v981, %v1024
        %v1026 = vpop.f32.mrb[0].mxu0
        %v1027 = vpop.f32.mrb[0].mxu0
        %v1028 = vadd.f32 %v982, %v1027
        %v1029 = vpop.f32.mrb[0].mxu0
        %1030 = vdwg.mxu0
        %vm1031 = vcmask 130048
        %v1032 = vsel %vm1031, %v1025, -inf
        %1033 = vmax.xlane.f32.xlu0 %v1032
        %v1034 = vpop.xlane.xlu0 %1033
        %v1035 = vsel %vm1031, %v1028, -inf
        %1036 = vmax.xlane.f32.xlu0 %v1035
        %v1037 = vpop.xlane.xlu0 %1036
        %v1038 = vsub.f32 %v1025, %v1034
        %v1039 = vsub.f32 %v1028, %v1037
        %v1040 = vmul.f32 %v1038, 1.442695
        %v1041 = vpow.pop %v1040
        %v1042 = vmul.f32 %v1039, 1.442695
        %v1043 = vpow.pop %v1042
        %v1044 = vsel %vm1031, %v1041, 0.0
        %1045 = vadd.xlane.f32.xlu0 %v1044
        %v1046 = vpop.xlane.xlu0 %1045
        %v1047 = vsel %vm1031, %v1043, 0.0
        %1048 = vadd.xlane.f32.xlu0 %v1047
        %v1049 = vpop.xlane.xlu0 %1048
        %v1050 = vrcp.pop %v1046
        %v1051 = vrcp.pop %v1049
        %v1052 = vmul.f32 %v1041, %v1050
        %v1053 = vmul.f32 %v1043, %v1051
        %v1054 = vpack.c.bf16 %v1053, %v1052
        %v1056 = vsel %vm1031, %v1054, 0
        %1058 = vmatprep.subr.bf16.mxu0 0
        %1059 = vmatpush1.bf16.msra.mxu0 %v923
        %1060 = vmatprep.subr.bf16.mxu0 0
        %1061 = vmatpush1.bf16.msra.mxu0 0
        %1062 = vmatprep.subr.bf16.mxu0 0
        %1063 = vmatpush1.bf16.msra.mxu0 0
        %1064 = vmatprep.subr.bf16.mxu0 0
        %1065 = vmatpush1.bf16.msra.mxu0 0
        %1066 = vmatprep.subr.bf16.mxu0 0
        %1067 = vmatpush1.bf16.msra.mxu0 0
        %1068 = vmatprep.subr.bf16.mxu0 0
        %1069 = vmatpush1.bf16.msra.mxu0 0
        %1070 = vmatprep.subr.bf16.mxu0 0
        %1071 = vmatpush1.bf16.msra.mxu0 0
        %1072 = vmatprep.subr.bf16.mxu0 0
        %1073 = vmatpush1.bf16.msra.mxu0 0
        %1074 = vmatprep.subr.bf16.mxu0 0
        %1075 = vmatpush1.bf16.msra.mxu0 0
        %1076 = vmatprep.subr.bf16.mxu0 0
        %1077 = vmatpush1.bf16.msra.mxu0 0
        %1078 = vmatprep.subr.bf16.mxu0 0
        %1079 = vmatpush1.bf16.msra.mxu0 0
        %1080 = vmatprep.subr.bf16.mxu0 0
        %1081 = vmatpush1.bf16.msra.mxu0 0
        %1082 = vmatprep.subr.bf16.mxu0 0
        %1083 = vmatpush1.bf16.msra.mxu0 0
        %1084 = vmatprep.subr.bf16.mxu0 0
        %1085 = vmatpush1.bf16.msra.mxu0 0
        %1086 = vmatprep.subr.bf16.mxu0 0
        %1087 = vmatpush1.bf16.msra.mxu0 0
        %1088 = vmatprep.subr.bf16.mxu0 0
        %1089 = vmatpush1.bf16.msra.mxu0 0
        %1090 = vmatprep.mubr.bf16.mxu0 0
        %1091 = vmatmul.mubr.bf16.gmra.mrb[0].mxu0 %v1056
        %v1092 = vpop.f32.mrb[0].mxu0
        %v1093 = vadd.f32 0.0, %v1092
        %v1094 = vpop.f32.mrb[0].mxu0
        %v1095 = vpop.f32.mrb[0].mxu0
        %v1096 = vadd.f32 0.0, %v1095
        %v1097 = vpop.f32.mrb[0].mxu0
        %1098 = vdwg.mxu0
        %v1099 = vpack.c.bf16 %v1096, %v1093
        %s1100 = sadd.s32 %s596, 1
        %s1101 = smul.u32 %s1100, 16
        %s1102 = smul.addr %s1101, 4
        %s1103 = scalar_lea.vmem %s3, %s1102
        %v1104 = vld [vmem:[%s1103] sm:$0xf]
        %v1105 = vld [vmem:[%s1103 + $0x4] sm:$0xf]
        %v1106 = vld [vmem:[%s1103 + $0x8] sm:$0xf]
        %v1107 = vld [vmem:[%s1103 + $0xc] sm:$0xf]
        %v1108 = vld [vmem:[%s1103 + $0x10] sm:$0xf]
        %v1109 = vld [vmem:[%s1103 + $0x14] sm:$0xf]
        %v1110 = vld [vmem:[%s1103 + $0x18] sm:$0xf]
        %v1111 = vld [vmem:[%s1103 + $0x1c] sm:$0xf]
        %v1112 = vld [vmem:[%s1103 + $0x20] sm:$0xf]
        %v1113 = vld [vmem:[%s1103 + $0x24] sm:$0xf]
        %v1114 = vld [vmem:[%s1103 + $0x28] sm:$0xf]
        %v1115 = vld [vmem:[%s1103 + $0x2c] sm:$0xf]
        %v1116 = vld [vmem:[%s1103 + $0x30] sm:$0xf]
        %v1117 = vld [vmem:[%s1103 + $0x34] sm:$0xf]
        %v1118 = vld [vmem:[%s1103 + $0x38] sm:$0xf]
        %v1119 = vld [vmem:[%s1103 + $0x3c] sm:$0xf]
        %v1136 = vunpack.c.l.b16 %v1104
        %v1137 = vunpack.c.l.b16 %v1105
        %v1138 = vunpack.c.l.b16 %v1106
        %v1139 = vunpack.c.l.b16 %v1107
        %v1140 = vunpack.c.l.b16 %v1108
        %v1141 = vunpack.c.l.b16 %v1109
        %v1142 = vunpack.c.l.b16 %v1110
        %v1143 = vunpack.c.l.b16 %v1111
        %v1144 = vunpack.c.l.b16 %v1112
        %v1145 = vunpack.c.l.b16 %v1113
        %v1146 = vunpack.c.l.b16 %v1114
        %v1147 = vunpack.c.l.b16 %v1115
        %v1148 = vunpack.c.l.b16 %v1116
        %v1149 = vunpack.c.l.b16 %v1117
        %v1150 = vunpack.c.l.b16 %v1118
        %v1151 = vunpack.c.l.b16 %v1119
        %v1152 = vpack.c.b16 %v1137, %v1136
        %v1153 = vpack.c.b16 %v1139, %v1138
        %v1154 = vpack.c.b16 %v1141, %v1140
        %v1155 = vpack.c.b16 %v1143, %v1142
        %v1156 = vpack.c.b16 %v1145, %v1144
        %v1157 = vpack.c.b16 %v1147, %v1146
        %v1158 = vpack.c.b16 %v1149, %v1148
        %v1159 = vpack.c.b16 %v1151, %v1150
        %1168 = vmatprep.subr.bf16.mxu0 0
        %1169 = vmatpush1.bf16.msra.mxu0 %v1152
        %1170 = vmatprep.subr.bf16.mxu0 0
        %1171 = vmatpush1.bf16.msra.mxu0 %v1153
        %1172 = vmatprep.subr.bf16.mxu0 0
        %1173 = vmatpush1.bf16.msra.mxu0 %v1154
        %1174 = vmatprep.subr.bf16.mxu0 0
        %1175 = vmatpush1.bf16.msra.mxu0 %v1155
        %1176 = vmatprep.subr.bf16.mxu0 0
        %1177 = vmatpush1.bf16.msra.mxu0 %v1156
        %1178 = vmatprep.subr.bf16.mxu0 0
        %1179 = vmatpush1.bf16.msra.mxu0 %v1157
        %1180 = vmatprep.subr.bf16.mxu0 0
        %1181 = vmatpush1.bf16.msra.mxu0 %v1158
        %1182 = vmatprep.subr.bf16.mxu0 0
        %1183 = vmatpush1.bf16.msra.mxu0 %v1159
        %1184 = vmatprep.subr.bf16.mxu0 0
        %1185 = vmatpush1.bf16.msra.mxu0 0
        %1186 = vmatprep.subr.bf16.mxu0 0
        %1187 = vmatpush1.bf16.msra.mxu0 0
        %1188 = vmatprep.subr.bf16.mxu0 0
        %1189 = vmatpush1.bf16.msra.mxu0 0
        %1190 = vmatprep.subr.bf16.mxu0 0
        %1191 = vmatpush1.bf16.msra.mxu0 0
        %1192 = vmatprep.subr.bf16.mxu0 0
        %1193 = vmatpush1.bf16.msra.mxu0 0
        %1194 = vmatprep.subr.bf16.mxu0 0
        %1195 = vmatpush1.bf16.msra.mxu0 0
        %1196 = vmatprep.subr.bf16.mxu0 0
        %1197 = vmatpush1.bf16.msra.mxu0 0
        %1198 = vmatprep.subr.bf16.mxu0 0
        %1199 = vmatpush1.bf16.msra.mxu0 0
        %1200 = vmatprep.mubr.bf16.mxu0 0
        %1201 = vmatmul.mubr.bf16.gmra.mrb[0].mxu0 %v595
        %v1202 = vpop.f32.mrb[0].mxu0
        %v1203 = vadd.f32 0.0, %v1202
        %v1204 = vpop.f32.mrb[0].mxu0
        %v1205 = vpop.f32.mrb[0].mxu0
        %v1206 = vadd.f32 0.0, %v1205
        %v1207 = vpop.f32.mrb[0].mxu0
        %1208 = vdwg.mxu0
        %v1209 = vmul.f32 %v1203, 0.17677669
        %v1210 = vmul.f32 %v1206, 0.17677669
        %v1211 = vpack.c.bf16 %v1210, %v1209
        %s1212 = smul.addr %s1101, 4
        %s1213 = scalar_lea.vmem %s4, %s1212
        %v1214 = vld [vmem:[%s1213] sm:$0xf]
        %v1215 = vld [vmem:[%s1213 + $0x4] sm:$0xf]
        %v1216 = vld [vmem:[%s1213 + $0x8] sm:$0xf]
        %v1217 = vld [vmem:[%s1213 + $0xc] sm:$0xf]
        %v1218 = vld [vmem:[%s1213 + $0x10] sm:$0xf]
        %v1219 = vld [vmem:[%s1213 + $0x14] sm:$0xf]
        %v1220 = vld [vmem:[%s1213 + $0x18] sm:$0xf]
        %v1221 = vld [vmem:[%s1213 + $0x1c] sm:$0xf]
        %v1222 = vld [vmem:[%s1213 + $0x20] sm:$0xf]
        %v1223 = vld [vmem:[%s1213 + $0x24] sm:$0xf]
        %v1224 = vld [vmem:[%s1213 + $0x28] sm:$0xf]
        %v1225 = vld [vmem:[%s1213 + $0x2c] sm:$0xf]
        %v1226 = vld [vmem:[%s1213 + $0x30] sm:$0xf]
        %v1227 = vld [vmem:[%s1213 + $0x34] sm:$0xf]
        %v1228 = vld [vmem:[%s1213 + $0x38] sm:$0xf]
        %v1229 = vld [vmem:[%s1213 + $0x3c] sm:$0xf]
        %v1246 = vunpack.c.l.b16 %v1214
        %v1247 = vunpack.c.l.b16 %v1215
        %v1248 = vunpack.c.l.b16 %v1216
        %v1249 = vunpack.c.l.b16 %v1217
        %v1250 = vunpack.c.l.b16 %v1218
        %v1251 = vunpack.c.l.b16 %v1219
        %v1252 = vunpack.c.l.b16 %v1220
        %v1253 = vunpack.c.l.b16 %v1221
        %v1254 = vunpack.c.l.b16 %v1222
        %v1255 = vunpack.c.l.b16 %v1223
        %v1256 = vunpack.c.l.b16 %v1224
        %v1257 = vunpack.c.l.b16 %v1225
        %v1258 = vunpack.c.l.b16 %v1226
        %v1259 = vunpack.c.l.b16 %v1227
        %v1260 = vunpack.c.l.b16 %v1228
        %v1261 = vunpack.c.l.b16 %v1229
        %v1262 = vpack.c.b16 %v1247, %v1246
        %v1263 = vpack.c.b16 %v1249, %v1248
        %v1264 = vpack.c.b16 %v1251, %v1250
        %v1265 = vpack.c.b16 %v1253, %v1252
        %v1266 = vpack.c.b16 %v1255, %v1254
        %v1267 = vpack.c.b16 %v1257, %v1256
        %v1268 = vpack.c.b16 %v1259, %v1258
        %v1269 = vpack.c.b16 %v1261, %v1260
        %1278 = vmatprep.subr.bf16.mxu0 0
        %1279 = vmatpush1.bf16.msra.mxu0 %v1262
        %1280 = vmatprep.subr.bf16.mxu0 0
        %1281 = vmatpush1.bf16.msra.mxu0 %v1263
        %1282 = vmatprep.subr.bf16.mxu0 0
        %1283 = vmatpush1.bf16.msra.mxu0 %v1264
        %1284 = vmatprep.subr.bf16.mxu0 0
        %1285 = vmatpush1.bf16.msra.mxu0 %v1265
        %1286 = vmatprep.subr.bf16.mxu0 0
        %1287 = vmatpush1.bf16.msra.mxu0 %v1266
        %1288 = vmatprep.subr.bf16.mxu0 0
        %1289 = vmatpush1.bf16.msra.mxu0 %v1267
        %1290 = vmatprep.subr.bf16.mxu0 0
        %1291 = vmatpush1.bf16.msra.mxu0 %v1268
        %1292 = vmatprep.subr.bf16.mxu0 0
        %1293 = vmatpush1.bf16.msra.mxu0 %v1269
        %1294 = vmatprep.subr.bf16.mxu0 0
        %1295 = vmatpush1.bf16.msra.mxu0 0
        %1296 = vmatprep.subr.bf16.mxu0 0
        %1297 = vmatpush1.bf16.msra.mxu0 0
        %1298 = vmatprep.subr.bf16.mxu0 0
        %1299 = vmatpush1.bf16.msra.mxu0 0
        %1300 = vmatprep.subr.bf16.mxu0 0
        %1301 = vmatpush1.bf16.msra.mxu0 0
        %1302 = vmatprep.subr.bf16.mxu0 0
        %1303 = vmatpush1.bf16.msra.mxu0 0
        %1304 = vmatprep.subr.bf16.mxu0 0
        %1305 = vmatpush1.bf16.msra.mxu0 0
        %1306 = vmatprep.subr.bf16.mxu0 0
        %1307 = vmatpush1.bf16.msra.mxu0 0
        %1308 = vmatprep.subr.bf16.mxu0 0
        %1309 = vmatpush1.bf16.msra.mxu0 0
        %1310 = vmatprep.mubr.bf16.mxu0 0
        %1311 = vmatmul.mubr.bf16.gmra.mrb[0].mxu0 %v595
        %v1312 = vpop.f32.mrb[0].mxu0
        %v1313 = vadd.f32 0.0, %v1312
        %v1314 = vpop.f32.mrb[0].mxu0
        %v1315 = vpop.f32.mrb[0].mxu0
        %v1316 = vadd.f32 0.0, %v1315
        %v1317 = vpop.f32.mrb[0].mxu0
        %1318 = vdwg.mxu0
        %v1319 = vpack.c.bf16 %v1316, %v1313
        %s1320 = smul.addr %s1101, 4
        %s1321 = scalar_lea.vmem %s5, %s1320
        %v1322 = vld [vmem:[%s1321] sm:$0xf]
        %v1323 = vld [vmem:[%s1321 + $0x4] sm:$0xf]
        %v1324 = vld [vmem:[%s1321 + $0x8] sm:$0xf]
        %v1325 = vld [vmem:[%s1321 + $0xc] sm:$0xf]
        %v1326 = vld [vmem:[%s1321 + $0x10] sm:$0xf]
        %v1327 = vld [vmem:[%s1321 + $0x14] sm:$0xf]
        %v1328 = vld [vmem:[%s1321 + $0x18] sm:$0xf]
        %v1329 = vld [vmem:[%s1321 + $0x1c] sm:$0xf]
        %v1330 = vld [vmem:[%s1321 + $0x20] sm:$0xf]
        %v1331 = vld [vmem:[%s1321 + $0x24] sm:$0xf]
        %v1332 = vld [vmem:[%s1321 + $0x28] sm:$0xf]
        %v1333 = vld [vmem:[%s1321 + $0x2c] sm:$0xf]
        %v1334 = vld [vmem:[%s1321 + $0x30] sm:$0xf]
        %v1335 = vld [vmem:[%s1321 + $0x34] sm:$0xf]
        %v1336 = vld [vmem:[%s1321 + $0x38] sm:$0xf]
        %v1337 = vld [vmem:[%s1321 + $0x3c] sm:$0xf]
        %v1354 = vunpack.c.l.b16 %v1322
        %v1355 = vunpack.c.l.b16 %v1323
        %v1356 = vunpack.c.l.b16 %v1324
        %v1357 = vunpack.c.l.b16 %v1325
        %v1358 = vunpack.c.l.b16 %v1326
        %v1359 = vunpack.c.l.b16 %v1327
        %v1360 = vunpack.c.l.b16 %v1328
        %v1361 = vunpack.c.l.b16 %v1329
        %v1362 = vunpack.c.l.b16 %v1330
        %v1363 = vunpack.c.l.b16 %v1331
        %v1364 = vunpack.c.l.b16 %v1332
        %v1365 = vunpack.c.l.b16 %v1333
        %v1366 = vunpack.c.l.b16 %v1334
        %v1367 = vunpack.c.l.b16 %v1335
        %v1368 = vunpack.c.l.b16 %v1336
        %v1369 = vunpack.c.l.b16 %v1337
        %v1370 = vpack.c.b16 %v1355, %v1354
        %v1371 = vpack.c.b16 %v1357, %v1356
        %v1372 = vpack.c.b16 %v1359, %v1358
        %v1373 = vpack.c.b16 %v1361, %v1360
        %v1374 = vpack.c.b16 %v1363, %v1362
        %v1375 = vpack.c.b16 %v1365, %v1364
        %v1376 = vpack.c.b16 %v1367, %v1366
        %v1377 = vpack.c.b16 %v1369, %v1368
        %1386 = vmatprep.subr.bf16.mxu0 0
        %1387 = vmatpush1.bf16.msra.mxu0 %v1370
        %1388 = vmatprep.subr.bf16.mxu0 0
        %1389 = vmatpush1.bf16.msra.mxu0 %v1371
        %1390 = vmatprep.subr.bf16.mxu0 0
        %1391 = vmatpush1.bf16.msra.mxu0 %v1372
        %1392 = vmatprep.subr.bf16.mxu0 0
        %1393 = vmatpush1.bf16.msra.mxu0 %v1373
        %1394 = vmatprep.subr.bf16.mxu0 0
        %1395 = vmatpush1.bf16.msra.mxu0 %v1374
        %1396 = vmatprep.subr.bf16.mxu0 0
        %1397 = vmatpush1.bf16.msra.mxu0 %v1375
        %1398 = vmatprep.subr.bf16.mxu0 0
        %1399 = vmatpush1.bf16.msra.mxu0 %v1376
        %1400 = vmatprep.subr.bf16.mxu0 0
        %1401 = vmatpush1.bf16.msra.mxu0 %v1377
        %1402 = vmatprep.subr.bf16.mxu0 0
        %1403 = vmatpush1.bf16.msra.mxu0 0
        %1404 = vmatprep.subr.bf16.mxu0 0
        %1405 = vmatpush1.bf16.msra.mxu0 0
        %1406 = vmatprep.subr.bf16.mxu0 0
        %1407 = vmatpush1.bf16.msra.mxu0 0
        %1408 = vmatprep.subr.bf16.mxu0 0
        %1409 = vmatpush1.bf16.msra.mxu0 0
        %1410 = vmatprep.subr.bf16.mxu0 0
        %1411 = vmatpush1.bf16.msra.mxu0 0
        %1412 = vmatprep.subr.bf16.mxu0 0
        %1413 = vmatpush1.bf16.msra.mxu0 0
        %1414 = vmatprep.subr.bf16.mxu0 0
        %1415 = vmatpush1.bf16.msra.mxu0 0
        %1416 = vmatprep.subr.bf16.mxu0 0
        %1417 = vmatpush1.bf16.msra.mxu0 0
        %1418 = vmatprep.mubr.bf16.mxu0 0
        %1419 = vmatmul.mubr.bf16.gmra.mrb[0].mxu0 %v595
        %v1420 = vpop.f32.mrb[0].mxu0
        %v1421 = vadd.f32 0.0, %v1420
        %v1422 = vpop.f32.mrb[0].mxu0
        %v1423 = vpop.f32.mrb[0].mxu0
        %v1424 = vadd.f32 0.0, %v1423
        %v1425 = vpop.f32.mrb[0].mxu0
        %1426 = vdwg.mxu0
        %v1427 = vpack.c.bf16 %v1424, %v1421
        %s1428 = smul.u32 %s1100, 4
        %s1429 = smul.addr %s1428, 4
        %s1430 = scalar_lea.vmem %s6, %s1429
        %v1431 = vld [vmem:[%s1430] sm:$0xf]
        %v1432 = vld [vmem:[%s1430 + $0x4] sm:$0xf]
        %v1433 = vld [vmem:[%s1430 + $0x8] sm:$0xf]
        %v1434 = vld [vmem:[%s1430 + $0xc] sm:$0xf]
        %s1435 = sadd.s32 %s933, 1
        %s1436 = sld [smem:[#allocation4 + %s1435]]
        %v1437 = vstv %s1436
        %v1438 = vmul.f32 %v931, %v1437
        %v1439 = vmul.f32 %v932, %v1437
        %s1440 = sadd.s32 %s943, 1
        %s1441 = sld [smem:[#allocation4 + %s1440]]
        %v1442 = vstv %s1441
        %v1443 = vmul.f32 %v939, %v1442
        %v1444 = vmul.f32 %v940, %v1442
        %v1445 = vadd.f32 %v1438, %v1443
        %v1446 = vadd.f32 %v1439, %v1444
        %s1447 = sadd.s32 %s954, 1
        %s1448 = sld [smem:[#allocation4 + %s1447]]
        %v1449 = vstv %s1448
        %v1450 = vmul.f32 %v951, %v1449
        %v1451 = vmul.f32 %v952, %v1449
        %v1452 = vadd.f32 %v1445, %v1450
        %v1453 = vadd.f32 %v1446, %v1451
        %s1454 = sadd.s32 %s965, 1
        %s1455 = sld [smem:[#allocation4 + %s1454]]
        %v1456 = vstv %s1455
        %v1457 = vmul.f32 %v962, %v1456
        %v1458 = vmul.f32 %v963, %v1456
        %v1459 = vadd.f32 %v1452, %v1457
        %v1460 = vadd.f32 %v1453, %v1458
        %s1461 = sadd.s32 %s976, 1
        %s1462 = sld [smem:[#allocation4 + %s1461]]
        %v1463 = vstv %s1462
        %v1464 = vmul.f32 %v973, %v1463
        %v1465 = vmul.f32 %v974, %v1463
        %v1466 = vadd.f32 %v1459, %v1464
        %v1467 = vadd.f32 %v1460, %v1465
        %v1469 = vsel %vm983, %v1211, 0
        %v1472 = vsel %vm983, %v1319, 0
        %1474 = vmatprep.subr.bf16.mxu0 0
        %1475 = vmatpush1.bf16.xpose.msra.mxu0 %v1472
        %1476 = vmatprep.subr.bf16.mxu0 0
        %1477 = vmatpush1.bf16.xpose.msra.mxu0 0
        %1478 = vmatprep.subr.bf16.mxu0 0
        %1479 = vmatpush1.bf16.xpose.msra.mxu0 0
        %1480 = vmatprep.subr.bf16.mxu0 0
        %1481 = vmatpush1.bf16.xpose.msra.mxu0 0
        %1482 = vmatprep.subr.bf16.mxu0 0
        %1483 = vmatpush1.bf16.xpose.msra.mxu0 0
        %1484 = vmatprep.subr.bf16.mxu0 0
        %1485 = vmatpush1.bf16.xpose.msra.mxu0 0
        %1486 = vmatprep.subr.bf16.mxu0 0
        %1487 = vmatpush1.bf16.xpose.msra.mxu0 0
        %1488 = vmatprep.subr.bf16.mxu0 0
        %1489 = vmatpush1.bf16.xpose.msra.mxu0 0
        %1490 = vmatprep.subr.bf16.mxu0 0
        %1491 = vmatpush1.bf16.xpose.msra.mxu0 0
        %1492 = vmatprep.subr.bf16.mxu0 0
        %1493 = vmatpush1.bf16.xpose.msra.mxu0 0
        %1494 = vmatprep.subr.bf16.mxu0 0
        %1495 = vmatpush1.bf16.xpose.msra.mxu0 0
        %1496 = vmatprep.subr.bf16.mxu0 0
        %1497 = vmatpush1.bf16.xpose.msra.mxu0 0
        %1498 = vmatprep.subr.bf16.mxu0 0
        %1499 = vmatpush1.bf16.xpose.msra.mxu0 0
        %1500 = vmatprep.subr.bf16.mxu0 0
        %1501 = vmatpush1.bf16.xpose.msra.mxu0 0
        %1502 = vmatprep.subr.bf16.mxu0 0
        %1503 = vmatpush1.bf16.xpose.msra.mxu0 0
        %1504 = vmatprep.subr.bf16.mxu0 0
        %1505 = vmatpush1.bf16.xpose.msra.mxu0 0
        %1506 = vmatprep.mubr.bf16.mxu0 0
        %1507 = vmatmul.mubr.bf16.gmra.mrb[0].mxu0 %v1469
        %v1508 = vpop.f32.mrb[0].mxu0
        %v1509 = vadd.f32 %v1466, %v1508
        %v1510 = vpop.f32.mrb[0].mxu0
        %v1511 = vpop.f32.mrb[0].mxu0
        %v1512 = vadd.f32 %v1467, %v1511
        %v1513 = vpop.f32.mrb[0].mxu0
        %1514 = vdwg.mxu0
        %v1515 = vsel %vm1031, %v1509, -inf
        %1516 = vmax.xlane.f32.xlu0 %v1515
        %v1517 = vpop.xlane.xlu0 %1516
        %v1518 = vsel %vm1031, %v1512, -inf
        %1519 = vmax.xlane.f32.xlu0 %v1518
        %v1520 = vpop.xlane.xlu0 %1519
        %v1521 = vsub.f32 %v1509, %v1517
        %v1522 = vsub.f32 %v1512, %v1520
        %v1523 = vmul.f32 %v1521, 1.442695
        %v1524 = vpow.pop %v1523
        %v1525 = vmul.f32 %v1522, 1.442695
        %v1526 = vpow.pop %v1525
        %v1527 = vsel %vm1031, %v1524, 0.0
        %1528 = vadd.xlane.f32.xlu0 %v1527
        %v1529 = vpop.xlane.xlu0 %1528
        %v1530 = vsel %vm1031, %v1526, 0.0
        %1531 = vadd.xlane.f32.xlu0 %v1530
        %v1532 = vpop.xlane.xlu0 %1531
        %v1533 = vrcp.pop %v1529
        %v1534 = vrcp.pop %v1532
        %v1535 = vmul.f32 %v1524, %v1533
        %v1536 = vmul.f32 %v1526, %v1534
        %v1537 = vpack.c.bf16 %v1536, %v1535
        %v1539 = vsel %vm1031, %v1537, 0
        %1541 = vmatprep.subr.bf16.mxu0 0
        %1542 = vmatpush1.bf16.msra.mxu0 %v1427
        %1543 = vmatprep.subr.bf16.mxu0 0
        %1544 = vmatpush1.bf16.msra.mxu0 0
        %1545 = vmatprep.subr.bf16.mxu0 0
        %1546 = vmatpush1.bf16.msra.mxu0 0
        %1547 = vmatprep.subr.bf16.mxu0 0
        %1548 = vmatpush1.bf16.msra.mxu0 0
        %1549 = vmatprep.subr.bf16.mxu0 0
        %1550 = vmatpush1.bf16.msra.mxu0 0
        %1551 = vmatprep.subr.bf16.mxu0 0
        %1552 = vmatpush1.bf16.msra.mxu0 0
        %1553 = vmatprep.subr.bf16.mxu0 0
        %1554 = vmatpush1.bf16.msra.mxu0 0
        %1555 = vmatprep.subr.bf16.mxu0 0
        %1556 = vmatpush1.bf16.msra.mxu0 0
        %1557 = vmatprep.subr.bf16.mxu0 0
        %1558 = vmatpush1.bf16.msra.mxu0 0
        %1559 = vmatprep.subr.bf16.mxu0 0
        %1560 = vmatpush1.bf16.msra.mxu0 0
        %1561 = vmatprep.subr.bf16.mxu0 0
        %1562 = vmatpush1.bf16.msra.mxu0 0
        %1563 = vmatprep.subr.bf16.mxu0 0
        %1564 = vmatpush1.bf16.msra.mxu0 0
        %1565 = vmatprep.subr.bf16.mxu0 0
        %1566 = vmatpush1.bf16.msra.mxu0 0
        %1567 = vmatprep.subr.bf16.mxu0 0
        %1568 = vmatpush1.bf16.msra.mxu0 0
        %1569 = vmatprep.subr.bf16.mxu0 0
        %1570 = vmatpush1.bf16.msra.mxu0 0
        %1571 = vmatprep.subr.bf16.mxu0 0
        %1572 = vmatpush1.bf16.msra.mxu0 0
        %1573 = vmatprep.mubr.bf16.mxu0 0
        %1574 = vmatmul.mubr.bf16.gmra.mrb[0].mxu0 %v1539
        %v1575 = vpop.f32.mrb[0].mxu0
        %v1576 = vadd.f32 0.0, %v1575
        %v1577 = vpop.f32.mrb[0].mxu0
        %v1578 = vpop.f32.mrb[0].mxu0
        %v1579 = vadd.f32 0.0, %v1578
        %v1580 = vpop.f32.mrb[0].mxu0
        %1581 = vdwg.mxu0
        %v1582 = vpack.c.bf16 %v1579, %v1576
        %v1587 = vunpack.c.l.b16 %v1431
        %v1588 = vunpack.c.l.b16 %v1432
        %v1589 = vunpack.c.l.b16 %v1433
        %v1590 = vunpack.c.l.b16 %v1434
        %v1591 = vpack.c.b16 %v1588, %v1587
        %v1592 = vpack.c.b16 %v1590, %v1589
        %v1596 = vsel %vm983, %v1582, 0
        %1598 = vmatprep.subr.bf16.mxu0 0
        %1599 = vmatpush1.bf16.msra.mxu0 %v1591
        %1600 = vmatprep.subr.bf16.mxu0 0
        %1601 = vmatpush1.bf16.msra.mxu0 %v1592
        %1602 = vmatprep.subr.bf16.mxu0 0
        %1603 = vmatpush1.bf16.msra.mxu0 0
        %1604 = vmatprep.subr.bf16.mxu0 0
        %1605 = vmatpush1.bf16.msra.mxu0 0
        %1606 = vmatprep.subr.bf16.mxu0 0
        %1607 = vmatpush1.bf16.msra.mxu0 0
        %1608 = vmatprep.subr.bf16.mxu0 0
        %1609 = vmatpush1.bf16.msra.mxu0 0
        %1610 = vmatprep.subr.bf16.mxu0 0
        %1611 = vmatpush1.bf16.msra.mxu0 0
        %1612 = vmatprep.subr.bf16.mxu0 0
        %1613 = vmatpush1.bf16.msra.mxu0 0
        %1614 = vmatprep.subr.bf16.mxu0 0
        %1615 = vmatpush1.bf16.msra.mxu0 0
        %1616 = vmatprep.subr.bf16.mxu0 0
        %1617 = vmatpush1.bf16.msra.mxu0 0
        %1618 = vmatprep.subr.bf16.mxu0 0
        %1619 = vmatpush1.bf16.msra.mxu0 0
        %1620 = vmatprep.subr.bf16.mxu0 0
        %1621 = vmatpush1.bf16.msra.mxu0 0
        %1622 = vmatprep.subr.bf16.mxu0 0
        %1623 = vmatpush1.bf16.msra.mxu0 0
        %1624 = vmatprep.subr.bf16.mxu0 0
        %1625 = vmatpush1.bf16.msra.mxu0 0
        %1626 = vmatprep.subr.bf16.mxu0 0
        %1627 = vmatpush1.bf16.msra.mxu0 0
        %1628 = vmatprep.subr.bf16.mxu0 0
        %1629 = vmatpush1.bf16.msra.mxu0 0
        %1630 = vmatprep.mubr.bf16.mxu0 0
        %1631 = vmatmul.mubr.bf16.gmra.mrb[0].mxu0 %v1596
        %v1632 = vpop.f32.mrb[0].mxu0
        %v1633 = vadd.f32 0.0, %v1632
        %v1634 = vpop.f32.mrb[0].mxu0
        %v1635 = vpop.f32.mrb[0].mxu0
        %v1636 = vadd.f32 0.0, %v1635
        %v1637 = vpop.f32.mrb[0].mxu0
        %1638 = vdwg.mxu0
        %v1643 = vunpack.c.l.b16 %v927
        %v1644 = vunpack.c.l.b16 %v928
        %v1645 = vunpack.c.l.b16 %v929
        %v1646 = vunpack.c.l.b16 %v930
        %v1647 = vpack.c.b16 %v1644, %v1643
        %v1648 = vpack.c.b16 %v1646, %v1645
        %v1652 = vsel %vm983, %v1099, 0
        %1654 = vmatprep.subr.bf16.mxu0 0
        %1655 = vmatpush1.bf16.msra.mxu0 %v1647
        %1656 = vmatprep.subr.bf16.mxu0 0
        %1657 = vmatpush1.bf16.msra.mxu0 %v1648
        %1658 = vmatprep.subr.bf16.mxu0 0
        %1659 = vmatpush1.bf16.msra.mxu0 0
        %1660 = vmatprep.subr.bf16.mxu0 0
        %1661 = vmatpush1.bf16.msra.mxu0 0
        %1662 = vmatprep.subr.bf16.mxu0 0
        %1663 = vmatpush1.bf16.msra.mxu0 0
        %1664 = vmatprep.subr.bf16.mxu0 0
        %1665 = vmatpush1.bf16.msra.mxu0 0
        %1666 = vmatprep.subr.bf16.mxu0 0
        %1667 = vmatpush1.bf16.msra.mxu0 0
        %1668 = vmatprep.subr.bf16.mxu0 0
        %1669 = vmatpush1.bf16.msra.mxu0 0
        %1670 = vmatprep.subr.bf16.mxu0 0
        %1671 = vmatpush1.bf16.msra.mxu0 0
        %1672 = vmatprep.subr.bf16.mxu0 0
        %1673 = vmatpush1.bf16.msra.mxu0 0
        %1674 = vmatprep.subr.bf16.mxu0 0
        %1675 = vmatpush1.bf16.msra.mxu0 0
        %1676 = vmatprep.subr.bf16.mxu0 0
        %1677 = vmatpush1.bf16.msra.mxu0 0
        %1678 = vmatprep.subr.bf16.mxu0 0
        %1679 = vmatpush1.bf16.msra.mxu0 0
        %1680 = vmatprep.subr.bf16.mxu0 0
        %1681 = vmatpush1.bf16.msra.mxu0 0
        %1682 = vmatprep.subr.bf16.mxu0 0
        %1683 = vmatpush1.bf16.msra.mxu0 0
        %1684 = vmatprep.subr.bf16.mxu0 0
        %1685 = vmatpush1.bf16.msra.mxu0 0
        %1686 = vmatprep.mubr.bf16.mxu0 0
        %1687 = vmatmul.mubr.bf16.gmra.mrb[0].mxu0 %v1652
        %v1688 = vpop.f32.mrb[0].mxu0
        %v1689 = vadd.f32 %v1633, %v1688
        %v1690 = vpop.f32.mrb[0].mxu0
        %v1691 = vpop.f32.mrb[0].mxu0
        %v1692 = vadd.f32 %v1636, %v1691
        %v1693 = vpop.f32.mrb[0].mxu0
        %1694 = vdwg.mxu0
        %s1695 = sadd.s32 %s596, 2
        %s1696 = smul.u32 %s1695, 16
        %s1697 = smul.addr %s1696, 4
        %s1698 = scalar_lea.vmem %s3, %s1697
        %v1699 = vld [vmem:[%s1698] sm:$0xf]
        %v1700 = vld [vmem:[%s1698 + $0x4] sm:$0xf]
        %v1701 = vld [vmem:[%s1698 + $0x8] sm:$0xf]
        %v1702 = vld [vmem:[%s1698 + $0xc] sm:$0xf]
        %v1703 = vld [vmem:[%s1698 + $0x10] sm:$0xf]
        %v1704 = vld [vmem:[%s1698 + $0x14] sm:$0xf]
        %v1705 = vld [vmem:[%s1698 + $0x18] sm:$0xf]
        %v1706 = vld [vmem:[%s1698 + $0x1c] sm:$0xf]
        %v1707 = vld [vmem:[%s1698 + $0x20] sm:$0xf]
        %v1708 = vld [vmem:[%s1698 + $0x24] sm:$0xf]
        %v1709 = vld [vmem:[%s1698 + $0x28] sm:$0xf]
        %v1710 = vld [vmem:[%s1698 + $0x2c] sm:$0xf]
        %v1711 = vld [vmem:[%s1698 + $0x30] sm:$0xf]
        %v1712 = vld [vmem:[%s1698 + $0x34] sm:$0xf]
        %v1713 = vld [vmem:[%s1698 + $0x38] sm:$0xf]
        %v1714 = vld [vmem:[%s1698 + $0x3c] sm:$0xf]
        %v1731 = vunpack.c.l.b16 %v1699
        %v1732 = vunpack.c.l.b16 %v1700
        %v1733 = vunpack.c.l.b16 %v1701
        %v1734 = vunpack.c.l.b16 %v1702
        %v1735 = vunpack.c.l.b16 %v1703
        %v1736 = vunpack.c.l.b16 %v1704
        %v1737 = vunpack.c.l.b16 %v1705
        %v1738 = vunpack.c.l.b16 %v1706
        %v1739 = vunpack.c.l.b16 %v1707
        %v1740 = vunpack.c.l.b16 %v1708
        %v1741 = vunpack.c.l.b16 %v1709
        %v1742 = vunpack.c.l.b16 %v1710
        %v1743 = vunpack.c.l.b16 %v1711
        %v1744 = vunpack.c.l.b16 %v1712
        %v1745 = vunpack.c.l.b16 %v1713
        %v1746 = vunpack.c.l.b16 %v1714
        %v1747 = vpack.c.b16 %v1732, %v1731
        %v1748 = vpack.c.b16 %v1734, %v1733
        %v1749 = vpack.c.b16 %v1736, %v1735
        %v1750 = vpack.c.b16 %v1738, %v1737
        %v1751 = vpack.c.b16 %v1740, %v1739
        %v1752 = vpack.c.b16 %v1742, %v1741
        %v1753 = vpack.c.b16 %v1744, %v1743
        %v1754 = vpack.c.b16 %v1746, %v1745
        %1763 = vmatprep.subr.bf16.mxu0 0
        %1764 = vmatpush1.bf16.msra.mxu0 %v1747
        %1765 = vmatprep.subr.bf16.mxu0 0
        %1766 = vmatpush1.bf16.msra.mxu0 %v1748
        %1767 = vmatprep.subr.bf16.mxu0 0
        %1768 = vmatpush1.bf16.msra.mxu0 %v1749
        %1769 = vmatprep.subr.bf16.mxu0 0
        %1770 = vmatpush1.bf16.msra.mxu0 %v1750
        %1771 = vmatprep.subr.bf16.mxu0 0
        %1772 = vmatpush1.bf16.msra.mxu0 %v1751
        %1773 = vmatprep.subr.bf16.mxu0 0
        %1774 = vmatpush1.bf16.msra.mxu0 %v1752
        %1775 = vmatprep.subr.bf16.mxu0 0
        %1776 = vmatpush1.bf16.msra.mxu0 %v1753
        %1777 = vmatprep.subr.bf16.mxu0 0
        %1778 = vmatpush1.bf16.msra.mxu0 %v1754
        %1779 = vmatprep.subr.bf16.mxu0 0
        %1780 = vmatpush1.bf16.msra.mxu0 0
        %1781 = vmatprep.subr.bf16.mxu0 0
        %1782 = vmatpush1.bf16.msra.mxu0 0
        %1783 = vmatprep.subr.bf16.mxu0 0
        %1784 = vmatpush1.bf16.msra.mxu0 0
        %1785 = vmatprep.subr.bf16.mxu0 0
        %1786 = vmatpush1.bf16.msra.mxu0 0
        %1787 = vmatprep.subr.bf16.mxu0 0
        %1788 = vmatpush1.bf16.msra.mxu0 0
        %1789 = vmatprep.subr.bf16.mxu0 0
        %1790 = vmatpush1.bf16.msra.mxu0 0
        %1791 = vmatprep.subr.bf16.mxu0 0
        %1792 = vmatpush1.bf16.msra.mxu0 0
        %1793 = vmatprep.subr.bf16.mxu0 0
        %1794 = vmatpush1.bf16.msra.mxu0 0
        %1795 = vmatprep.mubr.bf16.mxu0 0
        %1796 = vmatmul.mubr.bf16.gmra.mrb[0].mxu0 %v595
        %v1797 = vpop.f32.mrb[0].mxu0
        %v1798 = vadd.f32 0.0, %v1797
        %v1799 = vpop.f32.mrb[0].mxu0
        %v1800 = vpop.f32.mrb[0].mxu0
        %v1801 = vadd.f32 0.0, %v1800
        %v1802 = vpop.f32.mrb[0].mxu0
        %1803 = vdwg.mxu0
        %v1804 = vmul.f32 %v1798, 0.17677669
        %v1805 = vmul.f32 %v1801, 0.17677669
        %v1806 = vpack.c.bf16 %v1805, %v1804
        %s1807 = smul.addr %s1696, 4
        %s1808 = scalar_lea.vmem %s4, %s1807
        %v1809 = vld [vmem:[%s1808] sm:$0xf]
        %v1810 = vld [vmem:[%s1808 + $0x4] sm:$0xf]
        %v1811 = vld [vmem:[%s1808 + $0x8] sm:$0xf]
        %v1812 = vld [vmem:[%s1808 + $0xc] sm:$0xf]
        %v1813 = vld [vmem:[%s1808 + $0x10] sm:$0xf]
        %v1814 = vld [vmem:[%s1808 + $0x14] sm:$0xf]
        %v1815 = vld [vmem:[%s1808 + $0x18] sm:$0xf]
        %v1816 = vld [vmem:[%s1808 + $0x1c] sm:$0xf]
        %v1817 = vld [vmem:[%s1808 + $0x20] sm:$0xf]
        %v1818 = vld [vmem:[%s1808 + $0x24] sm:$0xf]
        %v1819 = vld [vmem:[%s1808 + $0x28] sm:$0xf]
        %v1820 = vld [vmem:[%s1808 + $0x2c] sm:$0xf]
        %v1821 = vld [vmem:[%s1808 + $0x30] sm:$0xf]
        %v1822 = vld [vmem:[%s1808 + $0x34] sm:$0xf]
        %v1823 = vld [vmem:[%s1808 + $0x38] sm:$0xf]
        %v1824 = vld [vmem:[%s1808 + $0x3c] sm:$0xf]
        %v1841 = vunpack.c.l.b16 %v1809
        %v1842 = vunpack.c.l.b16 %v1810
        %v1843 = vunpack.c.l.b16 %v1811
        %v1844 = vunpack.c.l.b16 %v1812
        %v1845 = vunpack.c.l.b16 %v1813
        %v1846 = vunpack.c.l.b16 %v1814
        %v1847 = vunpack.c.l.b16 %v1815
        %v1848 = vunpack.c.l.b16 %v1816
        %v1849 = vunpack.c.l.b16 %v1817
        %v1850 = vunpack.c.l.b16 %v1818
        %v1851 = vunpack.c.l.b16 %v1819
        %v1852 = vunpack.c.l.b16 %v1820
        %v1853 = vunpack.c.l.b16 %v1821
        %v1854 = vunpack.c.l.b16 %v1822
        %v1855 = vunpack.c.l.b16 %v1823
        %v1856 = vunpack.c.l.b16 %v1824
        %v1857 = vpack.c.b16 %v1842, %v1841
        %v1858 = vpack.c.b16 %v1844, %v1843
        %v1859 = vpack.c.b16 %v1846, %v1845
        %v1860 = vpack.c.b16 %v1848, %v1847
        %v1861 = vpack.c.b16 %v1850, %v1849
        %v1862 = vpack.c.b16 %v1852, %v1851
        %v1863 = vpack.c.b16 %v1854, %v1853
        %v1864 = vpack.c.b16 %v1856, %v1855
        %1873 = vmatprep.subr.bf16.mxu0 0
        %1874 = vmatpush1.bf16.msra.mxu0 %v1857
        %1875 = vmatprep.subr.bf16.mxu0 0
        %1876 = vmatpush1.bf16.msra.mxu0 %v1858
        %1877 = vmatprep.subr.bf16.mxu0 0
        %1878 = vmatpush1.bf16.msra.mxu0 %v1859
        %1879 = vmatprep.subr.bf16.mxu0 0
        %1880 = vmatpush1.bf16.msra.mxu0 %v1860
        %1881 = vmatprep.subr.bf16.mxu0 0
        %1882 = vmatpush1.bf16.msra.mxu0 %v1861
        %1883 = vmatprep.subr.bf16.mxu0 0
        %1884 = vmatpush1.bf16.msra.mxu0 %v1862
        %1885 = vmatprep.subr.bf16.mxu0 0
        %1886 = vmatpush1.bf16.msra.mxu0 %v1863
        %1887 = vmatprep.subr.bf16.mxu0 0
        %1888 = vmatpush1.bf16.msra.mxu0 %v1864
        %1889 = vmatprep.subr.bf16.mxu0 0
        %1890 = vmatpush1.bf16.msra.mxu0 0
        %1891 = vmatprep.subr.bf16.mxu0 0
        %1892 = vmatpush1.bf16.msra.mxu0 0
        %1893 = vmatprep.subr.bf16.mxu0 0
        %1894 = vmatpush1.bf16.msra.mxu0 0
        %1895 = vmatprep.subr.bf16.mxu0 0
        %1896 = vmatpush1.bf16.msra.mxu0 0
        %1897 = vmatprep.subr.bf16.mxu0 0
        %1898 = vmatpush1.bf16.msra.mxu0 0
        %1899 = vmatprep.subr.bf16.mxu0 0
        %1900 = vmatpush1.bf16.msra.mxu0 0
        %1901 = vmatprep.subr.bf16.mxu0 0
        %1902 = vmatpush1.bf16.msra.mxu0 0
        %1903 = vmatprep.subr.bf16.mxu0 0
        %1904 = vmatpush1.bf16.msra.mxu0 0
        %1905 = vmatprep.mubr.bf16.mxu0 0
        %1906 = vmatmul.mubr.bf16.gmra.mrb[0].mxu0 %v595
        %v1907 = vpop.f32.mrb[0].mxu0
        %v1908 = vadd.f32 0.0, %v1907
        %v1909 = vpop.f32.mrb[0].mxu0
        %v1910 = vpop.f32.mrb[0].mxu0
        %v1911 = vadd.f32 0.0, %v1910
        %v1912 = vpop.f32.mrb[0].mxu0
        %1913 = vdwg.mxu0
        %v1914 = vpack.c.bf16 %v1911, %v1908
        %s1915 = smul.addr %s1696, 4
        %s1916 = scalar_lea.vmem %s5, %s1915
        %v1917 = vld [vmem:[%s1916] sm:$0xf]
        %v1918 = vld [vmem:[%s1916 + $0x4] sm:$0xf]
        %v1919 = vld [vmem:[%s1916 + $0x8] sm:$0xf]
        %v1920 = vld [vmem:[%s1916 + $0xc] sm:$0xf]
        %v1921 = vld [vmem:[%s1916 + $0x10] sm:$0xf]
        %v1922 = vld [vmem:[%s1916 + $0x14] sm:$0xf]
        %v1923 = vld [vmem:[%s1916 + $0x18] sm:$0xf]
        %v1924 = vld [vmem:[%s1916 + $0x1c] sm:$0xf]
        %v1925 = vld [vmem:[%s1916 + $0x20] sm:$0xf]
        %v1926 = vld [vmem:[%s1916 + $0x24] sm:$0xf]
        %v1927 = vld [vmem:[%s1916 + $0x28] sm:$0xf]
        %v1928 = vld [vmem:[%s1916 + $0x2c] sm:$0xf]
        %v1929 = vld [vmem:[%s1916 + $0x30] sm:$0xf]
        %v1930 = vld [vmem:[%s1916 + $0x34] sm:$0xf]
        %v1931 = vld [vmem:[%s1916 + $0x38] sm:$0xf]
        %v1932 = vld [vmem:[%s1916 + $0x3c] sm:$0xf]
        %v1949 = vunpack.c.l.b16 %v1917
        %v1950 = vunpack.c.l.b16 %v1918
        %v1951 = vunpack.c.l.b16 %v1919
        %v1952 = vunpack.c.l.b16 %v1920
        %v1953 = vunpack.c.l.b16 %v1921
        %v1954 = vunpack.c.l.b16 %v1922
        %v1955 = vunpack.c.l.b16 %v1923
        %v1956 = vunpack.c.l.b16 %v1924
        %v1957 = vunpack.c.l.b16 %v1925
        %v1958 = vunpack.c.l.b16 %v1926
        %v1959 = vunpack.c.l.b16 %v1927
        %v1960 = vunpack.c.l.b16 %v1928
        %v1961 = vunpack.c.l.b16 %v1929
        %v1962 = vunpack.c.l.b16 %v1930
        %v1963 = vunpack.c.l.b16 %v1931
        %v1964 = vunpack.c.l.b16 %v1932
        %v1965 = vpack.c.b16 %v1950, %v1949
        %v1966 = vpack.c.b16 %v1952, %v1951
        %v1967 = vpack.c.b16 %v1954, %v1953
        %v1968 = vpack.c.b16 %v1956, %v1955
        %v1969 = vpack.c.b16 %v1958, %v1957
        %v1970 = vpack.c.b16 %v1960, %v1959
        %v1971 = vpack.c.b16 %v1962, %v1961
        %v1972 = vpack.c.b16 %v1964, %v1963
        %1981 = vmatprep.subr.bf16.mxu0 0
        %1982 = vmatpush1.bf16.msra.mxu0 %v1965
        %1983 = vmatprep.subr.bf16.mxu0 0
        %1984 = vmatpush1.bf16.msra.mxu0 %v1966
        %1985 = vmatprep.subr.bf16.mxu0 0
        %1986 = vmatpush1.bf16.msra.mxu0 %v1967
        %1987 = vmatprep.subr.bf16.mxu0 0
        %1988 = vmatpush1.bf16.msra.mxu0 %v1968
        %1989 = vmatprep.subr.bf16.mxu0 0
        %1990 = vmatpush1.bf16.msra.mxu0 %v1969
        %1991 = vmatprep.subr.bf16.mxu0 0
        %1992 = vmatpush1.bf16.msra.mxu0 %v1970
        %1993 = vmatprep.subr.bf16.mxu0 0
        %1994 = vmatpush1.bf16.msra.mxu0 %v1971
        %1995 = vmatprep.subr.bf16.mxu0 0
        %1996 = vmatpush1.bf16.msra.mxu0 %v1972
        %1997 = vmatprep.subr.bf16.mxu0 0
        %1998 = vmatpush1.bf16.msra.mxu0 0
        %1999 = vmatprep.subr.bf16.mxu0 0
        %2000 = vmatpush1.bf16.msra.mxu0 0
        %2001 = vmatprep.subr.bf16.mxu0 0
        %2002 = vmatpush1.bf16.msra.mxu0 0
        %2003 = vmatprep.subr.bf16.mxu0 0
        %2004 = vmatpush1.bf16.msra.mxu0 0
        %2005 = vmatprep.subr.bf16.mxu0 0
        %2006 = vmatpush1.bf16.msra.mxu0 0
        %2007 = vmatprep.subr.bf16.mxu0 0
        %2008 = vmatpush1.bf16.msra.mxu0 0
        %2009 = vmatprep.subr.bf16.mxu0 0
        %2010 = vmatpush1.bf16.msra.mxu0 0
        %2011 = vmatprep.subr.bf16.mxu0 0
        %2012 = vmatpush1.bf16.msra.mxu0 0
        %2013 = vmatprep.mubr.bf16.mxu0 0
        %2014 = vmatmul.mubr.bf16.gmra.mrb[0].mxu0 %v595
        %v2015 = vpop.f32.mrb[0].mxu0
        %v2016 = vadd.f32 0.0, %v2015
        %v2017 = vpop.f32.mrb[0].mxu0
        %v2018 = vpop.f32.mrb[0].mxu0
        %v2019 = vadd.f32 0.0, %v2018
        %v2020 = vpop.f32.mrb[0].mxu0
        %2021 = vdwg.mxu0
        %v2022 = vpack.c.bf16 %v2019, %v2016
        %s2023 = smul.u32 %s1695, 4
        %s2024 = smul.addr %s2023, 4
        %s2025 = scalar_lea.vmem %s6, %s2024
        %v2026 = vld [vmem:[%s2025] sm:$0xf]
        %v2027 = vld [vmem:[%s2025 + $0x4] sm:$0xf]
        %v2028 = vld [vmem:[%s2025 + $0x8] sm:$0xf]
        %v2029 = vld [vmem:[%s2025 + $0xc] sm:$0xf]
        %s2030 = sadd.s32 %s933, 2
        %s2031 = sld [smem:[#allocation4 + %s2030]]
        %v2032 = vstv %s2031
        %v2033 = vmul.f32 %v931, %v2032
        %v2034 = vmul.f32 %v932, %v2032
        %s2035 = sadd.s32 %s943, 2
        %s2036 = sld [smem:[#allocation4 + %s2035]]
        %v2037 = vstv %s2036
        %v2038 = vmul.f32 %v939, %v2037
        %v2039 = vmul.f32 %v940, %v2037
        %v2040 = vadd.f32 %v2033, %v2038
        %v2041 = vadd.f32 %v2034, %v2039
        %s2042 = sadd.s32 %s954, 2
        %s2043 = sld [smem:[#allocation4 + %s2042]]
        %v2044 = vstv %s2043
        %v2045 = vmul.f32 %v951, %v2044
        %v2046 = vmul.f32 %v952, %v2044
        %v2047 = vadd.f32 %v2040, %v2045
        %v2048 = vadd.f32 %v2041, %v2046
        %s2049 = sadd.s32 %s965, 2
        %s2050 = sld [smem:[#allocation4 + %s2049]]
        %v2051 = vstv %s2050
        %v2052 = vmul.f32 %v962, %v2051
        %v2053 = vmul.f32 %v963, %v2051
        %v2054 = vadd.f32 %v2047, %v2052
        %v2055 = vadd.f32 %v2048, %v2053
        %s2056 = sadd.s32 %s976, 2
        %s2057 = sld [smem:[#allocation4 + %s2056]]
        %v2058 = vstv %s2057
        %v2059 = vmul.f32 %v973, %v2058
        %v2060 = vmul.f32 %v974, %v2058
        %v2061 = vadd.f32 %v2054, %v2059
        %v2062 = vadd.f32 %v2055, %v2060
        %v2064 = vsel %vm983, %v1806, 0
        %v2067 = vsel %vm983, %v1914, 0
        %2069 = vmatprep.subr.bf16.mxu0 0
        %2070 = vmatpush1.bf16.xpose.msra.mxu0 %v2067
        %2071 = vmatprep.subr.bf16.mxu0 0
        %2072 = vmatpush1.bf16.xpose.msra.mxu0 0
        %2073 = vmatprep.subr.bf16.mxu0 0
        %2074 = vmatpush1.bf16.xpose.msra.mxu0 0
        %2075 = vmatprep.subr.bf16.mxu0 0
        %2076 = vmatpush1.bf16.xpose.msra.mxu0 0
        %2077 = vmatprep.subr.bf16.mxu0 0
        %2078 = vmatpush1.bf16.xpose.msra.mxu0 0
        %2079 = vmatprep.subr.bf16.mxu0 0
        %2080 = vmatpush1.bf16.xpose.msra.mxu0 0
        %2081 = vmatprep.subr.bf16.mxu0 0
        %2082 = vmatpush1.bf16.xpose.msra.mxu0 0
        %2083 = vmatprep.subr.bf16.mxu0 0
        %2084 = vmatpush1.bf16.xpose.msra.mxu0 0
        %2085 = vmatprep.subr.bf16.mxu0 0
        %2086 = vmatpush1.bf16.xpose.msra.mxu0 0
        %2087 = vmatprep.subr.bf16.mxu0 0
        %2088 = vmatpush1.bf16.xpose.msra.mxu0 0
        %2089 = vmatprep.subr.bf16.mxu0 0
        %2090 = vmatpush1.bf16.xpose.msra.mxu0 0
        %2091 = vmatprep.subr.bf16.mxu0 0
        %2092 = vmatpush1.bf16.xpose.msra.mxu0 0
        %2093 = vmatprep.subr.bf16.mxu0 0
        %2094 = vmatpush1.bf16.xpose.msra.mxu0 0
        %2095 = vmatprep.subr.bf16.mxu0 0
        %2096 = vmatpush1.bf16.xpose.msra.mxu0 0
        %2097 = vmatprep.subr.bf16.mxu0 0
        %2098 = vmatpush1.bf16.xpose.msra.mxu0 0
        %2099 = vmatprep.subr.bf16.mxu0 0
        %2100 = vmatpush1.bf16.xpose.msra.mxu0 0
        %2101 = vmatprep.mubr.bf16.mxu0 0
        %2102 = vmatmul.mubr.bf16.gmra.mrb[0].mxu0 %v2064
        %v2103 = vpop.f32.mrb[0].mxu0
        %v2104 = vadd.f32 %v2061, %v2103
        %v2105 = vpop.f32.mrb[0].mxu0
        %v2106 = vpop.f32.mrb[0].mxu0
        %v2107 = vadd.f32 %v2062, %v2106
        %v2108 = vpop.f32.mrb[0].mxu0
        %2109 = vdwg.mxu0
        %v2110 = vsel %vm1031, %v2104, -inf
        %2111 = vmax.xlane.f32.xlu0 %v2110
        %v2112 = vpop.xlane.xlu0 %2111
        %v2113 = vsel %vm1031, %v2107, -inf
        %2114 = vmax.xlane.f32.xlu0 %v2113
        %v2115 = vpop.xlane.xlu0 %2114
        %v2116 = vsub.f32 %v2104, %v2112
        %v2117 = vsub.f32 %v2107, %v2115
        %v2118 = vmul.f32 %v2116, 1.442695
        %v2119 = vpow.pop %v2118
        %v2120 = vmul.f32 %v2117, 1.442695
        %v2121 = vpow.pop %v2120
        %v2122 = vsel %vm1031, %v2119, 0.0
        %2123 = vadd.xlane.f32.xlu0 %v2122
        %v2124 = vpop.xlane.xlu0 %2123
        %v2125 = vsel %vm1031, %v2121, 0.0
        %2126 = vadd.xlane.f32.xlu0 %v2125
        %v2127 = vpop.xlane.xlu0 %2126
        %v2128 = vrcp.pop %v2124
        %v2129 = vrcp.pop %v2127
        %v2130 = vmul.f32 %v2119, %v2128
        %v2131 = vmul.f32 %v2121, %v2129
        %v2132 = vpack.c.bf16 %v2131, %v2130
        %v2134 = vsel %vm1031, %v2132, 0
        %2136 = vmatprep.subr.bf16.mxu0 0
        %2137 = vmatpush1.bf16.msra.mxu0 %v2022
        %2138 = vmatprep.subr.bf16.mxu0 0
        %2139 = vmatpush1.bf16.msra.mxu0 0
        %2140 = vmatprep.subr.bf16.mxu0 0
        %2141 = vmatpush1.bf16.msra.mxu0 0
        %2142 = vmatprep.subr.bf16.mxu0 0
        %2143 = vmatpush1.bf16.msra.mxu0 0
        %2144 = vmatprep.subr.bf16.mxu0 0
        %2145 = vmatpush1.bf16.msra.mxu0 0
        %2146 = vmatprep.subr.bf16.mxu0 0
        %2147 = vmatpush1.bf16.msra.mxu0 0
        %2148 = vmatprep.subr.bf16.mxu0 0
        %2149 = vmatpush1.bf16.msra.mxu0 0
        %2150 = vmatprep.subr.bf16.mxu0 0
        %2151 = vmatpush1.bf16.msra.mxu0 0
        %2152 = vmatprep.subr.bf16.mxu0 0
        %2153 = vmatpush1.bf16.msra.mxu0 0
        %2154 = vmatprep.subr.bf16.mxu0 0
        %2155 = vmatpush1.bf16.msra.mxu0 0
        %2156 = vmatprep.subr.bf16.mxu0 0
        %2157 = vmatpush1.bf16.msra.mxu0 0
        %2158 = vmatprep.subr.bf16.mxu0 0
        %2159 = vmatpush1.bf16.msra.mxu0 0
        %2160 = vmatprep.subr.bf16.mxu0 0
        %2161 = vmatpush1.bf16.msra.mxu0 0
        %2162 = vmatprep.subr.bf16.mxu0 0
        %2163 = vmatpush1.bf16.msra.mxu0 0
        %2164 = vmatprep.subr.bf16.mxu0 0
        %2165 = vmatpush1.bf16.msra.mxu0 0
        %2166 = vmatprep.subr.bf16.mxu0 0
        %2167 = vmatpush1.bf16.msra.mxu0 0
        %2168 = vmatprep.mubr.bf16.mxu0 0
        %2169 = vmatmul.mubr.bf16.gmra.mrb[0].mxu0 %v2134
        %v2170 = vpop.f32.mrb[0].mxu0
        %v2171 = vadd.f32 0.0, %v2170
        %v2172 = vpop.f32.mrb[0].mxu0
        %v2173 = vpop.f32.mrb[0].mxu0
        %v2174 = vadd.f32 0.0, %v2173
        %v2175 = vpop.f32.mrb[0].mxu0
        %2176 = vdwg.mxu0
        %v2177 = vpack.c.bf16 %v2174, %v2171
        %v2182 = vunpack.c.l.b16 %v2026
        %v2183 = vunpack.c.l.b16 %v2027
        %v2184 = vunpack.c.l.b16 %v2028
        %v2185 = vunpack.c.l.b16 %v2029
        %v2186 = vpack.c.b16 %v2183, %v2182
        %v2187 = vpack.c.b16 %v2185, %v2184
        %v2191 = vsel %vm983, %v2177, 0
        %2193 = vmatprep.subr.bf16.mxu0 0
        %2194 = vmatpush1.bf16.msra.mxu0 %v2186
        %2195 = vmatprep.subr.bf16.mxu0 0
        %2196 = vmatpush1.bf16.msra.mxu0 %v2187
        %2197 = vmatprep.subr.bf16.mxu0 0
        %2198 = vmatpush1.bf16.msra.mxu0 0
        %2199 = vmatprep.subr.bf16.mxu0 0
        %2200 = vmatpush1.bf16.msra.mxu0 0
        %2201 = vmatprep.subr.bf16.mxu0 0
        %2202 = vmatpush1.bf16.msra.mxu0 0
        %2203 = vmatprep.subr.bf16.mxu0 0
        %2204 = vmatpush1.bf16.msra.mxu0 0
        %2205 = vmatprep.subr.bf16.mxu0 0
        %2206 = vmatpush1.bf16.msra.mxu0 0
        %2207 = vmatprep.subr.bf16.mxu0 0
        %2208 = vmatpush1.bf16.msra.mxu0 0
        %2209 = vmatprep.subr.bf16.mxu0 0
        %2210 = vmatpush1.bf16.msra.mxu0 0
        %2211 = vmatprep.subr.bf16.mxu0 0
        %2212 = vmatpush1.bf16.msra.mxu0 0
        %2213 = vmatprep.subr.bf16.mxu0 0
        %2214 = vmatpush1.bf16.msra.mxu0 0
        %2215 = vmatprep.subr.bf16.mxu0 0
        %2216 = vmatpush1.bf16.msra.mxu0 0
        %2217 = vmatprep.subr.bf16.mxu0 0
        %2218 = vmatpush1.bf16.msra.mxu0 0
        %2219 = vmatprep.subr.bf16.mxu0 0
        %2220 = vmatpush1.bf16.msra.mxu0 0
        %2221 = vmatprep.subr.bf16.mxu0 0
        %2222 = vmatpush1.bf16.msra.mxu0 0
        %2223 = vmatprep.subr.bf16.mxu0 0
        %2224 = vmatpush1.bf16.msra.mxu0 0
        %2225 = vmatprep.mubr.bf16.mxu0 0
        %2226 = vmatmul.mubr.bf16.gmra.mrb[0].mxu0 %v2191
        %v2227 = vpop.f32.mrb[0].mxu0
        %v2228 = vadd.f32 0.0, %v2227
        %v2229 = vpop.f32.mrb[0].mxu0
        %v2230 = vpop.f32.mrb[0].mxu0
        %v2231 = vadd.f32 0.0, %v2230
        %v2232 = vpop.f32.mrb[0].mxu0
        %2233 = vdwg.mxu0
        %v2234 = vadd.f32 %v1689, %v2228
        %v2235 = vadd.f32 %v1692, %v2231
        %s2236 = sadd.s32 %s596, 3
        %s2237 = smul.u32 %s2236, 16
        %s2238 = smul.addr %s2237, 4
        %s2239 = scalar_lea.vmem %s3, %s2238
        %v2240 = vld [vmem:[%s2239] sm:$0xf]
        %v2241 = vld [vmem:[%s2239 + $0x4] sm:$0xf]
        %v2242 = vld [vmem:[%s2239 + $0x8] sm:$0xf]
        %v2243 = vld [vmem:[%s2239 + $0xc] sm:$0xf]
        %v2244 = vld [vmem:[%s2239 + $0x10] sm:$0xf]
        %v2245 = vld [vmem:[%s2239 + $0x14] sm:$0xf]
        %v2246 = vld [vmem:[%s2239 + $0x18] sm:$0xf]
        %v2247 = vld [vmem:[%s2239 + $0x1c] sm:$0xf]
        %v2248 = vld [vmem:[%s2239 + $0x20] sm:$0xf]
        %v2249 = vld [vmem:[%s2239 + $0x24] sm:$0xf]
        %v2250 = vld [vmem:[%s2239 + $0x28] sm:$0xf]
        %v2251 = vld [vmem:[%s2239 + $0x2c] sm:$0xf]
        %v2252 = vld [vmem:[%s2239 + $0x30] sm:$0xf]
        %v2253 = vld [vmem:[%s2239 + $0x34] sm:$0xf]
        %v2254 = vld [vmem:[%s2239 + $0x38] sm:$0xf]
        %v2255 = vld [vmem:[%s2239 + $0x3c] sm:$0xf]
        %v2272 = vunpack.c.l.b16 %v2240
        %v2273 = vunpack.c.l.b16 %v2241
        %v2274 = vunpack.c.l.b16 %v2242
        %v2275 = vunpack.c.l.b16 %v2243
        %v2276 = vunpack.c.l.b16 %v2244
        %v2277 = vunpack.c.l.b16 %v2245
        %v2278 = vunpack.c.l.b16 %v2246
        %v2279 = vunpack.c.l.b16 %v2247
        %v2280 = vunpack.c.l.b16 %v2248
        %v2281 = vunpack.c.l.b16 %v2249
        %v2282 = vunpack.c.l.b16 %v2250
        %v2283 = vunpack.c.l.b16 %v2251
        %v2284 = vunpack.c.l.b16 %v2252
        %v2285 = vunpack.c.l.b16 %v2253
        %v2286 = vunpack.c.l.b16 %v2254
        %v2287 = vunpack.c.l.b16 %v2255
        %v2288 = vpack.c.b16 %v2273, %v2272
        %v2289 = vpack.c.b16 %v2275, %v2274
        %v2290 = vpack.c.b16 %v2277, %v2276
        %v2291 = vpack.c.b16 %v2279, %v2278
        %v2292 = vpack.c.b16 %v2281, %v2280
        %v2293 = vpack.c.b16 %v2283, %v2282
        %v2294 = vpack.c.b16 %v2285, %v2284
        %v2295 = vpack.c.b16 %v2287, %v2286
        %2304 = vmatprep.subr.bf16.mxu0 0
        %2305 = vmatpush1.bf16.msra.mxu0 %v2288
        %2306 = vmatprep.subr.bf16.mxu0 0
        %2307 = vmatpush1.bf16.msra.mxu0 %v2289
        %2308 = vmatprep.subr.bf16.mxu0 0
        %2309 = vmatpush1.bf16.msra.mxu0 %v2290
        %2310 = vmatprep.subr.bf16.mxu0 0
        %2311 = vmatpush1.bf16.msra.mxu0 %v2291
        %2312 = vmatprep.subr.bf16.mxu0 0
        %2313 = vmatpush1.bf16.msra.mxu0 %v2292
        %2314 = vmatprep.subr.bf16.mxu0 0
        %2315 = vmatpush1.bf16.msra.mxu0 %v2293
        %2316 = vmatprep.subr.bf16.mxu0 0
        %2317 = vmatpush1.bf16.msra.mxu0 %v2294
        %2318 = vmatprep.subr.bf16.mxu0 0
        %2319 = vmatpush1.bf16.msra.mxu0 %v2295
        %2320 = vmatprep.subr.bf16.mxu0 0
        %2321 = vmatpush1.bf16.msra.mxu0 0
        %2322 = vmatprep.subr.bf16.mxu0 0
        %2323 = vmatpush1.bf16.msra.mxu0 0
        %2324 = vmatprep.subr.bf16.mxu0 0
        %2325 = vmatpush1.bf16.msra.mxu0 0
        %2326 = vmatprep.subr.bf16.mxu0 0
        %2327 = vmatpush1.bf16.msra.mxu0 0
        %2328 = vmatprep.subr.bf16.mxu0 0
        %2329 = vmatpush1.bf16.msra.mxu0 0
        %2330 = vmatprep.subr.bf16.mxu0 0
        %2331 = vmatpush1.bf16.msra.mxu0 0
        %2332 = vmatprep.subr.bf16.mxu0 0
        %2333 = vmatpush1.bf16.msra.mxu0 0
        %2334 = vmatprep.subr.bf16.mxu0 0
        %2335 = vmatpush1.bf16.msra.mxu0 0
        %2336 = vmatprep.mubr.bf16.mxu0 0
        %2337 = vmatmul.mubr.bf16.gmra.mrb[0].mxu0 %v595
        %v2338 = vpop.f32.mrb[0].mxu0
        %v2339 = vadd.f32 0.0, %v2338
        %v2340 = vpop.f32.mrb[0].mxu0
        %v2341 = vpop.f32.mrb[0].mxu0
        %v2342 = vadd.f32 0.0, %v2341
        %v2343 = vpop.f32.mrb[0].mxu0
        %2344 = vdwg.mxu0
        %v2345 = vmul.f32 %v2339, 0.17677669
        %v2346 = vmul.f32 %v2342, 0.17677669
        %v2347 = vpack.c.bf16 %v2346, %v2345
        %s2348 = smul.addr %s2237, 4
        %s2349 = scalar_lea.vmem %s4, %s2348
        %v2350 = vld [vmem:[%s2349] sm:$0xf]
        %v2351 = vld [vmem:[%s2349 + $0x4] sm:$0xf]
        %v2352 = vld [vmem:[%s2349 + $0x8] sm:$0xf]
        %v2353 = vld [vmem:[%s2349 + $0xc] sm:$0xf]
        %v2354 = vld [vmem:[%s2349 + $0x10] sm:$0xf]
        %v2355 = vld [vmem:[%s2349 + $0x14] sm:$0xf]
        %v2356 = vld [vmem:[%s2349 + $0x18] sm:$0xf]
        %v2357 = vld [vmem:[%s2349 + $0x1c] sm:$0xf]
        %v2358 = vld [vmem:[%s2349 + $0x20] sm:$0xf]
        %v2359 = vld [vmem:[%s2349 + $0x24] sm:$0xf]
        %v2360 = vld [vmem:[%s2349 + $0x28] sm:$0xf]
        %v2361 = vld [vmem:[%s2349 + $0x2c] sm:$0xf]
        %v2362 = vld [vmem:[%s2349 + $0x30] sm:$0xf]
        %v2363 = vld [vmem:[%s2349 + $0x34] sm:$0xf]
        %v2364 = vld [vmem:[%s2349 + $0x38] sm:$0xf]
        %v2365 = vld [vmem:[%s2349 + $0x3c] sm:$0xf]
        %v2382 = vunpack.c.l.b16 %v2350
        %v2383 = vunpack.c.l.b16 %v2351
        %v2384 = vunpack.c.l.b16 %v2352
        %v2385 = vunpack.c.l.b16 %v2353
        %v2386 = vunpack.c.l.b16 %v2354
        %v2387 = vunpack.c.l.b16 %v2355
        %v2388 = vunpack.c.l.b16 %v2356
        %v2389 = vunpack.c.l.b16 %v2357
        %v2390 = vunpack.c.l.b16 %v2358
        %v2391 = vunpack.c.l.b16 %v2359
        %v2392 = vunpack.c.l.b16 %v2360
        %v2393 = vunpack.c.l.b16 %v2361
        %v2394 = vunpack.c.l.b16 %v2362
        %v2395 = vunpack.c.l.b16 %v2363
        %v2396 = vunpack.c.l.b16 %v2364
        %v2397 = vunpack.c.l.b16 %v2365
        %v2398 = vpack.c.b16 %v2383, %v2382
        %v2399 = vpack.c.b16 %v2385, %v2384
        %v2400 = vpack.c.b16 %v2387, %v2386
        %v2401 = vpack.c.b16 %v2389, %v2388
        %v2402 = vpack.c.b16 %v2391, %v2390
        %v2403 = vpack.c.b16 %v2393, %v2392
        %v2404 = vpack.c.b16 %v2395, %v2394
        %v2405 = vpack.c.b16 %v2397, %v2396
        %2414 = vmatprep.subr.bf16.mxu0 0
        %2415 = vmatpush1.bf16.msra.mxu0 %v2398
        %2416 = vmatprep.subr.bf16.mxu0 0
        %2417 = vmatpush1.bf16.msra.mxu0 %v2399
        %2418 = vmatprep.subr.bf16.mxu0 0
        %2419 = vmatpush1.bf16.msra.mxu0 %v2400
        %2420 = vmatprep.subr.bf16.mxu0 0
        %2421 = vmatpush1.bf16.msra.mxu0 %v2401
        %2422 = vmatprep.subr.bf16.mxu0 0
        %2423 = vmatpush1.bf16.msra.mxu0 %v2402
        %2424 = vmatprep.subr.bf16.mxu0 0
        %2425 = vmatpush1.bf16.msra.mxu0 %v2403
        %2426 = vmatprep.subr.bf16.mxu0 0
        %2427 = vmatpush1.bf16.msra.mxu0 %v2404
        %2428 = vmatprep.subr.bf16.mxu0 0
        %2429 = vmatpush1.bf16.msra.mxu0 %v2405
        %2430 = vmatprep.subr.bf16.mxu0 0
        %2431 = vmatpush1.bf16.msra.mxu0 0
        %2432 = vmatprep.subr.bf16.mxu0 0
        %2433 = vmatpush1.bf16.msra.mxu0 0
        %2434 = vmatprep.subr.bf16.mxu0 0
        %2435 = vmatpush1.bf16.msra.mxu0 0
        %2436 = vmatprep.subr.bf16.mxu0 0
        %2437 = vmatpush1.bf16.msra.mxu0 0
        %2438 = vmatprep.subr.bf16.mxu0 0
        %2439 = vmatpush1.bf16.msra.mxu0 0
        %2440 = vmatprep.subr.bf16.mxu0 0
        %2441 = vmatpush1.bf16.msra.mxu0 0
        %2442 = vmatprep.subr.bf16.mxu0 0
        %2443 = vmatpush1.bf16.msra.mxu0 0
        %2444 = vmatprep.subr.bf16.mxu0 0
        %2445 = vmatpush1.bf16.msra.mxu0 0
        %2446 = vmatprep.mubr.bf16.mxu0 0
        %2447 = vmatmul.mubr.bf16.gmra.mrb[0].mxu0 %v595
        %v2448 = vpop.f32.mrb[0].mxu0
        %v2449 = vadd.f32 0.0, %v2448
        %v2450 = vpop.f32.mrb[0].mxu0
        %v2451 = vpop.f32.mrb[0].mxu0
        %v2452 = vadd.f32 0.0, %v2451
        %v2453 = vpop.f32.mrb[0].mxu0
        %2454 = vdwg.mxu0
        %v2455 = vpack.c.bf16 %v2452, %v2449
        %s2456 = smul.addr %s2237, 4
        %s2457 = scalar_lea.vmem %s5, %s2456
        %v2458 = vld [vmem:[%s2457] sm:$0xf]
        %v2459 = vld [vmem:[%s2457 + $0x4] sm:$0xf]
        %v2460 = vld [vmem:[%s2457 + $0x8] sm:$0xf]
        %v2461 = vld [vmem:[%s2457 + $0xc] sm:$0xf]
        %v2462 = vld [vmem:[%s2457 + $0x10] sm:$0xf]
        %v2463 = vld [vmem:[%s2457 + $0x14] sm:$0xf]
        %v2464 = vld [vmem:[%s2457 + $0x18] sm:$0xf]
        %v2465 = vld [vmem:[%s2457 + $0x1c] sm:$0xf]
        %v2466 = vld [vmem:[%s2457 + $0x20] sm:$0xf]
        %v2467 = vld [vmem:[%s2457 + $0x24] sm:$0xf]
        %v2468 = vld [vmem:[%s2457 + $0x28] sm:$0xf]
        %v2469 = vld [vmem:[%s2457 + $0x2c] sm:$0xf]
        %v2470 = vld [vmem:[%s2457 + $0x30] sm:$0xf]
        %v2471 = vld [vmem:[%s2457 + $0x34] sm:$0xf]
        %v2472 = vld [vmem:[%s2457 + $0x38] sm:$0xf]
        %v2473 = vld [vmem:[%s2457 + $0x3c] sm:$0xf]
        %v2490 = vunpack.c.l.b16 %v2458
        %v2491 = vunpack.c.l.b16 %v2459
        %v2492 = vunpack.c.l.b16 %v2460
        %v2493 = vunpack.c.l.b16 %v2461
        %v2494 = vunpack.c.l.b16 %v2462
        %v2495 = vunpack.c.l.b16 %v2463
        %v2496 = vunpack.c.l.b16 %v2464
        %v2497 = vunpack.c.l.b16 %v2465
        %v2498 = vunpack.c.l.b16 %v2466
        %v2499 = vunpack.c.l.b16 %v2467
        %v2500 = vunpack.c.l.b16 %v2468
        %v2501 = vunpack.c.l.b16 %v2469
        %v2502 = vunpack.c.l.b16 %v2470
        %v2503 = vunpack.c.l.b16 %v2471
        %v2504 = vunpack.c.l.b16 %v2472
        %v2505 = vunpack.c.l.b16 %v2473
        %v2506 = vpack.c.b16 %v2491, %v2490
        %v2507 = vpack.c.b16 %v2493, %v2492
        %v2508 = vpack.c.b16 %v2495, %v2494
        %v2509 = vpack.c.b16 %v2497, %v2496
        %v2510 = vpack.c.b16 %v2499, %v2498
        %v2511 = vpack.c.b16 %v2501, %v2500
        %v2512 = vpack.c.b16 %v2503, %v2502
        %v2513 = vpack.c.b16 %v2505, %v2504
        %2522 = vmatprep.subr.bf16.mxu0 0
        %2523 = vmatpush1.bf16.msra.mxu0 %v2506
        %2524 = vmatprep.subr.bf16.mxu0 0
        %2525 = vmatpush1.bf16.msra.mxu0 %v2507
        %2526 = vmatprep.subr.bf16.mxu0 0
        %2527 = vmatpush1.bf16.msra.mxu0 %v2508
        %2528 = vmatprep.subr.bf16.mxu0 0
        %2529 = vmatpush1.bf16.msra.mxu0 %v2509
        %2530 = vmatprep.subr.bf16.mxu0 0
        %2531 = vmatpush1.bf16.msra.mxu0 %v2510
        %2532 = vmatprep.subr.bf16.mxu0 0
        %2533 = vmatpush1.bf16.msra.mxu0 %v2511
        %2534 = vmatprep.subr.bf16.mxu0 0
        %2535 = vmatpush1.bf16.msra.mxu0 %v2512
        %2536 = vmatprep.subr.bf16.mxu0 0
        %2537 = vmatpush1.bf16.msra.mxu0 %v2513
        %2538 = vmatprep.subr.bf16.mxu0 0
        %2539 = vmatpush1.bf16.msra.mxu0 0
        %2540 = vmatprep.subr.bf16.mxu0 0
        %2541 = vmatpush1.bf16.msra.mxu0 0
        %2542 = vmatprep.subr.bf16.mxu0 0
        %2543 = vmatpush1.bf16.msra.mxu0 0
        %2544 = vmatprep.subr.bf16.mxu0 0
        %2545 = vmatpush1.bf16.msra.mxu0 0
        %2546 = vmatprep.subr.bf16.mxu0 0
        %2547 = vmatpush1.bf16.msra.mxu0 0
        %2548 = vmatprep.subr.bf16.mxu0 0
        %2549 = vmatpush1.bf16.msra.mxu0 0
        %2550 = vmatprep.subr.bf16.mxu0 0
        %2551 = vmatpush1.bf16.msra.mxu0 0
        %2552 = vmatprep.subr.bf16.mxu0 0
        %2553 = vmatpush1.bf16.msra.mxu0 0
        %2554 = vmatprep.mubr.bf16.mxu0 0
        %2555 = vmatmul.mubr.bf16.gmra.mrb[0].mxu0 %v595
        %v2556 = vpop.f32.mrb[0].mxu0
        %v2557 = vadd.f32 0.0, %v2556
        %v2558 = vpop.f32.mrb[0].mxu0
        %v2559 = vpop.f32.mrb[0].mxu0
        %v2560 = vadd.f32 0.0, %v2559
        %v2561 = vpop.f32.mrb[0].mxu0
        %2562 = vdwg.mxu0
        %v2563 = vpack.c.bf16 %v2560, %v2557
        %s2564 = smul.u32 %s2236, 4
        %s2565 = smul.addr %s2564, 4
        %s2566 = scalar_lea.vmem %s6, %s2565
        %v2567 = vld [vmem:[%s2566] sm:$0xf]
        %v2568 = vld [vmem:[%s2566 + $0x4] sm:$0xf]
        %v2569 = vld [vmem:[%s2566 + $0x8] sm:$0xf]
        %v2570 = vld [vmem:[%s2566 + $0xc] sm:$0xf]
        %s2571 = sadd.s32 %s933, 3
        %s2572 = sld [smem:[#allocation4 + %s2571]]
        %v2573 = vstv %s2572
        %v2574 = vmul.f32 %v931, %v2573
        %v2575 = vmul.f32 %v932, %v2573
        %s2576 = sadd.s32 %s943, 3
        %s2577 = sld [smem:[#allocation4 + %s2576]]
        %v2578 = vstv %s2577
        %v2579 = vmul.f32 %v939, %v2578
        %v2580 = vmul.f32 %v940, %v2578
        %v2581 = vadd.f32 %v2574, %v2579
        %v2582 = vadd.f32 %v2575, %v2580
        %s2583 = sadd.s32 %s954, 3
        %s2584 = sld [smem:[#allocation4 + %s2583]]
        %v2585 = vstv %s2584
        %v2586 = vmul.f32 %v951, %v2585
        %v2587 = vmul.f32 %v952, %v2585
        %v2588 = vadd.f32 %v2581, %v2586
        %v2589 = vadd.f32 %v2582, %v2587
        %s2590 = sadd.s32 %s965, 3
        %s2591 = sld [smem:[#allocation4 + %s2590]]
        %v2592 = vstv %s2591
        %v2593 = vmul.f32 %v962, %v2592
        %v2594 = vmul.f32 %v963, %v2592
        %v2595 = vadd.f32 %v2588, %v2593
        %v2596 = vadd.f32 %v2589, %v2594
        %s2597 = sadd.s32 %s976, 3
        %s2598 = sld [smem:[#allocation4 + %s2597]]
        %v2599 = vstv %s2598
        %v2600 = vmul.f32 %v973, %v2599
        %v2601 = vmul.f32 %v974, %v2599
        %v2602 = vadd.f32 %v2595, %v2600
        %v2603 = vadd.f32 %v2596, %v2601
        %v2605 = vsel %vm983, %v2347, 0
        %v2608 = vsel %vm983, %v2455, 0
        %2610 = vmatprep.subr.bf16.mxu0 0
        %2611 = vmatpush1.bf16.xpose.msra.mxu0 %v2608
        %2612 = vmatprep.subr.bf16.mxu0 0
        %2613 = vmatpush1.bf16.xpose.msra.mxu0 0
        %2614 = vmatprep.subr.bf16.mxu0 0
        %2615 = vmatpush1.bf16.xpose.msra.mxu0 0
        %2616 = vmatprep.subr.bf16.mxu0 0
        %2617 = vmatpush1.bf16.xpose.msra.mxu0 0
        %2618 = vmatprep.subr.bf16.mxu0 0
        %2619 = vmatpush1.bf16.xpose.msra.mxu0 0
        %2620 = vmatprep.subr.bf16.mxu0 0
        %2621 = vmatpush1.bf16.xpose.msra.mxu0 0
        %2622 = vmatprep.subr.bf16.mxu0 0
        %2623 = vmatpush1.bf16.xpose.msra.mxu0 0
        %2624 = vmatprep.subr.bf16.mxu0 0
        %2625 = vmatpush1.bf16.xpose.msra.mxu0 0
        %2626 = vmatprep.subr.bf16.mxu0 0
        %2627 = vmatpush1.bf16.xpose.msra.mxu0 0
        %2628 = vmatprep.subr.bf16.mxu0 0
        %2629 = vmatpush1.bf16.xpose.msra.mxu0 0
        %2630 = vmatprep.subr.bf16.mxu0 0
        %2631 = vmatpush1.bf16.xpose.msra.mxu0 0
        %2632 = vmatprep.subr.bf16.mxu0 0
        %2633 = vmatpush1.bf16.xpose.msra.mxu0 0
        %2634 = vmatprep.subr.bf16.mxu0 0
        %2635 = vmatpush1.bf16.xpose.msra.mxu0 0
        %2636 = vmatprep.subr.bf16.mxu0 0
        %2637 = vmatpush1.bf16.xpose.msra.mxu0 0
        %2638 = vmatprep.subr.bf16.mxu0 0
        %2639 = vmatpush1.bf16.xpose.msra.mxu0 0
        %2640 = vmatprep.subr.bf16.mxu0 0
        %2641 = vmatpush1.bf16.xpose.msra.mxu0 0
        %2642 = vmatprep.mubr.bf16.mxu0 0
        %2643 = vmatmul.mubr.bf16.gmra.mrb[0].mxu0 %v2605
        %v2644 = vpop.f32.mrb[0].mxu0
        %v2645 = vadd.f32 %v2602, %v2644
        %v2646 = vpop.f32.mrb[0].mxu0
        %v2647 = vpop.f32.mrb[0].mxu0
        %v2648 = vadd.f32 %v2603, %v2647
        %v2649 = vpop.f32.mrb[0].mxu0
        %2650 = vdwg.mxu0
        %v2651 = vsel %vm1031, %v2645, -inf
        %2652 = vmax.xlane.f32.xlu0 %v2651
        %v2653 = vpop.xlane.xlu0 %2652
        %v2654 = vsel %vm1031, %v2648, -inf
        %2655 = vmax.xlane.f32.xlu0 %v2654
        %v2656 = vpop.xlane.xlu0 %2655
        %v2657 = vsub.f32 %v2645, %v2653
        %v2658 = vsub.f32 %v2648, %v2656
        %v2659 = vmul.f32 %v2657, 1.442695
        %v2660 = vpow.pop %v2659
        %v2661 = vmul.f32 %v2658, 1.442695
        %v2662 = vpow.pop %v2661
        %v2663 = vsel %vm1031, %v2660, 0.0
        %2664 = vadd.xlane.f32.xlu0 %v2663
        %v2665 = vpop.xlane.xlu0 %2664
        %v2666 = vsel %vm1031, %v2662, 0.0
        %2667 = vadd.xlane.f32.xlu0 %v2666
        %v2668 = vpop.xlane.xlu0 %2667
        %v2669 = vrcp.pop %v2665
        %v2670 = vrcp.pop %v2668
        %v2671 = vmul.f32 %v2660, %v2669
        %v2672 = vmul.f32 %v2662, %v2670
        %v2673 = vpack.c.bf16 %v2672, %v2671
        %v2675 = vsel %vm1031, %v2673, 0
        %2677 = vmatprep.subr.bf16.mxu0 0
        %2678 = vmatpush1.bf16.msra.mxu0 %v2563
        %2679 = vmatprep.subr.bf16.mxu0 0
        %2680 = vmatpush1.bf16.msra.mxu0 0
        %2681 = vmatprep.subr.bf16.mxu0 0
        %2682 = vmatpush1.bf16.msra.mxu0 0
        %2683 = vmatprep.subr.bf16.mxu0 0
        %2684 = vmatpush1.bf16.msra.mxu0 0
        %2685 = vmatprep.subr.bf16.mxu0 0
        %2686 = vmatpush1.bf16.msra.mxu0 0
        %2687 = vmatprep.subr.bf16.mxu0 0
        %2688 = vmatpush1.bf16.msra.mxu0 0
        %2689 = vmatprep.subr.bf16.mxu0 0
        %2690 = vmatpush1.bf16.msra.mxu0 0
        %2691 = vmatprep.subr.bf16.mxu0 0
        %2692 = vmatpush1.bf16.msra.mxu0 0
        %2693 = vmatprep.subr.bf16.mxu0 0
        %2694 = vmatpush1.bf16.msra.mxu0 0
        %2695 = vmatprep.subr.bf16.mxu0 0
        %2696 = vmatpush1.bf16.msra.mxu0 0
        %2697 = vmatprep.subr.bf16.mxu0 0
        %2698 = vmatpush1.bf16.msra.mxu0 0
        %2699 = vmatprep.subr.bf16.mxu0 0
        %2700 = vmatpush1.bf16.msra.mxu0 0
        %2701 = vmatprep.subr.bf16.mxu0 0
        %2702 = vmatpush1.bf16.msra.mxu0 0
        %2703 = vmatprep.subr.bf16.mxu0 0
        %2704 = vmatpush1.bf16.msra.mxu0 0
        %2705 = vmatprep.subr.bf16.mxu0 0
        %2706 = vmatpush1.bf16.msra.mxu0 0
        %2707 = vmatprep.subr.bf16.mxu0 0
        %2708 = vmatpush1.bf16.msra.mxu0 0
        %2709 = vmatprep.mubr.bf16.mxu0 0
        %2710 = vmatmul.mubr.bf16.gmra.mrb[0].mxu0 %v2675
        %v2711 = vpop.f32.mrb[0].mxu0
        %v2712 = vadd.f32 0.0, %v2711
        %v2713 = vpop.f32.mrb[0].mxu0
        %v2714 = vpop.f32.mrb[0].mxu0
        %v2715 = vadd.f32 0.0, %v2714
        %v2716 = vpop.f32.mrb[0].mxu0
        %2717 = vdwg.mxu0
        %v2718 = vpack.c.bf16 %v2715, %v2712
        %v2723 = vunpack.c.l.b16 %v2567
        %v2724 = vunpack.c.l.b16 %v2568
        %v2725 = vunpack.c.l.b16 %v2569
        %v2726 = vunpack.c.l.b16 %v2570
        %v2727 = vpack.c.b16 %v2724, %v2723
        %v2728 = vpack.c.b16 %v2726, %v2725
        %v2732 = vsel %vm983, %v2718, 0
        %2734 = vmatprep.subr.bf16.mxu0 0
        %2735 = vmatpush1.bf16.msra.mxu0 %v2727
        %2736 = vmatprep.subr.bf16.mxu0 0
        %2737 = vmatpush1.bf16.msra.mxu0 %v2728
        %2738 = vmatprep.subr.bf16.mxu0 0
        %2739 = vmatpush1.bf16.msra.mxu0 0
        %2740 = vmatprep.subr.bf16.mxu0 0
        %2741 = vmatpush1.bf16.msra.mxu0 0
        %2742 = vmatprep.subr.bf16.mxu0 0
        %2743 = vmatpush1.bf16.msra.mxu0 0
        %2744 = vmatprep.subr.bf16.mxu0 0
        %2745 = vmatpush1.bf16.msra.mxu0 0
        %2746 = vmatprep.subr.bf16.mxu0 0
        %2747 = vmatpush1.bf16.msra.mxu0 0
        %2748 = vmatprep.subr.bf16.mxu0 0
        %2749 = vmatpush1.bf16.msra.mxu0 0
        %2750 = vmatprep.subr.bf16.mxu0 0
        %2751 = vmatpush1.bf16.msra.mxu0 0
        %2752 = vmatprep.subr.bf16.mxu0 0
        %2753 = vmatpush1.bf16.msra.mxu0 0
        %2754 = vmatprep.subr.bf16.mxu0 0
        %2755 = vmatpush1.bf16.msra.mxu0 0
        %2756 = vmatprep.subr.bf16.mxu0 0
        %2757 = vmatpush1.bf16.msra.mxu0 0
        %2758 = vmatprep.subr.bf16.mxu0 0
        %2759 = vmatpush1.bf16.msra.mxu0 0
        %2760 = vmatprep.subr.bf16.mxu0 0
        %2761 = vmatpush1.bf16.msra.mxu0 0
        %2762 = vmatprep.subr.bf16.mxu0 0
        %2763 = vmatpush1.bf16.msra.mxu0 0
        %2764 = vmatprep.subr.bf16.mxu0 0
        %2765 = vmatpush1.bf16.msra.mxu0 0
        %2766 = vmatprep.mubr.bf16.mxu0 0
        %2767 = vmatmul.mubr.bf16.gmra.mrb[0].mxu0 %v2732
        %v2768 = vpop.f32.mrb[0].mxu0
        %v2769 = vadd.f32 0.0, %v2768
        %v2770 = vpop.f32.mrb[0].mxu0
        %v2771 = vpop.f32.mrb[0].mxu0
        %v2772 = vadd.f32 0.0, %v2771
        %v2773 = vpop.f32.mrb[0].mxu0
        %2774 = vdwg.mxu0
        %v2775 = vadd.f32 %v2234, %v2769
        %v2776 = vadd.f32 %v2235, %v2772
        %v2777 = vadd.f32 %v593, %v2775
        %v2778 = vadd.f32 %v594, %v2776
        %s2779 = scalar_lea.vmem %s7, %s32
        %v2780 = vld [vmem:[%s2779] sm:$0x1]
        %s2781 = scalar_lea.vmem %s8, %s32
        %v2782 = vld [vmem:[%s2781] sm:$0x1]
        %2783 = vadd.xlane.f32.xlu0 %v2777
        %v2784 = vpop.xlane.xlu0 %2783
        %2785 = vadd.xlane.f32.xlu0 %v2778
        %v2786 = vpop.xlane.xlu0 %2785
        %v2787 = vrcp.pop 128.0
        %v2788 = vmul.f32 %v2784, %v2787
        %v2789 = vmul.f32 %v2786, %v2787
        %v2790 = vsub.f32 %v2777, %v2788
        %v2791 = vsub.f32 %v2778, %v2789
        %v2792 = vmul.f32 %v2790, %v2790
        %v2793 = vmul.f32 %v2791, %v2791
        %2794 = vadd.xlane.f32.xlu0 %v2792
        %v2795 = vpop.xlane.xlu0 %2794
        %2796 = vadd.xlane.f32.xlu0 %v2793
        %v2797 = vpop.xlane.xlu0 %2796
        %v2798 = vmul.f32 %v2795, %v2787
        %v2799 = vmul.f32 %v2797, %v2787
        %v2800 = vadd.f32 %v2798, 1e-05
        %v2801 = vadd.f32 %v2799, 1e-05
        %v2802 = vrsqrt.pop %v2800
        %v2803 = vrsqrt.pop %v2801
        %v2804 = vmul.f32 %v2790, %v2802
        %v2805 = vmul.f32 %v2791, %v2803
        %v2807 = vlaneseq
        %v2808 = vshrl.u32 %v2807, 7
        %v2809 = vsub.s32 0, %v2808
        %v2810 = vrot.slane %v2780, %v2809
        %v2812 = vmul.f32 %v2804, %v2810
        %v2813 = vmul.f32 %v2805, %v2810
        %v2815 = vlaneseq
        %v2816 = vshrl.u32 %v2815, 7
        %v2817 = vsub.s32 0, %v2816
        %v2818 = vrot.slane %v2782, %v2817
        %v2820 = vadd.f32 %v2812, %v2818
        %v2821 = vadd.f32 %v2813, %v2818
        %v2822 = vpack.c.bf16 %v2821, %v2820
        %s2823 = smul.u32 %s32, 32
        %s2824 = smul.addr %s2823, 4
        %s2825 = scalar_lea.vmem %s9, %s2824
        %v2826 = vld [vmem:[%s2825] sm:$0xff]
        %v2827 = vld [vmem:[%s2825 + $0x8] sm:$0xff]
        %v2828 = vld [vmem:[%s2825 + $0x10] sm:$0xff]
        %v2829 = vld [vmem:[%s2825 + $0x18] sm:$0xff]
        %v2830 = vld [vmem:[%s2825 + $0x20] sm:$0xff]
        %v2831 = vld [vmem:[%s2825 + $0x28] sm:$0xff]
        %v2832 = vld [vmem:[%s2825 + $0x30] sm:$0xff]
        %v2833 = vld [vmem:[%s2825 + $0x38] sm:$0xff]
        %v2834 = vld [vmem:[%s2825 + $0x40] sm:$0xff]
        %v2835 = vld [vmem:[%s2825 + $0x48] sm:$0xff]
        %v2836 = vld [vmem:[%s2825 + $0x50] sm:$0xff]
        %v2837 = vld [vmem:[%s2825 + $0x58] sm:$0xff]
        %v2838 = vld [vmem:[%s2825 + $0x60] sm:$0xff]
        %v2839 = vld [vmem:[%s2825 + $0x68] sm:$0xff]
        %v2840 = vld [vmem:[%s2825 + $0x70] sm:$0xff]
        %v2841 = vld [vmem:[%s2825 + $0x78] sm:$0xff]
        %s2842 = smul.u32 %s32, 2
        %s2843 = scalar_lea.vmem %s10, %s2842
        %v2844 = vld [vmem:[%s2843] sm:$0x3]
        %v2846 = vlaneseq
        %v2847 = vshrl.u32 %v2846, 7
        %v2848 = vsub.s32 0, %v2847
        %v2849 = vrot.slane %v2844, %v2848
        %v2850 = vlaneseq
        %v2851 = vshrl.u32 %v2850, 7
        %v2852 = vsub.s32 1, %v2851
        %v2853 = vrot.slane %v2844, %v2852
        %v2872 = vunpack.c.l.b16 %v2826
        %v2873 = vunpack.c.h.b16 %v2826
        %v2874 = vunpack.c.l.b16 %v2827
        %v2875 = vunpack.c.h.b16 %v2827
        %v2876 = vunpack.c.l.b16 %v2828
        %v2877 = vunpack.c.h.b16 %v2828
        %v2878 = vunpack.c.l.b16 %v2829
        %v2879 = vunpack.c.h.b16 %v2829
        %v2880 = vunpack.c.l.b16 %v2830
        %v2881 = vunpack.c.h.b16 %v2830
        %v2882 = vunpack.c.l.b16 %v2831
        %v2883 = vunpack.c.h.b16 %v2831
        %v2884 = vunpack.c.l.b16 %v2832
        %v2885 = vunpack.c.h.b16 %v2832
        %v2886 = vunpack.c.l.b16 %v2833
        %v2887 = vunpack.c.h.b16 %v2833
        %v2888 = vunpack.c.l.b16 %v2834
        %v2889 = vunpack.c.h.b16 %v2834
        %v2890 = vunpack.c.l.b16 %v2835
        %v2891 = vunpack.c.h.b16 %v2835
        %v2892 = vunpack.c.l.b16 %v2836
        %v2893 = vunpack.c.h.b16 %v2836
        %v2894 = vunpack.c.l.b16 %v2837
        %v2895 = vunpack.c.h.b16 %v2837
        %v2896 = vunpack.c.l.b16 %v2838
        %v2897 = vunpack.c.h.b16 %v2838
        %v2898 = vunpack.c.l.b16 %v2839
        %v2899 = vunpack.c.h.b16 %v2839
        %v2900 = vunpack.c.l.b16 %v2840
        %v2901 = vunpack.c.h.b16 %v2840
        %v2902 = vunpack.c.l.b16 %v2841
        %v2903 = vunpack.c.h.b16 %v2841
        %v2904 = vpack.c.b16 %v2874, %v2872
        %v2905 = vpack.c.b16 %v2875, %v2873
        %v2906 = vpack.c.b16 %v2878, %v2876
        %v2907 = vpack.c.b16 %v2879, %v2877
        %v2908 = vpack.c.b16 %v2882, %v2880
        %v2909 = vpack.c.b16 %v2883, %v2881
        %v2910 = vpack.c.b16 %v2886, %v2884
        %v2911 = vpack.c.b16 %v2887, %v2885
        %v2912 = vpack.c.b16 %v2890, %v2888
        %v2913 = vpack.c.b16 %v2891, %v2889
        %v2914 = vpack.c.b16 %v2894, %v2892
        %v2915 = vpack.c.b16 %v2895, %v2893
        %v2916 = vpack.c.b16 %v2898, %v2896
        %v2917 = vpack.c.b16 %v2899, %v2897
        %v2918 = vpack.c.b16 %v2902, %v2900
        %v2919 = vpack.c.b16 %v2903, %v2901
        %2936 = vmatprep.subr.bf16.mxu0 %v2905
        %2937 = vmatpush1.bf16.msra.mxu0 %v2904
        %2938 = vmatprep.subr.bf16.mxu0 %v2907
        %2939 = vmatpush1.bf16.msra.mxu0 %v2906
        %2940 = vmatprep.subr.bf16.mxu0 %v2909
        %2941 = vmatpush1.bf16.msra.mxu0 %v2908
        %2942 = vmatprep.subr.bf16.mxu0 %v2911
        %2943 = vmatpush1.bf16.msra.mxu0 %v2910
        %2944 = vmatprep.subr.bf16.mxu0 %v2913
        %2945 = vmatpush1.bf16.msra.mxu0 %v2912
        %2946 = vmatprep.subr.bf16.mxu0 %v2915
        %2947 = vmatpush1.bf16.msra.mxu0 %v2914
        %2948 = vmatprep.subr.bf16.mxu0 %v2917
        %2949 = vmatpush1.bf16.msra.mxu0 %v2916
        %2950 = vmatprep.subr.bf16.mxu0 %v2919
        %2951 = vmatpush1.bf16.msra.mxu0 %v2918
        %2952 = vmatprep.subr.bf16.mxu0 0
        %2953 = vmatpush1.bf16.msra.mxu0 0
        %2954 = vmatprep.subr.bf16.mxu0 0
        %2955 = vmatpush1.bf16.msra.mxu0 0
        %2956 = vmatprep.subr.bf16.mxu0 0
        %2957 = vmatpush1.bf16.msra.mxu0 0
        %2958 = vmatprep.subr.bf16.mxu0 0
        %2959 = vmatpush1.bf16.msra.mxu0 0
        %2960 = vmatprep.subr.bf16.mxu0 0
        %2961 = vmatpush1.bf16.msra.mxu0 0
        %2962 = vmatprep.subr.bf16.mxu0 0
        %2963 = vmatpush1.bf16.msra.mxu0 0
        %2964 = vmatprep.subr.bf16.mxu0 0
        %2965 = vmatpush1.bf16.msra.mxu0 0
        %2966 = vmatprep.subr.bf16.mxu0 0
        %2967 = vmatpush1.bf16.msra.mxu0 0
        %2968 = vmatprep.mubr.bf16.mxu0 0
        %2969 = vmatmul.mubr.bf16.gmra.mrb[0].mxu0 %v2822
        %v2970 = vpop.f32.mrb[0].mxu0
        %v2971 = vadd.f32 %v2849, %v2970
        %v2972 = vpop.f32.mrb[0].mxu0
        %v2973 = vadd.f32 %v2853, %v2972
        %v2974 = vpop.f32.mrb[0].mxu0
        %v2975 = vadd.f32 %v2849, %v2974
        %v2976 = vpop.f32.mrb[0].mxu0
        %v2977 = vadd.f32 %v2853, %v2976
        %2978 = vdwg.mxu0
        %v2979 = vmax.f32 %v2971, 0.0
        %v2980 = vmax.f32 %v2973, 0.0
        %v2981 = vmax.f32 %v2975, 0.0
        %v2982 = vmax.f32 %v2977, 0.0
        %v2983 = vpack.c.bf16 %v2981, %v2979
        %v2984 = vpack.c.bf16 %v2982, %v2980
        %s2985 = smul.addr %s2823, 4
        %s2986 = scalar_lea.vmem %s11, %s2985
        %v2987 = vld [vmem:[%s2986] sm:$0xf]
        %v2988 = vld [vmem:[%s2986 + $0x4] sm:$0xf]
        %v2989 = vld [vmem:[%s2986 + $0x8] sm:$0xf]
        %v2990 = vld [vmem:[%s2986 + $0xc] sm:$0xf]
        %v2991 = vld [vmem:[%s2986 + $0x10] sm:$0xf]
        %v2992 = vld [vmem:[%s2986 + $0x14] sm:$0xf]
        %v2993 = vld [vmem:[%s2986 + $0x18] sm:$0xf]
        %v2994 = vld [vmem:[%s2986 + $0x1c] sm:$0xf]
        %v2995 = vld [vmem:[%s2986 + $0x20] sm:$0xf]
        %v2996 = vld [vmem:[%s2986 + $0x24] sm:$0xf]
        %v2997 = vld [vmem:[%s2986 + $0x28] sm:$0xf]
        %v2998 = vld [vmem:[%s2986 + $0x2c] sm:$0xf]
        %v2999 = vld [vmem:[%s2986 + $0x30] sm:$0xf]
        %v3000 = vld [vmem:[%s2986 + $0x34] sm:$0xf]
        %v3001 = vld [vmem:[%s2986 + $0x38] sm:$0xf]
        %v3002 = vld [vmem:[%s2986 + $0x3c] sm:$0xf]
        %v3003 = vld [vmem:[%s2986 + $0x40] sm:$0xf]
        %v3004 = vld [vmem:[%s2986 + $0x44] sm:$0xf]
        %v3005 = vld [vmem:[%s2986 + $0x48] sm:$0xf]
        %v3006 = vld [vmem:[%s2986 + $0x4c] sm:$0xf]
        %v3007 = vld [vmem:[%s2986 + $0x50] sm:$0xf]
        %v3008 = vld [vmem:[%s2986 + $0x54] sm:$0xf]
        %v3009 = vld [vmem:[%s2986 + $0x58] sm:$0xf]
        %v3010 = vld [vmem:[%s2986 + $0x5c] sm:$0xf]
        %v3011 = vld [vmem:[%s2986 + $0x60] sm:$0xf]
        %v3012 = vld [vmem:[%s2986 + $0x64] sm:$0xf]
        %v3013 = vld [vmem:[%s2986 + $0x68] sm:$0xf]
        %v3014 = vld [vmem:[%s2986 + $0x6c] sm:$0xf]
        %v3015 = vld [vmem:[%s2986 + $0x70] sm:$0xf]
        %v3016 = vld [vmem:[%s2986 + $0x74] sm:$0xf]
        %v3017 = vld [vmem:[%s2986 + $0x78] sm:$0xf]
        %v3018 = vld [vmem:[%s2986 + $0x7c] sm:$0xf]
        %s3019 = scalar_lea.vmem %s12, %s32
        %v3020 = vld [vmem:[%s3019] sm:$0x1]
        %v3022 = vlaneseq
        %v3023 = vshrl.u32 %v3022, 7
        %v3024 = vsub.s32 0, %v3023
        %v3025 = vrot.slane %v3020, %v3024
        %v3059 = vunpack.c.l.b16 %v2987
        %v3060 = vunpack.c.l.b16 %v2988
        %v3061 = vunpack.c.l.b16 %v2989
        %v3062 = vunpack.c.l.b16 %v2990
        %v3063 = vunpack.c.l.b16 %v2991
        %v3064 = vunpack.c.l.b16 %v2992
        %v3065 = vunpack.c.l.b16 %v2993
        %v3066 = vunpack.c.l.b16 %v2994
        %v3067 = vunpack.c.l.b16 %v2995
        %v3068 = vunpack.c.l.b16 %v2996
        %v3069 = vunpack.c.l.b16 %v2997
        %v3070 = vunpack.c.l.b16 %v2998
        %v3071 = vunpack.c.l.b16 %v2999
        %v3072 = vunpack.c.l.b16 %v3000
        %v3073 = vunpack.c.l.b16 %v3001
        %v3074 = vunpack.c.l.b16 %v3002
        %v3075 = vunpack.c.l.b16 %v3003
        %v3076 = vunpack.c.l.b16 %v3004
        %v3077 = vunpack.c.l.b16 %v3005
        %v3078 = vunpack.c.l.b16 %v3006
        %v3079 = vunpack.c.l.b16 %v3007
        %v3080 = vunpack.c.l.b16 %v3008
        %v3081 = vunpack.c.l.b16 %v3009
        %v3082 = vunpack.c.l.b16 %v3010
        %v3083 = vunpack.c.l.b16 %v3011
        %v3084 = vunpack.c.l.b16 %v3012
        %v3085 = vunpack.c.l.b16 %v3013
        %v3086 = vunpack.c.l.b16 %v3014
        %v3087 = vunpack.c.l.b16 %v3015
        %v3088 = vunpack.c.l.b16 %v3016
        %v3089 = vunpack.c.l.b16 %v3017
        %v3090 = vunpack.c.l.b16 %v3018
        %v3091 = vpack.c.b16 %v3060, %v3059
        %v3092 = vpack.c.b16 %v3062, %v3061
        %v3093 = vpack.c.b16 %v3064, %v3063
        %v3094 = vpack.c.b16 %v3066, %v3065
        %v3095 = vpack.c.b16 %v3068, %v3067
        %v3096 = vpack.c.b16 %v3070, %v3069
        %v3097 = vpack.c.b16 %v3072, %v3071
        %v3098 = vpack.c.b16 %v3074, %v3073
        %v3099 = vpack.c.b16 %v3076, %v3075
        %v3100 = vpack.c.b16 %v3078, %v3077
        %v3101 = vpack.c.b16 %v3080, %v3079
        %v3102 = vpack.c.b16 %v3082, %v3081
        %v3103 = vpack.c.b16 %v3084, %v3083
        %v3104 = vpack.c.b16 %v3086, %v3085
        %v3105 = vpack.c.b16 %v3088, %v3087
        %v3106 = vpack.c.b16 %v3090, %v3089
        %3123 = vmatprep.subr.bf16.mxu0 0
        %3124 = vmatpush1.bf16.msra.mxu0 %v3091
        %3125 = vmatprep.subr.bf16.mxu0 0
        %3126 = vmatpush1.bf16.msra.mxu0 %v3092
        %3127 = vmatprep.subr.bf16.mxu0 0
        %3128 = vmatpush1.bf16.msra.mxu0 %v3093
        %3129 = vmatprep.subr.bf16.mxu0 0
        %3130 = vmatpush1.bf16.msra.mxu0 %v3094
        %3131 = vmatprep.subr.bf16.mxu0 0
        %3132 = vmatpush1.bf16.msra.mxu0 %v3095
        %3133 = vmatprep.subr.bf16.mxu0 0
        %3134 = vmatpush1.bf16.msra.mxu0 %v3096
        %3135 = vmatprep.subr.bf16.mxu0 0
        %3136 = vmatpush1.bf16.msra.mxu0 %v3097
        %3137 = vmatprep.subr.bf16.mxu0 0
        %3138 = vmatpush1.bf16.msra.mxu0 %v3098
        %3139 = vmatprep.subr.bf16.mxu0 0
        %3140 = vmatpush1.bf16.msra.mxu0 %v3099
        %3141 = vmatprep.subr.bf16.mxu0 0
        %3142 = vmatpush1.bf16.msra.mxu0 %v3100
        %3143 = vmatprep.subr.bf16.mxu0 0
        %3144 = vmatpush1.bf16.msra.mxu0 %v3101
        %3145 = vmatprep.subr.bf16.mxu0 0
        %3146 = vmatpush1.bf16.msra.mxu0 %v3102
        %3147 = vmatprep.subr.bf16.mxu0 0
        %3148 = vmatpush1.bf16.msra.mxu0 %v3103
        %3149 = vmatprep.subr.bf16.mxu0 0
        %3150 = vmatpush1.bf16.msra.mxu0 %v3104
        %3151 = vmatprep.subr.bf16.mxu0 0
        %3152 = vmatpush1.bf16.msra.mxu0 %v3105
        %3153 = vmatprep.subr.bf16.mxu0 0
        %3154 = vmatpush1.bf16.msra.mxu0 %v3106
        %3155 = vmatprep.mubr.bf16.mxu0 %v2984
        %3156 = vmatmul.mubr.bf16.gmra.mrb[0].mxu0 %v2983
        %v3157 = vpop.f32.mrb[0].mxu0
        %v3158 = vadd.f32 %v3025, %v3157
        %v3159 = vpop.f32.mrb[0].mxu0
        %v3160 = vpop.f32.mrb[0].mxu0
        %v3161 = vadd.f32 %v3025, %v3160
        %v3162 = vpop.f32.mrb[0].mxu0
        %3163 = vdwg.mxu0
        %v3164 = vadd.f32 %v2820, %v3158
        %v3165 = vadd.f32 %v2821, %v3161
        %s3166 = scalar_lea.vmem %s13, %s32
        %v3167 = vld [vmem:[%s3166] sm:$0x1]
        %s3168 = scalar_lea.vmem %s14, %s32
        %v3169 = vld [vmem:[%s3168] sm:$0x1]
        %3170 = vadd.xlane.f32.xlu0 %v3164
        %v3171 = vpop.xlane.xlu0 %3170
        %3172 = vadd.xlane.f32.xlu0 %v3165
        %v3173 = vpop.xlane.xlu0 %3172
        %v3174 = vmul.f32 %v3171, %v2787
        %v3175 = vmul.f32 %v3173, %v2787
        %v3176 = vsub.f32 %v3164, %v3174
        %v3177 = vsub.f32 %v3165, %v3175
        %v3178 = vmul.f32 %v3176, %v3176
        %v3179 = vmul.f32 %v3177, %v3177
        %3180 = vadd.xlane.f32.xlu0 %v3178
        %v3181 = vpop.xlane.xlu0 %3180
        %3182 = vadd.xlane.f32.xlu0 %v3179
        %v3183 = vpop.xlane.xlu0 %3182
        %v3184 = vmul.f32 %v3181, %v2787
        %v3185 = vmul.f32 %v3183, %v2787
        %v3186 = vadd.f32 %v3184, 1e-05
        %v3187 = vadd.f32 %v3185, 1e-05
        %v3188 = vrsqrt.pop %v3186
        %v3189 = vrsqrt.pop %v3187
        %v3190 = vmul.f32 %v3176, %v3188
        %v3191 = vmul.f32 %v3177, %v3189
        %v3193 = vlaneseq
        %v3194 = vshrl.u32 %v3193, 7
        %v3195 = vsub.s32 0, %v3194
        %v3196 = vrot.slane %v3167, %v3195
        %v3198 = vmul.f32 %v3190, %v3196
        %v3199 = vmul.f32 %v3191, %v3196
        %v3201 = vlaneseq
        %v3202 = vshrl.u32 %v3201, 7
        %v3203 = vsub.s32 0, %v3202
        %v3204 = vrot.slane %v3169, %v3203
        %v3206 = vadd.f32 %v3198, %v3204
        %v3207 = vadd.f32 %v3199, %v3204
        %3208 = vst [vmem:[#allocation2] sm:$0xff] %v3206
        %3209 = vst [vmem:[#allocation2 + $0x8] sm:$0xff] %v3207
        %p3210 = scmp.eq.s32.totalorder %s32, 2
        // Predicated region
        $region89: #{sa_edge_transformer_forward.4} parent=79 // pred_check
          %p3211 = pneg %p3210
        $region90: #{sa_edge_transformer_forward.4} parent=79 // pred_check_branch
          %3213 = sbr.rel (%p3211) target = $region92
        $region91: #{sa_edge_transformer_forward.4} parent=79 // pred_region
          %v3214 = vadd.f32 %v3206, %v3207
          %v3215 = vrot.slane %v3214, 4
          %v3216 = vadd.f32 %v3214, %v3215
          %v3217 = vrot.slane %v3216, 2
          %v3218 = vadd.f32 %v3216, %v3217
          %v3219 = vrot.slane %v3218, 1
          %v3220 = vadd.f32 %v3218, %v3219
          %v3221 = vmul.f32 %v3220, 0.0625
          %3222 = vst [vmem:[%s536] sm:$0x1] %v3221
        $region92: #{sa_edge_transformer_forward.4} parent=79 // pred_fallthru
          _
        %p3223 = scmp.lt.s32.totalorder %s31, 1
        %s3224 = scalar_select %p3223, %s31, 1
        %s3225 = scalar_lea.vmem %s15, %s3224
        // Predicated region
        $region93: #{sa_edge_transformer_forward.4} parent=79 // pred_check
          %p3226 = pneg %p382
        $region94: #{sa_edge_transformer_forward.4} parent=79 // pred_check_branch
          %3228 = sbr.rel (%p3226) target = $region96
        $region95: #{sa_edge_transformer_forward.4} parent=79 // pred_region
          _
        $region96: #{sa_edge_transformer_forward.4} parent=79 // pred_fallthru
          _
      $region80: #{sa_edge_transformer_forward.4} parent=5 // pred_fallthru
        _
      %p3229 = scmp.le.s32.totalorder 2, %s22
      // Predicated region
      $region97: #{sa_edge_transformer_forward.4} parent=5 // pred_check
        %p3230 = pneg %p3229
      $region98: #{sa_edge_transformer_forward.4} parent=5 // pred_check_branch
        %3232 = sbr.rel (%p3230) target = $region100
      $region99: #{sa_edge_transformer_forward.4} parent=5 // pred_region
        %s3233 = ssub.s32 %s22, 2
        // Predicated region
        $region101: #{sa_edge_transformer_forward.4} parent=99 // pred_check
          %p3234 = pneg %p388
        $region102: #{sa_edge_transformer_forward.4} parent=99 // pred_check_branch
          %3236 = sbr.rel (%p3234) target = $region104
        $region103: #{sa_edge_transformer_forward.4} parent=99 // pred_region
          %p3237 = scmp.lt.s32.totalorder %s33, 1
          %s3238 = scalar_select %p3237, %s33, 1
          %s3239 = scalar_lea.vmem %s15, %s3238
        $region104: #{sa_edge_transformer_forward.4} parent=99 // pred_fallthru
          _
      $region100: #{sa_edge_transformer_forward.4} parent=5 // pred_fallthru
        _
    $region6: #{sa_edge_transformer_forward.4} parent=1 // loop_footer
      %s26 = sadd.s32 1, %s22
    $region7: #{sa_edge_transformer_forward.4} parent=1 // loop_footer_branch
      %21 = sbr.rel target = $region3
    $region8: #{sa_edge_transformer_forward.4} parent=1 // loop_exit
      _
    %3240 = vsyncpa [#allocation5], 1
    %s3241 = scalar_lea.sflag [#allocation5], 1
    %3242 = vsyncpa %s3241, 1

</llo_original>
